<compile_context>
chip_gen: v6e
topology: v6e:2x2x1
jax: 0.10.0
libtpu: 0.0.40
codegen_flags: <defaults>
</compile_context>

<pallas_src>
import functools

import jax
import jax.numpy as jnp
from jax.experimental import pallas as pl
from jax.experimental.pallas import tpu as pltpu

EPS = 1e-5
LANE = 128                      # pad channel dims to the 128-lane vreg width
VREG_ACC_BUDGET = 128 * 1024    # stage-2 f32 accumulator budget (~half vreg file)


# ---------------------------------------------------------------------------
# Fused Pallas kernel: conv1x1+BN+ReLU -> conv3x3+BN+ReLU -> conv1x1+BN
#                       -> +residual -> ReLU, for one (batch, row-tile).
# ---------------------------------------------------------------------------
def _bottleneck_kernel(xm_ref, xt_ref, xb_ref,
                       w1_ref, w2_ref, w3_ref,
                       b1_ref, b2_ref, b3_ref,
                       o_ref, h1_ref, *, TH, TH_SUB, W, Cp, Wp, Cop):
    # xm_ref: (1, TH, W, Cp) bf16   row tile of x owned by this step
    # xt_ref: (1, 1,  W, Cp) bf16   row above the tile (clamped at border)
    # xb_ref: (1, 1,  W, Cp) bf16   row below the tile (clamped at border)
    # w1    : (Cp, Wp) bf16, w2: (9, Wp, Wp) bf16, w3: (Wp, Cop) bf16
    # b*    : (1, Wp)/(1, Wp)/(1, Cop) f32   (BN folded: scale in weights)
    # o_ref : (1, TH, W, Cop) bf16  output row tile
    # h1_ref: (TH+2, W+2, Wp) bf16  stage-1 activation with 3x3 zero-pad halo
    r = pl.program_id(1)
    last = pl.num_programs(1) - 1

    w1 = w1_ref[...]
    b1 = b1_ref[...]

    def stage1(rows_bf16):  # (M, Cp) bf16 -> (M, Wp) bf16  (conv1x1 + BN + ReLU)
        y = jnp.dot(rows_bf16, w1, preferred_element_type=jnp.float32)
        return jnp.maximum(y + b1, 0.0).astype(jnp.bfloat16)

    # ---- 3x3 zero padding: only the pad border is (re)zeroed (a few KB per
    #      step) instead of memsetting the whole scratch ---------------------
    zcol = jnp.zeros((TH + 2, 1, Wp), jnp.bfloat16)
    h1_ref[:, 0:1, :] = zcol
    h1_ref[:, W + 1:W + 2, :] = zcol

    # ---- stage 1 on the halo rows (recomputed from x; zero at image border) --
    @pl.when(r == 0)
    def _():
        h1_ref[0:1, :, :] = jnp.zeros((1, W + 2, Wp), jnp.bfloat16)

    @pl.when(r > 0)
    def _():
        xt = xt_ref[0, 0, :, :]                                   # (W, Cp)
        h1_ref[0:1, 1:W + 1, :] = stage1(xt).reshape(1, W, Wp)

    @pl.when(r == last)
    def _():
        h1_ref[TH + 1:TH + 2, :, :] = jnp.zeros((1, W + 2, Wp), jnp.bfloat16)

    @pl.when(r < last)
    def _():
        xb = xb_ref[0, 0, :, :]                                   # (W, Cp)
        h1_ref[TH + 1:TH + 2, 1:W + 1, :] = stage1(xb).reshape(1, W, Wp)

    # ---- stage 1 on the TH rows owned by this tile (sub-blocked) ------------
    n_sub = TH // TH_SUB
    for s in range(n_sub):
        r0 = s * TH_SUB
        xm = xm_ref[0, r0:r0 + TH_SUB, :, :].reshape(TH_SUB * W, Cp)
        h1_ref[1 + r0:1 + r0 + TH_SUB, 1:W + 1, :] = (
            stage1(xm).reshape(TH_SUB, W, Wp))
        # TODO(synk): building the full-width (TH_SUB, W+2, Wp) band in-register
        # (zero pad columns included) would make this an unmasked store on v5e.

    w3 = w3_ref[...]
    b2 = b2_ref[...]
    b3 = b3_ref[...]

    # ---- stages 2+3 fused per row sub-block so the f32 accumulator fits in
    #      vregs (no VMEM spill of a TH*W-row accumulator across the 9 taps) --
    for s in range(n_sub):
        r0 = s * TH_SUB
        acc = jnp.zeros((TH_SUB * W, Wp), jnp.float32)
        for ky in range(3):
            # One contiguous, aligned band load per ky; the three kx taps are
            # derived in-register (sublane shifts) instead of strided VMEM reads.
            band = h1_ref[r0 + ky:r0 + ky + TH_SUB, :, :]         # (TH_SUB, W+2, Wp)
            for kx in range(3):
                patch = band[:, kx:kx + W, :].reshape(TH_SUB * W, Wp)
                acc = acc + jnp.dot(patch, w2_ref[ky * 3 + kx, :, :],
                                    preferred_element_type=jnp.float32)
        out2 = jnp.maximum(acc + b2, 0.0).astype(jnp.bfloat16)

        # stage 3: 1x1 + BN + residual + ReLU.  Residual rows are re-read from
        # the x tile here (cheap vld) instead of kept live across stage 2.
        y = jnp.dot(out2, w3, preferred_element_type=jnp.float32)
        resid = xm_ref[0, r0:r0 + TH_SUB, :, :].astype(jnp.float32)
        y = y + b3 + resid.reshape(TH_SUB * W, Cop)
        o_ref[0, r0:r0 + TH_SUB, :, :] = (
            jnp.maximum(y, 0.0).reshape(TH_SUB, W, Cop).astype(jnp.bfloat16))


# ---------------------------------------------------------------------------
# Parameter folding / tiling helpers
# ---------------------------------------------------------------------------
def fold_bn(gamma, beta, mean, var):
    scale = gamma / jnp.sqrt(var + EPS)
    bias = beta - mean * scale
    return scale.astype(jnp.float32), bias.astype(jnp.float32)


def _round_up(x, m):
    return (x + m - 1) // m * m


def _vmem_bytes_per_step(TH, W, Cp, Wp, Cop):
    bf16 = 2
    b = 2 * TH * W * Cp * bf16                       # x row tile (double-buffered)
    b += 2 * 2 * W * Cp * bf16                       # two 1-row halo inputs
    b += 2 * TH * W * Cop * bf16                     # bf16 output tile
    b += 2 * (Cp * Wp + 9 * Wp * Wp + Wp * Cop) * bf16   # weights (double-buffered)
    b += 2 * (2 * Wp + Cop) * 4                      # biases
    b += (TH + 2) * (W + 2) * Wp * bf16              # h1 scratch (single copy)
    return b


def _pick_row_tile(H, W, Cp, Wp, Cop, budget=40 << 20):
    """Largest TH dividing H (preferring multiples of 8) whose per-step VMEM
    footprint fits the budget (budget chosen to fit v7x's 64 MiB VMEM)."""
    best = None
    for t in range(H, 0, -1):
        if H % t:
            continue
        if _vmem_bytes_per_step(t, W, Cp, Wp, Cop) > budget:
            continue
        if best is None:
            best = t
        if t % 8 == 0:
            return t
    return best if best is not None else 1


def _pick_sub_tile(TH, W, Wp):
    for t in range(TH, 0, -1):
        if TH % t == 0 and t * W * Wp * 4 <= VREG_ACC_BUDGET:
            return t
    return 1


# ---------------------------------------------------------------------------
# Forward pass (NHWC core): lane padding + one fused pallas_call
# ---------------------------------------------------------------------------
@functools.partial(jax.jit, static_argnames=("row_tile",))
def bottleneck_forward_nhwc(x_nhwc, params, row_tile=None):
    """Fused Bottleneck on NHWC input; returns NHWC bf16.  Keep activations in
    NHWC across a chain of blocks to avoid layout transposes."""
    x = x_nhwc.astype(jnp.float32)
    N, H, W, Cin = x.shape
    width = params["w1"].shape[1]
    out_ch = params["w3"].shape[1]
    assert out_ch == Cin, "downsample=None requires inplanes == planes * expansion"

    Cp = _round_up(Cin, LANE)     # padded inplanes (== padded out_ch, residual)
    Wp = _round_up(width, LANE)   # padded width
    Cop = _round_up(out_ch, LANE)
    assert Cp == Cop

    TH = _pick_row_tile(H, W, Cp, Wp, Cop) if row_tile is None else row_tile
    assert H % TH == 0
    R = H // TH
    TH_SUB = _pick_sub_tile(TH, W, Wp)

    # Fold BN (eval mode) into the conv weights; pad to lane-dense shapes.
    s1, b1 = fold_bn(params["g1"], params["b1"], params["m1"], params["v1"])
    s2, b2 = fold_bn(params["g2"], params["b2"], params["m2"], params["v2"])
    s3, b3 = fold_bn(params["g3"], params["b3"], params["m3"], params["v3"])

    w1p = jnp.pad(params["w1"] * s1[None, :],
                  ((0, Cp - Cin), (0, Wp - width))).astype(jnp.bfloat16)
    w2p = jnp.pad(params["w2"].reshape(9, width, width) * s2[None, None, :],
                  ((0, 0), (0, Wp - width), (0, Wp - width))).astype(jnp.bfloat16)
    w3p = jnp.pad(params["w3"] * s3[None, :],
                  ((0, Wp - width), (0, Cop - out_ch))).astype(jnp.bfloat16)
    b1p = jnp.pad(b1, (0, Wp - width))[None, :]
    b2p = jnp.pad(b2, (0, Wp - width))[None, :]
    b3p = jnp.pad(b3, (0, Cop - out_ch))[None, :]

    # Zero-pad channels (no-op when already lane-aligned) and go bf16.
    xp = jnp.pad(x, ((0, 0), (0, 0), (0, 0), (0, Cp - Cin))).astype(jnp.bfloat16)

    kern = functools.partial(_bottleneck_kernel, TH=TH, TH_SUB=TH_SUB,
                             W=W, Cp=Cp, Wp=Wp, Cop=Cop)

    est = _vmem_bytes_per_step(TH, W, Cp, Wp, Cop)
    vmem_limit = int(min(48 << 20, max(32 << 20, 2 * est)))   # fits v7x 64 MiB

    flops = 2 * N * H * W * (Cp * Wp + 9 * Wp * Wp + Wp * Cop)
    weight_bytes = (Cp * Wp + 9 * Wp * Wp + Wp * Cop) * 2 + (2 * Wp + Cop) * 4
    bytes_accessed = (N * H * W * (Cp + Cop) * 2
                      + N * R * (2 * W * Cp * 2 + weight_bytes))

    out = pl.pallas_call(
        kern,
        out_shape=jax.ShapeDtypeStruct((N, H, W, Cop), jnp.bfloat16),
        grid=(N, R),
        in_specs=[
            # x: one TH-row tile per step (not the full image) ...
            pl.BlockSpec((1, TH, W, Cp), lambda n, r: (n, r, 0, 0)),
            # ... plus 1-row top/bottom halo windows, clamped at the image
            # border (the clamped rows are unused there; see pl.when in-kernel)
            pl.BlockSpec((1, 1, W, Cp),
                         lambda n, r: (n, jnp.maximum(r * TH - 1, 0), 0, 0)),
            pl.BlockSpec((1, 1, W, Cp),
                         lambda n, r: (n, jnp.minimum(r * TH + TH, H - 1), 0, 0)),
            # weights / biases (BN folded into the weights, bias-only epilogue).
            # TODO(synk): pipeline_mode=pl.Buffered(1) would single-buffer these
            # constants and reclaim ~w2 bytes of VMEM on v7x.
            pl.BlockSpec((Cp, Wp), lambda n, r: (0, 0)),              # w1
            pl.BlockSpec((9, Wp, Wp), lambda n, r: (0, 0, 0)),        # w2
            pl.BlockSpec((Wp, Cop), lambda n, r: (0, 0)),             # w3
            pl.BlockSpec((1, Wp), lambda n, r: (0, 0)),               # b1
            pl.BlockSpec((1, Wp), lambda n, r: (0, 0)),               # b2
            pl.BlockSpec((1, Cop), lambda n, r: (0, 0)),              # b3
        ],
        out_specs=pl.BlockSpec((1, TH, W, Cop), lambda n, r: (n, r, 0, 0)),
        scratch_shapes=[pltpu.VMEM((TH + 2, W + 2, Wp), jnp.bfloat16)],
        compiler_params=pltpu.CompilerParams(
            dimension_semantics=("parallel", "parallel"),
            vmem_limit_bytes=vmem_limit),
        cost_estimate=pl.CostEstimate(flops=flops, transcendentals=0,
                                      bytes_accessed=bytes_accessed),
    )(xp, xp, xp, w1p, w2p, w3p, b1p, b2p, b3p)

    return out[..., :out_ch]                      # drop padded lanes (bf16 NHWC)


def bottleneck_forward(x_nchw, params, row_tile=None):
    """NCHW wrapper matching the PyTorch module interface."""
    x = jnp.transpose(x_nchw, (0, 2, 3, 1))
    out = bottleneck_forward_nhwc(x, params, row_tile=row_tile)
    return jnp.transpose(out, (0, 3, 1, 2))


# ---------------------------------------------------------------------------
# Synthetic params + pure-JAX reference (module semantics, f32)
# ---------------------------------------------------------------------------
def init_params(key, inplanes, planes, base_width=64, groups=1):
    width = int(planes * (base_width / 64.0)) * groups
    out_ch = planes * 4
    ks = jax.random.split(key, 15)
    p = {
        "w1": 0.1 * jax.random.normal(ks[0], (inplanes, width), jnp.float32),
        "w2": 0.1 * jax.random.normal(ks[1], (3, 3, width, width), jnp.float32),
        "w3": 0.1 * jax.random.normal(ks[2], (width, out_ch), jnp.float32),
    }
    for i, c in enumerate([width, width, out_ch]):
        p[f"g{i+1}"] = 1.0 + 0.1 * jax.random.normal(ks[3 + 4 * i], (c,), jnp.float32)
        p[f"b{i+1}"] = 0.1 * jax.random.normal(ks[4 + 4 * i], (c,), jnp.float32)
        p[f"m{i+1}"] = 0.1 * jax.random.normal(ks[5 + 4 * i], (c,), jnp.float32)
        p[f"v{i+1}"] = jax.random.uniform(ks[6 + 4 * i], (c,), jnp.float32, 0.5, 1.5)
    return p, width, out_ch


def bottleneck_reference(x_nchw, params):
    """Pure-JAX f32 reference (lax conv) matching the PyTorch module."""
    x = jnp.transpose(x_nchw, (0, 2, 3, 1)).astype(jnp.float32)

    def bn(y, g, b, m, v):
        return g * (y - m) / jnp.sqrt(v + EPS) + b

    out = jnp.einsum("nhwc,co->nhwo", x, params["w1"])
    out = jax.nn.relu(bn(out, params["g1"], params["b1"], params["m1"], params["v1"]))
    out = jax.lax.conv_general_dilated(
        out, params["w2"], window_strides=(1, 1), padding="SAME",
        dimension_numbers=("NHWC", "HWIO", "NHWC"))
    out = jax.nn.relu(bn(out, params["g2"], params["b2"], params["m2"], params["v2"]))
    out = jnp.einsum("nhwc,co->nhwo", out, params["w3"])
    out = bn(out, params["g3"], params["b3"], params["m3"], params["v3"])
    out = jax.nn.relu(out + x)
    return jnp.transpose(out, (0, 3, 1, 2))


if __name__ == "__main__":
    key = jax.random.PRNGKey(0)
    k_params, k_x = jax.random.split(key)

    N, planes, H, W = 2, 4, 16, 16
    inplanes = planes * 4  # 16 (residual requires inplanes == planes * expansion)

    params, width, out_ch = init_params(k_params, inplanes, planes)
    x = jax.random.normal(k_x, (N, inplanes, H, W), jnp.float32)  # NCHW

    # row_tile=8 -> grid (N=2, R=2): exercises the halo-row inputs + recompute.
    out = jax.block_until_ready(bottleneck_forward(x, params, row_tile=8))
    assert out.shape == (N, out_ch, H, W)

    ref = bottleneck_reference(x, params)
    out_f32 = out.astype(jnp.float32)
    max_err = float(jnp.max(jnp.abs(out_f32 - ref)))
    # Loose tolerance accounts for bf16 MXU inputs + bf16 output vs f32 reference.
    assert jnp.allclose(out_f32, ref, atol=6e-2, rtol=6e-2), \
        f"mismatch vs f32 reference (max abs err {max_err:.4f})"

    # Tiling invariance: single row-tile (halo rows zero-only) must agree.
    out_full = jax.block_until_ready(bottleneck_forward(x, params, row_tile=16))
    assert jnp.allclose(out_f32, out_full.astype(jnp.float32),
                        atol=1e-2, rtol=1e-2), "row-tiling mismatch"

    print("KERNEL_OK")
</pallas_src>

<mosaic_0001>
module attributes {stable_mosaic.version = 11 : i64} {
  func.func @_bottleneck_kernel(%arg0: i32, %arg1: i32, %arg2: memref<1x8x16x128xbf16, #tpu.memory_space<vmem>>, %arg3: memref<1x1x16x128xbf16, #tpu.memory_space<vmem>>, %arg4: memref<1x1x16x128xbf16, #tpu.memory_space<vmem>>, %arg5: memref<128x128xbf16, #tpu.memory_space<vmem>>, %arg6: memref<9x128x128xbf16, #tpu.memory_space<vmem>>, %arg7: memref<128x128xbf16, #tpu.memory_space<vmem>>, %arg8: memref<1x128xf32, #tpu.memory_space<vmem>>, %arg9: memref<1x128xf32, #tpu.memory_space<vmem>>, %arg10: memref<1x128xf32, #tpu.memory_space<vmem>>, %arg11: memref<1x8x16x128xbf16, #tpu.memory_space<vmem>>, %arg12: memref<10x18x128xbf16, #tpu.memory_space<vmem>>) attributes {dimension_semantics = [#tpu.dimension_semantics<parallel>, #tpu.dimension_semantics<parallel>], iteration_bounds = array<i64: 2, 2>, scalar_prefetch = 0 : i64, scratch_operands = 1 : i64, tpu.core_type = #tpu.core_type<tc>, window_params = [{transform_indices = @transform_0, window_bounds = array<i64: 1, 8, 16, 128>}, {transform_indices = @transform_1, window_bounds = array<i64: 1, 1, 16, 128>}, {transform_indices = @transform_2, window_bounds = array<i64: 1, 1, 16, 128>}, {pipeline_mode = #tpu.pipeline_mode<synchronous>, transform_indices = @transform_3, window_bounds = array<i64: 128, 128>}, {pipeline_mode = #tpu.pipeline_mode<synchronous>, transform_indices = @transform_4, window_bounds = array<i64: 9, 128, 128>}, {pipeline_mode = #tpu.pipeline_mode<synchronous>, transform_indices = @transform_5, window_bounds = array<i64: 128, 128>}, {pipeline_mode = #tpu.pipeline_mode<synchronous>, transform_indices = @transform_6, window_bounds = array<i64: 1, 128>}, {pipeline_mode = #tpu.pipeline_mode<synchronous>, transform_indices = @transform_7, window_bounds = array<i64: 1, 128>}, {pipeline_mode = #tpu.pipeline_mode<synchronous>, transform_indices = @transform_8, window_bounds = array<i64: 1, 128>}, {transform_indices = @transform_9, window_bounds = array<i64: 1, 8, 16, 128>}]} {
    %c0 = arith.constant 0 : index
    %c0_0 = arith.constant 0 : index
    %0 = vector.load %arg5[%c0, %c0_0] : memref<128x128xbf16, #tpu.memory_space<vmem>>, vector<128x128xbf16>
    %c0_1 = arith.constant 0 : index
    %c0_2 = arith.constant 0 : index
    %1 = vector.load %arg8[%c0_1, %c0_2] : memref<1x128xf32, #tpu.memory_space<vmem>>, vector<1x128xf32>
    %cst = arith.constant 0.000000e+00 : bf16
    %2 = vector.broadcast %cst : bf16 to vector<10x1x128xbf16>
    %c0_3 = arith.constant 0 : index
    %c0_4 = arith.constant 0 : index
    %c0_5 = arith.constant 0 : index
    %3 = vector.load %arg12[%c0_3, %c0_4, %c0_5] : memref<10x18x128xbf16, #tpu.memory_space<vmem>>, vector<10x1x128xbf16>
    tpu.vector_store %arg12[%c0_3, %c0_4, %c0_5], %2 {strides = array<i32>} : memref<10x18x128xbf16, #tpu.memory_space<vmem>>, vector<10x1x128xbf16>,
    %c0_6 = arith.constant 0 : index
    %c17 = arith.constant 17 : index
    %c0_7 = arith.constant 0 : index
    %4 = vector.load %arg12[%c0_6, %c17, %c0_7] : memref<10x18x128xbf16, #tpu.memory_space<vmem>>, vector<10x1x128xbf16>
    tpu.vector_store %arg12[%c0_6, %c17, %c0_7], %2 {strides = array<i32>} : memref<10x18x128xbf16, #tpu.memory_space<vmem>>, vector<10x1x128xbf16>,
    %c0_i32 = arith.constant 0 : i32
    %5 = arith.cmpi eq, %arg1, %c0_i32 : i32
    %6 = arith.extui %5 : i1 to i32
    %c0_i32_8 = arith.constant 0 : i32
    %7 = arith.cmpi ne, %6, %c0_i32_8 : i32
    scf.if %7 {
      %cst_78 = arith.constant 0.000000e+00 : bf16
      %109 = vector.broadcast %cst_78 : bf16 to vector<1x18x128xbf16>
      %c0_79 = arith.constant 0 : index
      %c0_80 = arith.constant 0 : index
      %c0_81 = arith.constant 0 : index
      %110 = vector.load %arg12[%c0_79, %c0_80, %c0_81] : memref<10x18x128xbf16, #tpu.memory_space<vmem>>, vector<1x18x128xbf16>
      tpu.vector_store %arg12[%c0_79, %c0_80, %c0_81], %109 {strides = array<i32>} : memref<10x18x128xbf16, #tpu.memory_space<vmem>>, vector<1x18x128xbf16>,
    } else {
    }
    %c0_i32_9 = arith.constant 0 : i32
    %8 = arith.cmpi sgt, %arg1, %c0_i32_9 : i32
    %9 = arith.extui %8 : i1 to i32
    %c0_i32_10 = arith.constant 0 : i32
    %10 = arith.cmpi ne, %9, %c0_i32_10 : i32
    scf.if %10 {
      %c0_78 = arith.constant 0 : index
      %c0_79 = arith.constant 0 : index
      %c0_80 = arith.constant 0 : index
      %c0_81 = arith.constant 0 : index
      %109 = vector.load %arg3[%c0_78, %c0_79, %c0_80, %c0_81] : memref<1x1x16x128xbf16, #tpu.memory_space<vmem>>, vector<1x1x16x128xbf16>
      %110 = vector.shape_cast %109 : vector<1x1x16x128xbf16> to vector<16x128xbf16>
      %cst_82 = arith.constant dense<0.000000e+00> : vector<16x128xf32>
      %111 = tpu.matmul %110, %0, %cst_82 {dimension_numbers = #tpu.dot_dimension_numbers<[1], [0], [0], [1], [0, 0, 1, 1], [], []>} : vector<16x128xbf16>, vector<128x128xbf16>, vector<16x128xf32> -> vector<16x128xf32>
      %112 = vector.broadcast %1 : vector<1x128xf32> to vector<16x128xf32>
      %113 = arith.addf %111, %112 : vector<16x128xf32>
      %cst_83 = arith.constant 0.000000e+00 : f32
      %114 = vector.broadcast %cst_83 : f32 to vector<16x128xf32>
      %115 = arith.maximumf %113, %114 : vector<16x128xf32>
      %116 = arith.truncf %115 : vector<16x128xf32> to vector<16x128xbf16>
      %117 = vector.shape_cast %116 : vector<16x128xbf16> to vector<1x16x128xbf16>
      %c0_84 = arith.constant 0 : index
      %c1_85 = arith.constant 1 : index
      %c0_86 = arith.constant 0 : index
      %118 = vector.load %arg12[%c0_84, %c1_85, %c0_86] : memref<10x18x128xbf16, #tpu.memory_space<vmem>>, vector<1x16x128xbf16>
      tpu.vector_store %arg12[%c0_84, %c1_85, %c0_86], %117 {strides = array<i32>} : memref<10x18x128xbf16, #tpu.memory_space<vmem>>, vector<1x16x128xbf16>,
    } else {
    }
    %c1_i32 = arith.constant 1 : i32
    %11 = arith.cmpi eq, %arg1, %c1_i32 : i32
    %12 = arith.extui %11 : i1 to i32
    %c0_i32_11 = arith.constant 0 : i32
    %13 = arith.cmpi ne, %12, %c0_i32_11 : i32
    scf.if %13 {
      %cst_78 = arith.constant 0.000000e+00 : bf16
      %109 = vector.broadcast %cst_78 : bf16 to vector<1x18x128xbf16>
      %c9 = arith.constant 9 : index
      %c0_79 = arith.constant 0 : index
      %c0_80 = arith.constant 0 : index
      %110 = vector.load %arg12[%c9, %c0_79, %c0_80] : memref<10x18x128xbf16, #tpu.memory_space<vmem>>, vector<1x18x128xbf16>
      tpu.vector_store %arg12[%c9, %c0_79, %c0_80], %109 {strides = array<i32>} : memref<10x18x128xbf16, #tpu.memory_space<vmem>>, vector<1x18x128xbf16>,
    } else {
    }
    %c1_i32_12 = arith.constant 1 : i32
    %14 = arith.cmpi slt, %arg1, %c1_i32_12 : i32
    %15 = arith.extui %14 : i1 to i32
    %c0_i32_13 = arith.constant 0 : i32
    %16 = arith.cmpi ne, %15, %c0_i32_13 : i32
    scf.if %16 {
      %c0_78 = arith.constant 0 : index
      %c0_79 = arith.constant 0 : index
      %c0_80 = arith.constant 0 : index
      %c0_81 = arith.constant 0 : index
      %109 = vector.load %arg4[%c0_78, %c0_79, %c0_80, %c0_81] : memref<1x1x16x128xbf16, #tpu.memory_space<vmem>>, vector<1x1x16x128xbf16>
      %110 = vector.shape_cast %109 : vector<1x1x16x128xbf16> to vector<16x128xbf16>
      %cst_82 = arith.constant dense<0.000000e+00> : vector<16x128xf32>
      %111 = tpu.matmul %110, %0, %cst_82 {dimension_numbers = #tpu.dot_dimension_numbers<[1], [0], [0], [1], [0, 0, 1, 1], [], []>} : vector<16x128xbf16>, vector<128x128xbf16>, vector<16x128xf32> -> vector<16x128xf32>
      %112 = vector.broadcast %1 : vector<1x128xf32> to vector<16x128xf32>
      %113 = arith.addf %111, %112 : vector<16x128xf32>
      %cst_83 = arith.constant 0.000000e+00 : f32
      %114 = vector.broadcast %cst_83 : f32 to vector<16x128xf32>
      %115 = arith.maximumf %113, %114 : vector<16x128xf32>
      %116 = arith.truncf %115 : vector<16x128xf32> to vector<16x128xbf16>
      %117 = vector.shape_cast %116 : vector<16x128xbf16> to vector<1x16x128xbf16>
      %c9 = arith.constant 9 : index
      %c1_84 = arith.constant 1 : index
      %c0_85 = arith.constant 0 : index
      %118 = vector.load %arg12[%c9, %c1_84, %c0_85] : memref<10x18x128xbf16, #tpu.memory_space<vmem>>, vector<1x16x128xbf16>
      tpu.vector_store %arg12[%c9, %c1_84, %c0_85], %117 {strides = array<i32>} : memref<10x18x128xbf16, #tpu.memory_space<vmem>>, vector<1x16x128xbf16>,
    } else {
    }
    %c0_14 = arith.constant 0 : index
    %c0_15 = arith.constant 0 : index
    %c0_16 = arith.constant 0 : index
    %c0_17 = arith.constant 0 : index
    %17 = vector.load %arg2[%c0_14, %c0_15, %c0_16, %c0_17] : memref<1x8x16x128xbf16, #tpu.memory_space<vmem>>, vector<1x8x16x128xbf16>
    %18 = vector.shape_cast %17 : vector<1x8x16x128xbf16> to vector<8x16x128xbf16>
    %19 = vector.shape_cast %18 : vector<8x16x128xbf16> to vector<128x128xbf16>
    %cst_18 = arith.constant dense<0.000000e+00> : vector<128x128xf32>
    %20 = tpu.matmul %19, %0, %cst_18 {dimension_numbers = #tpu.dot_dimension_numbers<[1], [0], [0], [1], [0, 0, 1, 1], [], []>} : vector<128x128xbf16>, vector<128x128xbf16>, vector<128x128xf32> -> vector<128x128xf32>
    %21 = vector.broadcast %1 : vector<1x128xf32> to vector<128x128xf32>
    %22 = arith.addf %20, %21 : vector<128x128xf32>
    %cst_19 = arith.constant 0.000000e+00 : f32
    %23 = vector.broadcast %cst_19 : f32 to vector<128x128xf32>
    %24 = arith.maximumf %22, %23 : vector<128x128xf32>
    %25 = arith.truncf %24 : vector<128x128xf32> to vector<128x128xbf16>
    %26 = vector.shape_cast %25 : vector<128x128xbf16> to vector<8x16x128xbf16>
    %c1 = arith.constant 1 : index
    %c1_20 = arith.constant 1 : index
    %c0_21 = arith.constant 0 : index
    %27 = vector.load %arg12[%c1, %c1_20, %c0_21] : memref<10x18x128xbf16, #tpu.memory_space<vmem>>, vector<8x16x128xbf16>
    tpu.vector_store %arg12[%c1, %c1_20, %c0_21], %26 {strides = array<i32>} : memref<10x18x128xbf16, #tpu.memory_space<vmem>>, vector<8x16x128xbf16>,
    %c0_22 = arith.constant 0 : index
    %c0_23 = arith.constant 0 : index
    %28 = vector.load %arg7[%c0_22, %c0_23] : memref<128x128xbf16, #tpu.memory_space<vmem>>, vector<128x128xbf16>
    %c0_24 = arith.constant 0 : index
    %c0_25 = arith.constant 0 : index
    %29 = vector.load %arg9[%c0_24, %c0_25] : memref<1x128xf32, #tpu.memory_space<vmem>>, vector<1x128xf32>
    %c0_26 = arith.constant 0 : index
    %c0_27 = arith.constant 0 : index
    %30 = vector.load %arg10[%c0_26, %c0_27] : memref<1x128xf32, #tpu.memory_space<vmem>>, vector<1x128xf32>
    %cst_28 = arith.constant 0.000000e+00 : f32
    %31 = vector.broadcast %cst_28 : f32 to vector<128x128xf32>
    %c0_29 = arith.constant 0 : index
    %c0_30 = arith.constant 0 : index
    %c0_31 = arith.constant 0 : index
    %32 = vector.load %arg12[%c0_29, %c0_30, %c0_31] : memref<10x18x128xbf16, #tpu.memory_space<vmem>>, vector<8x18x128xbf16>
    %33 = vector.extract_strided_slice %32 {offsets = [0, 0, 0], sizes = [8, 16, 128], strides = [1, 1, 1]} : vector<8x18x128xbf16> to vector<8x16x128xbf16>
    %34 = vector.shape_cast %33 : vector<8x16x128xbf16> to vector<128x128xbf16>
    %c0_32 = arith.constant 0 : index
    %c0_33 = arith.constant 0 : index
    %c0_34 = arith.constant 0 : index
    %35 = vector.load %arg6[%c0_32, %c0_33, %c0_34] : memref<9x128x128xbf16, #tpu.memory_space<vmem>>, vector<1x128x128xbf16>
    %36 = vector.shape_cast %35 : vector<1x128x128xbf16> to vector<128x128xbf16>
    %cst_35 = arith.constant dense<0.000000e+00> : vector<128x128xf32>
    %37 = tpu.matmul %34, %36, %cst_35 {dimension_numbers = #tpu.dot_dimension_numbers<[1], [0], [0], [1], [0, 0, 1, 1], [], []>} : vector<128x128xbf16>, vector<128x128xbf16>, vector<128x128xf32> -> vector<128x128xf32>
    %38 = arith.addf %31, %37 : vector<128x128xf32>
    %39 = vector.extract_strided_slice %32 {offsets = [0, 1, 0], sizes = [8, 16, 128], strides = [1, 1, 1]} : vector<8x18x128xbf16> to vector<8x16x128xbf16>
    %40 = vector.shape_cast %39 : vector<8x16x128xbf16> to vector<128x128xbf16>
    %c1_36 = arith.constant 1 : index
    %c0_37 = arith.constant 0 : index
    %c0_38 = arith.constant 0 : index
    %41 = vector.load %arg6[%c1_36, %c0_37, %c0_38] : memref<9x128x128xbf16, #tpu.memory_space<vmem>>, vector<1x128x128xbf16>
    %42 = vector.shape_cast %41 : vector<1x128x128xbf16> to vector<128x128xbf16>
    %cst_39 = arith.constant dense<0.000000e+00> : vector<128x128xf32>
    %43 = tpu.matmul %40, %42, %cst_39 {dimension_numbers = #tpu.dot_dimension_numbers<[1], [0], [0], [1], [0, 0, 1, 1], [], []>} : vector<128x128xbf16>, vector<128x128xbf16>, vector<128x128xf32> -> vector<128x128xf32>
    %44 = arith.addf %38, %43 : vector<128x128xf32>
    %45 = vector.extract_strided_slice %32 {offsets = [0, 2, 0], sizes = [8, 16, 128], strides = [1, 1, 1]} : vector<8x18x128xbf16> to vector<8x16x128xbf16>
    %46 = vector.shape_cast %45 : vector<8x16x128xbf16> to vector<128x128xbf16>
    %c2 = arith.constant 2 : index
    %c0_40 = arith.constant 0 : index
    %c0_41 = arith.constant 0 : index
    %47 = vector.load %arg6[%c2, %c0_40, %c0_41] : memref<9x128x128xbf16, #tpu.memory_space<vmem>>, vector<1x128x128xbf16>
    %48 = vector.shape_cast %47 : vector<1x128x128xbf16> to vector<128x128xbf16>
    %cst_42 = arith.constant dense<0.000000e+00> : vector<128x128xf32>
    %49 = tpu.matmul %46, %48, %cst_42 {dimension_numbers = #tpu.dot_dimension_numbers<[1], [0], [0], [1], [0, 0, 1, 1], [], []>} : vector<128x128xbf16>, vector<128x128xbf16>, vector<128x128xf32> -> vector<128x128xf32>
    %50 = arith.addf %44, %49 : vector<128x128xf32>
    %c1_43 = arith.constant 1 : index
    %c0_44 = arith.constant 0 : index
    %c0_45 = arith.constant 0 : index
    %51 = vector.load %arg12[%c1_43, %c0_44, %c0_45] : memref<10x18x128xbf16, #tpu.memory_space<vmem>>, vector<8x18x128xbf16>
    %52 = vector.extract_strided_slice %51 {offsets = [0, 0, 0], sizes = [8, 16, 128], strides = [1, 1, 1]} : vector<8x18x128xbf16> to vector<8x16x128xbf16>
    %53 = vector.shape_cast %52 : vector<8x16x128xbf16> to vector<128x128xbf16>
    %c3 = arith.constant 3 : index
    %c0_46 = arith.constant 0 : index
    %c0_47 = arith.constant 0 : index
    %54 = vector.load %arg6[%c3, %c0_46, %c0_47] : memref<9x128x128xbf16, #tpu.memory_space<vmem>>, vector<1x128x128xbf16>
    %55 = vector.shape_cast %54 : vector<1x128x128xbf16> to vector<128x128xbf16>
    %cst_48 = arith.constant dense<0.000000e+00> : vector<128x128xf32>
    %56 = tpu.matmul %53, %55, %cst_48 {dimension_numbers = #tpu.dot_dimension_numbers<[1], [0], [0], [1], [0, 0, 1, 1], [], []>} : vector<128x128xbf16>, vector<128x128xbf16>, vector<128x128xf32> -> vector<128x128xf32>
    %57 = arith.addf %50, %56 : vector<128x128xf32>
    %58 = vector.extract_strided_slice %51 {offsets = [0, 1, 0], sizes = [8, 16, 128], strides = [1, 1, 1]} : vector<8x18x128xbf16> to vector<8x16x128xbf16>
    %59 = vector.shape_cast %58 : vector<8x16x128xbf16> to vector<128x128xbf16>
    %c4 = arith.constant 4 : index
    %c0_49 = arith.constant 0 : index
    %c0_50 = arith.constant 0 : index
    %60 = vector.load %arg6[%c4, %c0_49, %c0_50] : memref<9x128x128xbf16, #tpu.memory_space<vmem>>, vector<1x128x128xbf16>
    %61 = vector.shape_cast %60 : vector<1x128x128xbf16> to vector<128x128xbf16>
    %cst_51 = arith.constant dense<0.000000e+00> : vector<128x128xf32>
    %62 = tpu.matmul %59, %61, %cst_51 {dimension_numbers = #tpu.dot_dimension_numbers<[1], [0], [0], [1], [0, 0, 1, 1], [], []>} : vector<128x128xbf16>, vector<128x128xbf16>, vector<128x128xf32> -> vector<128x128xf32>
    %63 = arith.addf %57, %62 : vector<128x128xf32>
    %64 = vector.extract_strided_slice %51 {offsets = [0, 2, 0], sizes = [8, 16, 128], strides = [1, 1, 1]} : vector<8x18x128xbf16> to vector<8x16x128xbf16>
    %65 = vector.shape_cast %64 : vector<8x16x128xbf16> to vector<128x128xbf16>
    %c5 = arith.constant 5 : index
    %c0_52 = arith.constant 0 : index
    %c0_53 = arith.constant 0 : index
    %66 = vector.load %arg6[%c5, %c0_52, %c0_53] : memref<9x128x128xbf16, #tpu.memory_space<vmem>>, vector<1x128x128xbf16>
    %67 = vector.shape_cast %66 : vector<1x128x128xbf16> to vector<128x128xbf16>
    %cst_54 = arith.constant dense<0.000000e+00> : vector<128x128xf32>
    %68 = tpu.matmul %65, %67, %cst_54 {dimension_numbers = #tpu.dot_dimension_numbers<[1], [0], [0], [1], [0, 0, 1, 1], [], []>} : vector<128x128xbf16>, vector<128x128xbf16>, vector<128x128xf32> -> vector<128x128xf32>
    %69 = arith.addf %63, %68 : vector<128x128xf32>
    %c2_55 = arith.constant 2 : index
    %c0_56 = arith.constant 0 : index
    %c0_57 = arith.constant 0 : index
    %70 = vector.load %arg12[%c2_55, %c0_56, %c0_57] : memref<10x18x128xbf16, #tpu.memory_space<vmem>>, vector<8x18x128xbf16>
    %71 = vector.extract_strided_slice %70 {offsets = [0, 0, 0], sizes = [8, 16, 128], strides = [1, 1, 1]} : vector<8x18x128xbf16> to vector<8x16x128xbf16>
    %72 = vector.shape_cast %71 : vector<8x16x128xbf16> to vector<128x128xbf16>
    %c6 = arith.constant 6 : index
    %c0_58 = arith.constant 0 : index
    %c0_59 = arith.constant 0 : index
    %73 = vector.load %arg6[%c6, %c0_58, %c0_59] : memref<9x128x128xbf16, #tpu.memory_space<vmem>>, vector<1x128x128xbf16>
    %74 = vector.shape_cast %73 : vector<1x128x128xbf16> to vector<128x128xbf16>
    %cst_60 = arith.constant dense<0.000000e+00> : vector<128x128xf32>
    %75 = tpu.matmul %72, %74, %cst_60 {dimension_numbers = #tpu.dot_dimension_numbers<[1], [0], [0], [1], [0, 0, 1, 1], [], []>} : vector<128x128xbf16>, vector<128x128xbf16>, vector<128x128xf32> -> vector<128x128xf32>
    %76 = arith.addf %69, %75 : vector<128x128xf32>
    %77 = vector.extract_strided_slice %70 {offsets = [0, 1, 0], sizes = [8, 16, 128], strides = [1, 1, 1]} : vector<8x18x128xbf16> to vector<8x16x128xbf16>
    %78 = vector.shape_cast %77 : vector<8x16x128xbf16> to vector<128x128xbf16>
    %c7 = arith.constant 7 : index
    %c0_61 = arith.constant 0 : index
    %c0_62 = arith.constant 0 : index
    %79 = vector.load %arg6[%c7, %c0_61, %c0_62] : memref<9x128x128xbf16, #tpu.memory_space<vmem>>, vector<1x128x128xbf16>
    %80 = vector.shape_cast %79 : vector<1x128x128xbf16> to vector<128x128xbf16>
    %cst_63 = arith.constant dense<0.000000e+00> : vector<128x128xf32>
    %81 = tpu.matmul %78, %80, %cst_63 {dimension_numbers = #tpu.dot_dimension_numbers<[1], [0], [0], [1], [0, 0, 1, 1], [], []>} : vector<128x128xbf16>, vector<128x128xbf16>, vector<128x128xf32> -> vector<128x128xf32>
    %82 = arith.addf %76, %81 : vector<128x128xf32>
    %83 = vector.extract_strided_slice %70 {offsets = [0, 2, 0], sizes = [8, 16, 128], strides = [1, 1, 1]} : vector<8x18x128xbf16> to vector<8x16x128xbf16>
    %84 = vector.shape_cast %83 : vector<8x16x128xbf16> to vector<128x128xbf16>
    %c8 = arith.constant 8 : index
    %c0_64 = arith.constant 0 : index
    %c0_65 = arith.constant 0 : index
    %85 = vector.load %arg6[%c8, %c0_64, %c0_65] : memref<9x128x128xbf16, #tpu.memory_space<vmem>>, vector<1x128x128xbf16>
    %86 = vector.shape_cast %85 : vector<1x128x128xbf16> to vector<128x128xbf16>
    %cst_66 = arith.constant dense<0.000000e+00> : vector<128x128xf32>
    %87 = tpu.matmul %84, %86, %cst_66 {dimension_numbers = #tpu.dot_dimension_numbers<[1], [0], [0], [1], [0, 0, 1, 1], [], []>} : vector<128x128xbf16>, vector<128x128xbf16>, vector<128x128xf32> -> vector<128x128xf32>
    %88 = arith.addf %82, %87 : vector<128x128xf32>
    %89 = vector.broadcast %29 : vector<1x128xf32> to vector<128x128xf32>
    %90 = arith.addf %88, %89 : vector<128x128xf32>
    %cst_67 = arith.constant 0.000000e+00 : f32
    %91 = vector.broadcast %cst_67 : f32 to vector<128x128xf32>
    %92 = arith.maximumf %90, %91 : vector<128x128xf32>
    %93 = arith.truncf %92 : vector<128x128xf32> to vector<128x128xbf16>
    %cst_68 = arith.constant dense<0.000000e+00> : vector<128x128xf32>
    %94 = tpu.matmul %93, %28, %cst_68 {dimension_numbers = #tpu.dot_dimension_numbers<[1], [0], [0], [1], [0, 0, 1, 1], [], []>} : vector<128x128xbf16>, vector<128x128xbf16>, vector<128x128xf32> -> vector<128x128xf32>
    %c0_69 = arith.constant 0 : index
    %c0_70 = arith.constant 0 : index
    %c0_71 = arith.constant 0 : index
    %c0_72 = arith.constant 0 : index
    %95 = vector.load %arg2[%c0_69, %c0_70, %c0_71, %c0_72] : memref<1x8x16x128xbf16, #tpu.memory_space<vmem>>, vector<1x8x16x128xbf16>
    %96 = vector.shape_cast %95 : vector<1x8x16x128xbf16> to vector<8x16x128xbf16>
    %97 = arith.extf %96 : vector<8x16x128xbf16> to vector<8x16x128xf32>
    %98 = vector.broadcast %30 : vector<1x128xf32> to vector<128x128xf32>
    %99 = arith.addf %94, %98 : vector<128x128xf32>
    %100 = vector.shape_cast %97 : vector<8x16x128xf32> to vector<128x128xf32>
    %101 = arith.addf %99, %100 : vector<128x128xf32>
    %cst_73 = arith.constant 0.000000e+00 : f32
    %102 = vector.broadcast %cst_73 : f32 to vector<128x128xf32>
    %103 = arith.maximumf %101, %102 : vector<128x128xf32>
    %104 = vector.shape_cast %103 : vector<128x128xf32> to vector<8x16x128xf32>
    %105 = arith.truncf %104 : vector<8x16x128xf32> to vector<8x16x128xbf16>
    %c0_74 = arith.constant 0 : index
    %c0_75 = arith.constant 0 : index
    %c0_76 = arith.constant 0 : index
    %c0_77 = arith.constant 0 : index
    %106 = vector.load %arg11[%c0_74, %c0_75, %c0_76, %c0_77] : memref<1x8x16x128xbf16, #tpu.memory_space<vmem>>, vector<1x8x16x128xbf16>
    %107 = vector.shape_cast %106 : vector<1x8x16x128xbf16> to vector<8x16x128xbf16>
    %108 = vector.shape_cast %105 : vector<8x16x128xbf16> to vector<1x8x16x128xbf16>
    tpu.vector_store %arg11[%c0_74, %c0_75, %c0_76, %c0_77], %108 {strides = array<i32>} : memref<1x8x16x128xbf16, #tpu.memory_space<vmem>>, vector<1x8x16x128xbf16>,
    return
  }
  func.func @transform_0(%arg0: i32, %arg1: i32) -> (i32, i32, i32, i32) {
    %c0_i32 = arith.constant 0 : i32
    %c0_i32_0 = arith.constant 0 : i32
    %c0_i32_1 = arith.constant 0 : i32
    return %arg0, %arg1, %c0_i32, %c0_i32_0 : i32, i32, i32, i32
  }
  func.func @transform_1(%arg0: i32, %arg1: i32) -> (i32, i32, i32, i32) {
    %c8_i32 = arith.constant 8 : i32
    %0 = arith.muli %arg1, %c8_i32 : i32
    %c1_i32 = arith.constant 1 : i32
    %1 = arith.subi %0, %c1_i32 : i32
    %c0_i32 = arith.constant 0 : i32
    %2 = arith.maxsi %1, %c0_i32 : i32
    %c0_i32_0 = arith.constant 0 : i32
    %c0_i32_1 = arith.constant 0 : i32
    %c0_i32_2 = arith.constant 0 : i32
    return %arg0, %2, %c0_i32_0, %c0_i32_1 : i32, i32, i32, i32
  }
  func.func @transform_2(%arg0: i32, %arg1: i32) -> (i32, i32, i32, i32) {
    %c8_i32 = arith.constant 8 : i32
    %0 = arith.muli %arg1, %c8_i32 : i32
    %c8_i32_0 = arith.constant 8 : i32
    %1 = arith.addi %0, %c8_i32_0 : i32
    %c15_i32 = arith.constant 15 : i32
    %2 = arith.minsi %1, %c15_i32 : i32
    %c0_i32 = arith.constant 0 : i32
    %c0_i32_1 = arith.constant 0 : i32
    %c0_i32_2 = arith.constant 0 : i32
    return %arg0, %2, %c0_i32, %c0_i32_1 : i32, i32, i32, i32
  }
  func.func @transform_3(%arg0: i32, %arg1: i32) -> (i32, i32) {
    %c0_i32 = arith.constant 0 : i32
    %c0_i32_0 = arith.constant 0 : i32
    %c0_i32_1 = arith.constant 0 : i32
    return %c0_i32, %c0_i32_0 : i32, i32
  }
  func.func @transform_4(%arg0: i32, %arg1: i32) -> (i32, i32, i32) {
    %c0_i32 = arith.constant 0 : i32
    %c0_i32_0 = arith.constant 0 : i32
    %c0_i32_1 = arith.constant 0 : i32
    %c0_i32_2 = arith.constant 0 : i32
    return %c0_i32, %c0_i32_0, %c0_i32_1 : i32, i32, i32
  }
  func.func @transform_5(%arg0: i32, %arg1: i32) -> (i32, i32) {
    %c0_i32 = arith.constant 0 : i32
    %c0_i32_0 = arith.constant 0 : i32
    %c0_i32_1 = arith.constant 0 : i32
    return %c0_i32, %c0_i32_0 : i32, i32
  }
  func.func @transform_6(%arg0: i32, %arg1: i32) -> (i32, i32) {
    %c0_i32 = arith.constant 0 : i32
    %c0_i32_0 = arith.constant 0 : i32
    %c0_i32_1 = arith.constant 0 : i32
    return %c0_i32, %c0_i32_0 : i32, i32
  }
  func.func @transform_7(%arg0: i32, %arg1: i32) -> (i32, i32) {
    %c0_i32 = arith.constant 0 : i32
    %c0_i32_0 = arith.constant 0 : i32
    %c0_i32_1 = arith.constant 0 : i32
    return %c0_i32, %c0_i32_0 : i32, i32
  }
  func.func @transform_8(%arg0: i32, %arg1: i32) -> (i32, i32) {
    %c0_i32 = arith.constant 0 : i32
    %c0_i32_0 = arith.constant 0 : i32
    %c0_i32_1 = arith.constant 0 : i32
    return %c0_i32, %c0_i32_0 : i32, i32
  }
  func.func @transform_9(%arg0: i32, %arg1: i32) -> (i32, i32, i32, i32) {
    %c0_i32 = arith.constant 0 : i32
    %c0_i32_0 = arith.constant 0 : i32
    %c0_i32_1 = arith.constant 0 : i32
    return %arg0, %arg1, %c0_i32, %c0_i32_0 : i32, i32, i32, i32
  }
}

</mosaic_0001>

<llo_original>
// kernel: bottleneck_forward_nhwc.1
$region0: #{bottleneck_forward_nhwc.1}
  #allocation0 [shape = 'u32[]', space=smem, size = 0x4, offset = 0x4, fixed_abs, tag = 'smem constant byte address 0x4 - core index']
  #allocation1 [shape = 'u32[144,128]{1,0:T(1,128)}', space=vmem, size = 0x12000, scoped, tag = 'internal scratch']
  #allocation2 [shape = 'bf16[10,18,128]{2,1,0:T(8,128)(2,1)}', space=vmem, size = 0xf000, scoped, tag = 'scratch operand']
  %s0 = inlined_call_operand.vmem [shape: bf16[2,16,16,128], index: 0, kind: input, shape index: {}, may-alias: {0,1,2}]
  %s1 = inlined_call_operand.vmem [shape: bf16[2,16,16,128], index: 1, kind: input, shape index: {}, may-alias: {0,1,2}]
  %s2 = inlined_call_operand.vmem [shape: bf16[2,16,16,128], index: 2, kind: input, shape index: {}, may-alias: {0,1,2}]
  %s3 = inlined_call_operand.vmem [shape: bf16[128,128], index: 3, kind: input, shape index: {}]
  %s4 = inlined_call_operand.vmem [shape: bf16[9,128,128], index: 4, kind: input, shape index: {}]
  %s5 = inlined_call_operand.vmem [shape: bf16[128,128], index: 5, kind: input, shape index: {}]
  %s6 = inlined_call_operand.vmem [shape: f32[1,128], index: 6, kind: input, shape index: {}]
  %s7 = inlined_call_operand.vmem [shape: f32[1,128], index: 7, kind: input, shape index: {}]
  %s8 = inlined_call_operand.vmem [shape: f32[1,128], index: 8, kind: input, shape index: {}]
  %s9 = inlined_call_operand.hbm [shape: bf16[2,16,16,128], index: 9, kind: output, shape index: {}]
  %s10 = sld [smem:[#allocation0]]
  $region85: #{bottleneck_forward_nhwc.1} parent=0
    _
  %s12 = ssub.s32 1, %s10
  %s13 = scalar_select 0, %s12, %s10
  $region1: #{bottleneck_forward_nhwc.1} parent=0
    #allocation3 [shape = 'u8[65536]{0}', space=vmem, size = 0x10000, scoped, tag = 'output window, operand 0']
    #allocation4 [shape = 's32[2]{0}', space=sflag, size = 0x8, scoped, tag = 'scoped memory for bottleneck_forward_nhwc.1']
    %14 = vsyncpa [#allocation4], 0
    %s15 = scalar_lea.sflag [#allocation4], 1
    %16 = vsyncpa %s15, 0
    loop: start=0, step=1, limit=6
    $region2: #{bottleneck_forward_nhwc.1} parent=1 // loop_pre_header
      _
    $region3: #{bottleneck_forward_nhwc.1} parent=1 // loop_header
      %s18 = sphi 0, %s22
      %p19 = scmp.ge.s32.totalorder %s18, 6
      %s25 = sphi 0, %s37
      %s26 = sphi 0, %s33
      %s27 = sphi 0, %s25
      %s28 = sphi 0, %s26
      %s29 = sphi 0, %s27
      %s30 = sphi 0, %s28
      %s42 = sphi 0, %s44
      %s45 = sphi 0, %s42
      %s46 = sphi 0, %s45
      %s62 = sphi 0, %s46
      %s78 = sphi 0, %s80
      %s81 = sphi 0, %s78
      %s82 = sphi 0, %s81
      %s98 = sphi 0, %s82
      %s114 = sphi 0, %s116
      %s117 = sphi 0, %s114
      %s118 = sphi 0, %s117
      %s134 = sphi 0, %s118
      %s138 = sphi 0, %s138
      %s140 = sphi 0, %s138
      %s141 = sphi 0, %s140
      %s155 = sphi 0, %s141
      %s159 = sphi 0, %s159
      %s161 = sphi 0, %s159
      %s162 = sphi 0, %s161
      %s176 = sphi 0, %s162
      %s180 = sphi 0, %s180
      %s182 = sphi 0, %s180
      %s183 = sphi 0, %s182
      %s197 = sphi 0, %s183
      %s201 = sphi 0, %s201
      %s203 = sphi 0, %s201
      %s204 = sphi 0, %s203
      %s218 = sphi 0, %s204
      %s222 = sphi 0, %s222
      %s224 = sphi 0, %s222
      %s225 = sphi 0, %s224
      %s239 = sphi 0, %s225
      %s243 = sphi 0, %s243
      %s245 = sphi 0, %s243
      %s246 = sphi 0, %s245
      %s260 = sphi 0, %s246
      %s268 = sphi 0, %s270
      %s271 = sphi 0, %s268
      %s272 = sphi 0, %s271
      %s288 = sphi 0, %s272
    $region4: #{bottleneck_forward_nhwc.1} parent=1 // loop_header_branch
      %21 = sbr.rel (%p19) target = $region8
    $region5: #{bottleneck_forward_nhwc.1} parent=1 // loop_body
      %s23 = ssub.s32 %s18, 1
      %s24 = ssub.s32 %s18, 2
      %s31 = sadd.s32 1, %s26
      %p32 = scmp.ge.s32.totalorder %s31, 2
      %s33 = scalar_select %p32, 0, %s31
      %s34 = sadd.s32 1, %s25
      %s35 = scalar_select %p32, %s34, %s25
      %p36 = scmp.ge.s32.totalorder %s35, 2
      %s37 = scalar_select %p36, 0, %s35
      %s38 = ssub.s32 %s25, %s37
      %s39 = ssub.s32 %s26, %s33
      %s40 = sor.u32 %s38, %s39
      %p41 = scmp.eq.s32.totalorder %s40, 0
      %s43 = sadd.s32 %s42, 1
      %s44 = scalar_select %p41, %s42, %s43
      %p47 = pneg %p41
      %p48 = scmp.eq.s32.totalorder %s18, 3
      %p49 = por %p47, %p48
      %p50 = scmp.ne.s32.totalorder %s42, %s45
      %p51 = scmp.eq.s32.totalorder %s18, 0
      %p52 = por %p50, %p51
      %p53 = scmp.ne.s32.totalorder %s42, %s45
      %p54 = scmp.eq.s32.totalorder %s23, 3
      %p55 = por %p53, %p54
      %p56 = scmp.ne.s32.totalorder %s45, %s46
      %p57 = scmp.eq.s32.totalorder %s23, 0
      %p58 = por %p56, %p57
      %p59 = scmp.ne.s32.totalorder %s45, %s46
      %p60 = scmp.eq.s32.totalorder %s24, 3
      %p61 = por %p59, %p60
      %p63 = scmp.ne.s32.totalorder %s46, %s62
      %p64 = scmp.eq.s32.totalorder %s24, 0
      %p65 = por %p63, %p64
      %s66 = smul.u32 %s26, 8
      %s67 = ssub.s32 %s66, 1
      %p68 = scmp.gt.s32.totalorder %s67, 0
      %s69 = scalar_select %p68, %s67, 0
      %s70 = smul.u32 %s33, 8
      %s71 = ssub.s32 %s70, 1
      %p72 = scmp.gt.s32.totalorder %s71, 0
      %s73 = scalar_select %p72, %s71, 0
      %s74 = ssub.s32 %s25, %s37
      %s75 = ssub.s32 %s69, %s73
      %s76 = sor.u32 %s74, %s75
      %p77 = scmp.eq.s32.totalorder %s76, 0
      %s79 = sadd.s32 %s78, 1
      %s80 = scalar_select %p77, %s78, %s79
      %p83 = pneg %p77
      %p84 = scmp.eq.s32.totalorder %s18, 3
      %p85 = por %p83, %p84
      %p86 = scmp.ne.s32.totalorder %s78, %s81
      %p87 = scmp.eq.s32.totalorder %s18, 0
      %p88 = por %p86, %p87
      %p89 = scmp.ne.s32.totalorder %s78, %s81
      %p90 = scmp.eq.s32.totalorder %s23, 3
      %p91 = por %p89, %p90
      %p92 = scmp.ne.s32.totalorder %s81, %s82
      %p93 = scmp.eq.s32.totalorder %s23, 0
      %p94 = por %p92, %p93
      %p95 = scmp.ne.s32.totalorder %s81, %s82
      %p96 = scmp.eq.s32.totalorder %s24, 3
      %p97 = por %p95, %p96
      %p99 = scmp.ne.s32.totalorder %s82, %s98
      %p100 = scmp.eq.s32.totalorder %s24, 0
      %p101 = por %p99, %p100
      %s102 = smul.u32 %s26, 8
      %s103 = sadd.s32 %s102, 8
      %p104 = scmp.lt.s32.totalorder %s103, 15
      %s105 = scalar_select %p104, %s103, 15
      %s106 = smul.u32 %s33, 8
      %s107 = sadd.s32 %s106, 8
      %p108 = scmp.lt.s32.totalorder %s107, 15
      %s109 = scalar_select %p108, %s107, 15
      %s110 = ssub.s32 %s25, %s37
      %s111 = ssub.s32 %s105, %s109
      %s112 = sor.u32 %s110, %s111
      %p113 = scmp.eq.s32.totalorder %s112, 0
      %s115 = sadd.s32 %s114, 1
      %s116 = scalar_select %p113, %s114, %s115
      %p119 = pneg %p113
      %p120 = scmp.eq.s32.totalorder %s18, 3
      %p121 = por %p119, %p120
      %p122 = scmp.ne.s32.totalorder %s114, %s117
      %p123 = scmp.eq.s32.totalorder %s18, 0
      %p124 = por %p122, %p123
      %p125 = scmp.ne.s32.totalorder %s114, %s117
      %p126 = scmp.eq.s32.totalorder %s23, 3
      %p127 = por %p125, %p126
      %p128 = scmp.ne.s32.totalorder %s117, %s118
      %p129 = scmp.eq.s32.totalorder %s23, 0
      %p130 = por %p128, %p129
      %p131 = scmp.ne.s32.totalorder %s117, %s118
      %p132 = scmp.eq.s32.totalorder %s24, 3
      %p133 = por %p131, %p132
      %p135 = scmp.ne.s32.totalorder %s118, %s134
      %p136 = scmp.eq.s32.totalorder %s24, 0
      %p137 = por %p135, %p136
      %s139 = sadd.s32 %s138, 1
      %p142 = scmp.eq.s32.totalorder %s18, 3
      %p143 = scmp.ne.s32.totalorder %s138, %s140
      %p144 = scmp.eq.s32.totalorder %s18, 0
      %p145 = por %p143, %p144
      %p146 = scmp.ne.s32.totalorder %s138, %s140
      %p147 = scmp.eq.s32.totalorder %s23, 3
      %p148 = por %p146, %p147
      %p149 = scmp.ne.s32.totalorder %s140, %s141
      %p150 = scmp.eq.s32.totalorder %s23, 0
      %p151 = por %p149, %p150
      %p152 = scmp.ne.s32.totalorder %s140, %s141
      %p153 = scmp.eq.s32.totalorder %s24, 3
      %p154 = por %p152, %p153
      %p156 = scmp.ne.s32.totalorder %s141, %s155
      %p157 = scmp.eq.s32.totalorder %s24, 0
      %p158 = por %p156, %p157
      %s160 = sadd.s32 %s159, 1
      %p163 = scmp.eq.s32.totalorder %s18, 3
      %p164 = scmp.ne.s32.totalorder %s159, %s161
      %p165 = scmp.eq.s32.totalorder %s18, 0
      %p166 = por %p164, %p165
      %p167 = scmp.ne.s32.totalorder %s159, %s161
      %p168 = scmp.eq.s32.totalorder %s23, 3
      %p169 = por %p167, %p168
      %p170 = scmp.ne.s32.totalorder %s161, %s162
      %p171 = scmp.eq.s32.totalorder %s23, 0
      %p172 = por %p170, %p171
      %p173 = scmp.ne.s32.totalorder %s161, %s162
      %p174 = scmp.eq.s32.totalorder %s24, 3
      %p175 = por %p173, %p174
      %p177 = scmp.ne.s32.totalorder %s162, %s176
      %p178 = scmp.eq.s32.totalorder %s24, 0
      %p179 = por %p177, %p178
      %s181 = sadd.s32 %s180, 1
      %p184 = scmp.eq.s32.totalorder %s18, 3
      %p185 = scmp.ne.s32.totalorder %s180, %s182
      %p186 = scmp.eq.s32.totalorder %s18, 0
      %p187 = por %p185, %p186
      %p188 = scmp.ne.s32.totalorder %s180, %s182
      %p189 = scmp.eq.s32.totalorder %s23, 3
      %p190 = por %p188, %p189
      %p191 = scmp.ne.s32.totalorder %s182, %s183
      %p192 = scmp.eq.s32.totalorder %s23, 0
      %p193 = por %p191, %p192
      %p194 = scmp.ne.s32.totalorder %s182, %s183
      %p195 = scmp.eq.s32.totalorder %s24, 3
      %p196 = por %p194, %p195
      %p198 = scmp.ne.s32.totalorder %s183, %s197
      %p199 = scmp.eq.s32.totalorder %s24, 0
      %p200 = por %p198, %p199
      %s202 = sadd.s32 %s201, 1
      %p205 = scmp.eq.s32.totalorder %s18, 3
      %p206 = scmp.ne.s32.totalorder %s201, %s203
      %p207 = scmp.eq.s32.totalorder %s18, 0
      %p208 = por %p206, %p207
      %p209 = scmp.ne.s32.totalorder %s201, %s203
      %p210 = scmp.eq.s32.totalorder %s23, 3
      %p211 = por %p209, %p210
      %p212 = scmp.ne.s32.totalorder %s203, %s204
      %p213 = scmp.eq.s32.totalorder %s23, 0
      %p214 = por %p212, %p213
      %p215 = scmp.ne.s32.totalorder %s203, %s204
      %p216 = scmp.eq.s32.totalorder %s24, 3
      %p217 = por %p215, %p216
      %p219 = scmp.ne.s32.totalorder %s204, %s218
      %p220 = scmp.eq.s32.totalorder %s24, 0
      %p221 = por %p219, %p220
      %s223 = sadd.s32 %s222, 1
      %p226 = scmp.eq.s32.totalorder %s18, 3
      %p227 = scmp.ne.s32.totalorder %s222, %s224
      %p228 = scmp.eq.s32.totalorder %s18, 0
      %p229 = por %p227, %p228
      %p230 = scmp.ne.s32.totalorder %s222, %s224
      %p231 = scmp.eq.s32.totalorder %s23, 3
      %p232 = por %p230, %p231
      %p233 = scmp.ne.s32.totalorder %s224, %s225
      %p234 = scmp.eq.s32.totalorder %s23, 0
      %p235 = por %p233, %p234
      %p236 = scmp.ne.s32.totalorder %s224, %s225
      %p237 = scmp.eq.s32.totalorder %s24, 3
      %p238 = por %p236, %p237
      %p240 = scmp.ne.s32.totalorder %s225, %s239
      %p241 = scmp.eq.s32.totalorder %s24, 0
      %p242 = por %p240, %p241
      %s244 = sadd.s32 %s243, 1
      %p247 = scmp.eq.s32.totalorder %s18, 3
      %p248 = scmp.ne.s32.totalorder %s243, %s245
      %p249 = scmp.eq.s32.totalorder %s18, 0
      %p250 = por %p248, %p249
      %p251 = scmp.ne.s32.totalorder %s243, %s245
      %p252 = scmp.eq.s32.totalorder %s23, 3
      %p253 = por %p251, %p252
      %p254 = scmp.ne.s32.totalorder %s245, %s246
      %p255 = scmp.eq.s32.totalorder %s23, 0
      %p256 = por %p254, %p255
      %p257 = scmp.ne.s32.totalorder %s245, %s246
      %p258 = scmp.eq.s32.totalorder %s24, 3
      %p259 = por %p257, %p258
      %p261 = scmp.ne.s32.totalorder %s246, %s260
      %p262 = scmp.eq.s32.totalorder %s24, 0
      %p263 = por %p261, %p262
      %s264 = ssub.s32 %s25, %s37
      %s265 = ssub.s32 %s26, %s33
      %s266 = sor.u32 %s264, %s265
      %p267 = scmp.eq.s32.totalorder %s266, 0
      %s269 = sadd.s32 %s268, 1
      %s270 = scalar_select %p267, %s268, %s269
      %p273 = pneg %p267
      %p274 = scmp.eq.s32.totalorder %s18, 3
      %p275 = por %p273, %p274
      %p276 = scmp.ne.s32.totalorder %s268, %s271
      %p277 = scmp.eq.s32.totalorder %s18, 0
      %p278 = por %p276, %p277
      %p279 = scmp.ne.s32.totalorder %s268, %s271
      %p280 = scmp.eq.s32.totalorder %s23, 3
      %p281 = por %p279, %p280
      %p282 = scmp.ne.s32.totalorder %s271, %s272
      %p283 = scmp.eq.s32.totalorder %s23, 0
      %p284 = por %p282, %p283
      %p285 = scmp.ne.s32.totalorder %s271, %s272
      %p286 = scmp.eq.s32.totalorder %s24, 3
      %p287 = por %p285, %p286
      %p289 = scmp.ne.s32.totalorder %s272, %s288
      %p290 = scmp.eq.s32.totalorder %s24, 0
      %p291 = por %p289, %p290
      %p292 = scmp.le.s32.totalorder 1, %s18
      %p293 = scmp.lt.s32.totalorder %s18, 5
      %p294 = pnand %p292, %p293
      %p295 = pneg %p294
      // Predicated region
      $region9: #{bottleneck_forward_nhwc.1} parent=5 // pred_check
        _
      $region10: #{bottleneck_forward_nhwc.1} parent=5 // pred_check_branch
        %297 = sbr.rel (%p294) target = $region12
      $region11: #{bottleneck_forward_nhwc.1} parent=5 // pred_region
        %s298 = ssub.s32 %s18, 1
        // Predicated region
        $region13: #{bottleneck_forward_nhwc.1} parent=11 // pred_check
          %p299 = pneg %p151
        $region14: #{bottleneck_forward_nhwc.1} parent=11 // pred_check_branch
          %301 = sbr.rel (%p299) target = $region16
        $region15: #{bottleneck_forward_nhwc.1} parent=11 // pred_region
          _
        $region16: #{bottleneck_forward_nhwc.1} parent=11 // pred_fallthru
          _
        // Predicated region
        $region17: #{bottleneck_forward_nhwc.1} parent=11 // pred_check
          %p302 = pneg %p172
        $region18: #{bottleneck_forward_nhwc.1} parent=11 // pred_check_branch
          %304 = sbr.rel (%p302) target = $region20
        $region19: #{bottleneck_forward_nhwc.1} parent=11 // pred_region
          _
        $region20: #{bottleneck_forward_nhwc.1} parent=11 // pred_fallthru
          _
        // Predicated region
        $region21: #{bottleneck_forward_nhwc.1} parent=11 // pred_check
          %p305 = pneg %p193
        $region22: #{bottleneck_forward_nhwc.1} parent=11 // pred_check_branch
          %307 = sbr.rel (%p305) target = $region24
        $region23: #{bottleneck_forward_nhwc.1} parent=11 // pred_region
          _
        $region24: #{bottleneck_forward_nhwc.1} parent=11 // pred_fallthru
          _
        // Predicated region
        $region25: #{bottleneck_forward_nhwc.1} parent=11 // pred_check
          %p308 = pneg %p214
        $region26: #{bottleneck_forward_nhwc.1} parent=11 // pred_check_branch
          %310 = sbr.rel (%p308) target = $region28
        $region27: #{bottleneck_forward_nhwc.1} parent=11 // pred_region
          _
        $region28: #{bottleneck_forward_nhwc.1} parent=11 // pred_fallthru
          _
        // Predicated region
        $region29: #{bottleneck_forward_nhwc.1} parent=11 // pred_check
          %p311 = pneg %p235
        $region30: #{bottleneck_forward_nhwc.1} parent=11 // pred_check_branch
          %313 = sbr.rel (%p311) target = $region32
        $region31: #{bottleneck_forward_nhwc.1} parent=11 // pred_region
          _
        $region32: #{bottleneck_forward_nhwc.1} parent=11 // pred_fallthru
          _
        // Predicated region
        $region33: #{bottleneck_forward_nhwc.1} parent=11 // pred_check
          %p314 = pneg %p256
        $region34: #{bottleneck_forward_nhwc.1} parent=11 // pred_check_branch
          %316 = sbr.rel (%p314) target = $region36
        $region35: #{bottleneck_forward_nhwc.1} parent=11 // pred_region
          _
        $region36: #{bottleneck_forward_nhwc.1} parent=11 // pred_fallthru
          _
      $region12: #{bottleneck_forward_nhwc.1} parent=5 // pred_fallthru
        _
      %p317 = scmp.lt.s32.totalorder %s18, 4
      // Predicated region
      $region37: #{bottleneck_forward_nhwc.1} parent=5 // pred_check
        %p318 = pneg %p317
      $region38: #{bottleneck_forward_nhwc.1} parent=5 // pred_check_branch
        %320 = sbr.rel (%p318) target = $region40
      $region39: #{bottleneck_forward_nhwc.1} parent=5 // pred_region
        // Predicated region
        $region41: #{bottleneck_forward_nhwc.1} parent=39 // pred_check
          %p321 = pneg %p52
        $region42: #{bottleneck_forward_nhwc.1} parent=39 // pred_check_branch
          %323 = sbr.rel (%p321) target = $region44
        $region43: #{bottleneck_forward_nhwc.1} parent=39 // pred_region
          %s324 = smul.u32 8, %s26
          %p325 = scmp.lt.s32.totalorder %s25, 1
          %s326 = scalar_select %p325, %s25, 1
          %p327 = scmp.lt.s32.totalorder %s324, 15
          %s328 = scalar_select %p327, %s324, 15
          %s329 = smul.addr %s328, 2
          %s330 = smul.addr %s326, 32
          %s331 = sadd.s32 %s329, %s330
          %s332 = smul.addr %s331, 4
          %s333 = scalar_lea.vmem %s0, %s332
          %s334 = smul.u32 8, %s26
        $region44: #{bottleneck_forward_nhwc.1} parent=39 // pred_fallthru
          _
        // Predicated region
        $region45: #{bottleneck_forward_nhwc.1} parent=39 // pred_check
          %p335 = pneg %p88
        $region46: #{bottleneck_forward_nhwc.1} parent=39 // pred_check_branch
          %337 = sbr.rel (%p335) target = $region48
        $region47: #{bottleneck_forward_nhwc.1} parent=39 // pred_region
          %s338 = smul.u32 %s26, 8
          %s339 = ssub.s32 %s338, 1
          %p340 = scmp.gt.s32.totalorder %s339, 0
          %s341 = scalar_select %p340, %s339, 0
          %p342 = scmp.lt.s32.totalorder %s25, 1
          %s343 = scalar_select %p342, %s25, 1
          %p344 = scmp.lt.s32.totalorder %s341, 15
          %s345 = scalar_select %p344, %s341, 15
          %s346 = smul.addr %s345, 2
          %s347 = smul.addr %s343, 32
          %s348 = sadd.s32 %s346, %s347
          %s349 = smul.addr %s348, 4
          %s350 = scalar_lea.vmem %s1, %s349
          %s351 = smul.u32 %s26, 8
          %s352 = ssub.s32 %s351, 1
          %p353 = scmp.gt.s32.totalorder %s352, 0
          %s354 = scalar_select %p353, %s352, 0
        $region48: #{bottleneck_forward_nhwc.1} parent=39 // pred_fallthru
          _
        // Predicated region
        $region49: #{bottleneck_forward_nhwc.1} parent=39 // pred_check
          %p355 = pneg %p124
        $region50: #{bottleneck_forward_nhwc.1} parent=39 // pred_check_branch
          %357 = sbr.rel (%p355) target = $region52
        $region51: #{bottleneck_forward_nhwc.1} parent=39 // pred_region
          %s358 = smul.u32 %s26, 8
          %s359 = sadd.s32 %s358, 8
          %p360 = scmp.lt.s32.totalorder %s359, 15
          %s361 = scalar_select %p360, %s359, 15
          %p362 = scmp.lt.s32.totalorder %s25, 1
          %s363 = scalar_select %p362, %s25, 1
          %p364 = scmp.lt.s32.totalorder %s361, 15
          %s365 = scalar_select %p364, %s361, 15
          %s366 = smul.addr %s365, 2
          %s367 = smul.addr %s363, 32
          %s368 = sadd.s32 %s366, %s367
          %s369 = smul.addr %s368, 4
          %s370 = scalar_lea.vmem %s2, %s369
          %s371 = smul.u32 %s26, 8
          %s372 = sadd.s32 %s371, 8
          %p373 = scmp.lt.s32.totalorder %s372, 15
          %s374 = scalar_select %p373, %s372, 15
        $region52: #{bottleneck_forward_nhwc.1} parent=39 // pred_fallthru
          _
      $region40: #{bottleneck_forward_nhwc.1} parent=5 // pred_fallthru
        _
      %p375 = scmp.le.s32.totalorder 1, %s18
      %p376 = scmp.lt.s32.totalorder %s18, 5
      %p377 = pnand %p375, %p376
      %p378 = pneg %p377
      // Predicated region
      $region53: #{bottleneck_forward_nhwc.1} parent=5 // pred_check
        _
      $region54: #{bottleneck_forward_nhwc.1} parent=5 // pred_check_branch
        %380 = sbr.rel (%p377) target = $region56
      $region55: #{bottleneck_forward_nhwc.1} parent=5 // pred_region
        %s381 = ssub.s32 %s18, 1
        %s382 = smul.u32 8, %s28
        %p383 = scmp.lt.s32.totalorder %s27, 1
        %s384 = scalar_select %p383, %s27, 1
        %p385 = scmp.lt.s32.totalorder %s382, 15
        %s386 = scalar_select %p385, %s382, 15
        %s387 = smul.addr %s386, 2
        %s388 = smul.addr %s384, 32
        %s389 = sadd.s32 %s387, %s388
        %s390 = smul.addr %s389, 4
        %s391 = scalar_lea.vmem %s0, %s390
        %p392 = pneg %p58
        %p393 = pneg %p55
        %s394 = smul.u32 %s28, 8
        %s395 = ssub.s32 %s394, 1
        %p396 = scmp.gt.s32.totalorder %s395, 0
        %s397 = scalar_select %p396, %s395, 0
        %p398 = scmp.lt.s32.totalorder %s27, 1
        %s399 = scalar_select %p398, %s27, 1
        %p400 = scmp.lt.s32.totalorder %s397, 15
        %s401 = scalar_select %p400, %s397, 15
        %s402 = smul.addr %s401, 2
        %s403 = smul.addr %s399, 32
        %s404 = sadd.s32 %s402, %s403
        %s405 = smul.addr %s404, 4
        %s406 = scalar_lea.vmem %s1, %s405
        %p407 = pneg %p94
        %p408 = pneg %p91
        %s409 = smul.u32 %s28, 8
        %s410 = sadd.s32 %s409, 8
        %p411 = scmp.lt.s32.totalorder %s410, 15
        %s412 = scalar_select %p411, %s410, 15
        %p413 = scmp.lt.s32.totalorder %s27, 1
        %s414 = scalar_select %p413, %s27, 1
        %p415 = scmp.lt.s32.totalorder %s412, 15
        %s416 = scalar_select %p415, %s412, 15
        %s417 = smul.addr %s416, 2
        %s418 = smul.addr %s414, 32
        %s419 = sadd.s32 %s417, %s418
        %s420 = smul.addr %s419, 4
        %s421 = scalar_lea.vmem %s2, %s420
        %p422 = pneg %p130
        %p423 = pneg %p127
        %p424 = pneg %p151
        %p425 = pneg %p148
        %p426 = pneg %p172
        %p427 = pneg %p169
        %p428 = pneg %p193
        %p429 = pneg %p190
        %p430 = pneg %p214
        %p431 = pneg %p211
        %p432 = pneg %p235
        %p433 = pneg %p232
        %p434 = pneg %p256
        %p435 = pneg %p253
        %p436 = pneg %p284
        %p437 = pneg %p281
        %s438 = sand.u32 %s271, 1
        %s439 = scalar_lea.sflag [#allocation4], %s438
        %s440 = sand.u32 %s271, 1
        %s441 = smul.addr %s440, 64
        %s442 = scalar_lea.vmem [#allocation3], %s441
        %s443 = smul.u32 8, %s28
        %p444 = scmp.lt.s32.totalorder %s27, 1
        %s445 = scalar_select %p444, %s27, 1
        %p446 = scmp.lt.s32.totalorder %s443, 15
        %s447 = scalar_select %p446, %s443, 15
        %s448 = smul.addr %s447, 2
        %s449 = smul.addr %s445, 32
        %s450 = sadd.s32 %s448, %s449
        %s451 = smul.addr %s450, 4
        %s452 = scalar_lea.vmem %s0, %s451
        %s453 = smul.u32 8, %s28
        %s454 = smul.u32 %s28, 8
        %s455 = ssub.s32 %s454, 1
        %p456 = scmp.gt.s32.totalorder %s455, 0
        %s457 = scalar_select %p456, %s455, 0
        %p458 = scmp.lt.s32.totalorder %s27, 1
        %s459 = scalar_select %p458, %s27, 1
        %p460 = scmp.lt.s32.totalorder %s457, 15
        %s461 = scalar_select %p460, %s457, 15
        %s462 = smul.addr %s461, 2
        %s463 = smul.addr %s459, 32
        %s464 = sadd.s32 %s462, %s463
        %s465 = smul.addr %s464, 4
        %s466 = scalar_lea.vmem %s1, %s465
        %s467 = smul.u32 %s28, 8
        %s468 = ssub.s32 %s467, 1
        %p469 = scmp.gt.s32.totalorder %s468, 0
        %s470 = scalar_select %p469, %s468, 0
        %s471 = smul.u32 %s28, 8
        %s472 = sadd.s32 %s471, 8
        %p473 = scmp.lt.s32.totalorder %s472, 15
        %s474 = scalar_select %p473, %s472, 15
        %p475 = scmp.lt.s32.totalorder %s27, 1
        %s476 = scalar_select %p475, %s27, 1
        %p477 = scmp.lt.s32.totalorder %s474, 15
        %s478 = scalar_select %p477, %s474, 15
        %s479 = smul.addr %s478, 2
        %s480 = smul.addr %s476, 32
        %s481 = sadd.s32 %s479, %s480
        %s482 = smul.addr %s481, 4
        %s483 = scalar_lea.vmem %s2, %s482
        %s484 = smul.u32 %s28, 8
        %s485 = sadd.s32 %s484, 8
        %p486 = scmp.lt.s32.totalorder %s485, 15
        %s487 = scalar_select %p486, %s485, 15
        %s488 = smul.u32 8, %s28
        %v490 = vld [vmem:[%s3] sm:$0xf]
        %v491 = vld [vmem:[%s3 + $0x4] sm:$0xf]
        %v492 = vld [vmem:[%s3 + $0x8] sm:$0xf]
        %v493 = vld [vmem:[%s3 + $0xc] sm:$0xf]
        %v494 = vld [vmem:[%s3 + $0x10] sm:$0xf]
        %v495 = vld [vmem:[%s3 + $0x14] sm:$0xf]
        %v496 = vld [vmem:[%s3 + $0x18] sm:$0xf]
        %v497 = vld [vmem:[%s3 + $0x1c] sm:$0xf]
        %v498 = vld [vmem:[%s3 + $0x20] sm:$0xf]
        %v499 = vld [vmem:[%s3 + $0x24] sm:$0xf]
        %v500 = vld [vmem:[%s3 + $0x28] sm:$0xf]
        %v501 = vld [vmem:[%s3 + $0x2c] sm:$0xf]
        %v502 = vld [vmem:[%s3 + $0x30] sm:$0xf]
        %v503 = vld [vmem:[%s3 + $0x34] sm:$0xf]
        %v504 = vld [vmem:[%s3 + $0x38] sm:$0xf]
        %v505 = vld [vmem:[%s3 + $0x3c] sm:$0xf]
        %v506 = vld [vmem:[%s6] sm:$0x1]
        %vm507 = vcmask 1040384
        %vm508 = vsmask.f32 256
        %vm509 = vmand %vm507, %vm508
        %v510 = vld [vmem:[#allocation2] sm:$0x1]
        %v511 = vsel %vm509, 0, %v510
        %512 = vst [vmem:[#allocation2] sm:$0x1] %v511
        %v513 = vld [vmem:[#allocation2 + $0xc] sm:$0x1]
        %v514 = vsel %vm509, 0, %v513
        %515 = vst [vmem:[#allocation2 + $0xc] sm:$0x1] %v514
        %v516 = vld [vmem:[#allocation2 + $0x18] sm:$0x1]
        %v517 = vsel %vm509, 0, %v516
        %518 = vst [vmem:[#allocation2 + $0x18] sm:$0x1] %v517
        %v519 = vld [vmem:[#allocation2 + $0x24] sm:$0x1]
        %v520 = vsel %vm509, 0, %v519
        %521 = vst [vmem:[#allocation2 + $0x24] sm:$0x1] %v520
        %v522 = vld [vmem:[#allocation2 + $0x30] sm:$0x1]
        %v523 = vsel %vm509, 0, %v522
        %524 = vst [vmem:[#allocation2 + $0x30] sm:$0x1] %v523
        %v525 = vld [vmem:[#allocation2 + $0x3c] sm:$0x1]
        %v526 = vsel %vm509, 0, %v525
        %527 = vst [vmem:[#allocation2 + $0x3c] sm:$0x1] %v526
        %v528 = vld [vmem:[#allocation2 + $0x48] sm:$0x1]
        %v529 = vsel %vm509, 0, %v528
        %530 = vst [vmem:[#allocation2 + $0x48] sm:$0x1] %v529
        %v531 = vld [vmem:[#allocation2 + $0x54] sm:$0x1]
        %v532 = vsel %vm509, 0, %v531
        %533 = vst [vmem:[#allocation2 + $0x54] sm:$0x1] %v532
        %v534 = vld [vmem:[#allocation2 + $0x60] sm:$0x1]
        %v535 = vsel %vm509, 0, %v534
        %536 = vst [vmem:[#allocation2 + $0x60] sm:$0x1] %v535
        %v537 = vld [vmem:[#allocation2 + $0x6c] sm:$0x1]
        %v538 = vsel %vm509, 0, %v537
        %539 = vst [vmem:[#allocation2 + $0x6c] sm:$0x1] %v538
        %vm540 = vsmask.f32 7938
        %vm541 = vmand %vm507, %vm540
        %v542 = vld [vmem:[#allocation2 + $0x8] sm:$0x1]
        %v543 = vsel %vm541, 0, %v542
        %544 = vst [vmem:[#allocation2 + $0x8] sm:$0x1] %v543
        %v545 = vld [vmem:[#allocation2 + $0x14] sm:$0x1]
        %v546 = vsel %vm541, 0, %v545
        %547 = vst [vmem:[#allocation2 + $0x14] sm:$0x1] %v546
        %v548 = vld [vmem:[#allocation2 + $0x20] sm:$0x1]
        %v549 = vsel %vm541, 0, %v548
        %550 = vst [vmem:[#allocation2 + $0x20] sm:$0x1] %v549
        %v551 = vld [vmem:[#allocation2 + $0x2c] sm:$0x1]
        %v552 = vsel %vm541, 0, %v551
        %553 = vst [vmem:[#allocation2 + $0x2c] sm:$0x1] %v552
        %v554 = vld [vmem:[#allocation2 + $0x38] sm:$0x1]
        %v555 = vsel %vm541, 0, %v554
        %556 = vst [vmem:[#allocation2 + $0x38] sm:$0x1] %v555
        %v557 = vld [vmem:[#allocation2 + $0x44] sm:$0x1]
        %v558 = vsel %vm541, 0, %v557
        %559 = vst [vmem:[#allocation2 + $0x44] sm:$0x1] %v558
        %v560 = vld [vmem:[#allocation2 + $0x50] sm:$0x1]
        %v561 = vsel %vm541, 0, %v560
        %562 = vst [vmem:[#allocation2 + $0x50] sm:$0x1] %v561
        %v563 = vld [vmem:[#allocation2 + $0x5c] sm:$0x1]
        %v564 = vsel %vm541, 0, %v563
        %565 = vst [vmem:[#allocation2 + $0x5c] sm:$0x1] %v564
        %v566 = vld [vmem:[#allocation2 + $0x68] sm:$0x1]
        %v567 = vsel %vm541, 0, %v566
        %568 = vst [vmem:[#allocation2 + $0x68] sm:$0x1] %v567
        %v569 = vld [vmem:[#allocation2 + $0x74] sm:$0x1]
        %v570 = vsel %vm541, 0, %v569
        %571 = vst [vmem:[#allocation2 + $0x74] sm:$0x1] %v570
        %p572 = scmp.eq.s32.totalorder %s28, 0
        // Predicated region
        $region57: #{bottleneck_forward_nhwc.1} parent=55 // pred_check
          %p573 = pneg %p572
        $region58: #{bottleneck_forward_nhwc.1} parent=55 // pred_check_branch
          %575 = sbr.rel (%p573) target = $region60
        $region59: #{bottleneck_forward_nhwc.1} parent=55 // pred_region
          %576 = vst [vmem:[#allocation2] sm:$0xf] 0
          %577 = vst [vmem:[#allocation2 + $0x4] sm:$0xf] 0
          %578 = vst [vmem:[#allocation2 + $0x8] sm:$0x1] 0
        $region60: #{bottleneck_forward_nhwc.1} parent=55 // pred_fallthru
          _
        %p579 = scmp.gt.s32.totalorder %s28, 0
        // Predicated region
        $region61: #{bottleneck_forward_nhwc.1} parent=55 // pred_check
          %p580 = pneg %p579
        $region62: #{bottleneck_forward_nhwc.1} parent=55 // pred_check_branch
          %582 = sbr.rel (%p580) target = $region64
        $region63: #{bottleneck_forward_nhwc.1} parent=55 // pred_region
          %v583 = vld [vmem:[%s466] sm:$0xf]
          %v584 = vld [vmem:[%s466 + $0x4] sm:$0xf]
          %v586 = vlaneseq
          %v587 = vshrl.u32 %v586, 7
          %v588 = vsub.s32 0, %v587
          %v589 = vrot.slane %v506, %v588
          %v593 = vunpack.c.l.b16 %v583
          %v594 = vunpack.c.l.b16 %v584
          %v595 = vpack.c.b16 %v594, %v593
          %v613 = vunpack.c.l.b16 %v490
          %v614 = vunpack.c.l.b16 %v491
          %v615 = vunpack.c.l.b16 %v492
          %v616 = vunpack.c.l.b16 %v493
          %v617 = vunpack.c.l.b16 %v494
          %v618 = vunpack.c.l.b16 %v495
          %v619 = vunpack.c.l.b16 %v496
          %v620 = vunpack.c.l.b16 %v497
          %v621 = vunpack.c.l.b16 %v498
          %v622 = vunpack.c.l.b16 %v499
          %v623 = vunpack.c.l.b16 %v500
          %v624 = vunpack.c.l.b16 %v501
          %v625 = vunpack.c.l.b16 %v502
          %v626 = vunpack.c.l.b16 %v503
          %v627 = vunpack.c.l.b16 %v504
          %v628 = vunpack.c.l.b16 %v505
          %v629 = vpack.c.b16 %v614, %v613
          %v630 = vpack.c.b16 %v616, %v615
          %v631 = vpack.c.b16 %v618, %v617
          %v632 = vpack.c.b16 %v620, %v619
          %v633 = vpack.c.b16 %v622, %v621
          %v634 = vpack.c.b16 %v624, %v623
          %v635 = vpack.c.b16 %v626, %v625
          %v636 = vpack.c.b16 %v628, %v627
          %645 = vmatprep.subr.bf16.mxu0 0
          %646 = vmatpush1.bf16.msra.mxu0 %v636
          %647 = vmatprep.subr.bf16.mxu0 0
          %648 = vmatpush1.bf16.msra.mxu0 %v635
          %649 = vmatprep.subr.bf16.mxu0 0
          %650 = vmatpush1.bf16.msra.mxu0 %v634
          %651 = vmatprep.subr.bf16.mxu0 0
          %652 = vmatpush1.bf16.msra.mxu0 %v633
          %653 = vmatprep.subr.bf16.mxu0 0
          %654 = vmatpush1.bf16.msra.mxu0 %v632
          %655 = vmatprep.subr.bf16.mxu0 0
          %656 = vmatpush1.bf16.msra.mxu0 %v631
          %657 = vmatprep.subr.bf16.mxu0 0
          %658 = vmatpush1.bf16.msra.mxu0 %v630
          %659 = vmatprep.subr.bf16.mxu0 0
          %660 = vmatpush1.bf16.msra.mxu0 %v629
          %661 = vmatprep.subr.bf16.mxu0 0
          %662 = vmatpush2.bf16.msra.mxu0 0
          %663 = vmatprep.subr.bf16.mxu0 0
          %664 = vmatpush2.bf16.msra.mxu0 0
          %665 = vmatprep.subr.bf16.mxu0 0
          %666 = vmatpush2.bf16.msra.mxu0 0
          %667 = vmatprep.subr.bf16.mxu0 0
          %668 = vmatpush2.bf16.msra.mxu0 0
          %669 = vmatprep.subr.bf16.mxu0 0
          %670 = vmatpush2.bf16.msra.mxu0 0
          %671 = vmatprep.subr.bf16.mxu0 0
          %672 = vmatpush2.bf16.msra.mxu0 0
          %673 = vmatprep.subr.bf16.mxu0 0
          %674 = vmatpush2.bf16.msra.mxu0 0
          %675 = vmatprep.subr.bf16.mxu0 0
          %676 = vmatpush2.bf16.msra.mxu0 0
          %677 = vmatprep.mubr.bf16.mxu0 0
          %678 = vmatmul.mubr.bf16.gmra.mxu0 %v595
          %v679 = vpop.f32.mrf.mxu0
          %v680 = vadd.f32 %v589, %v679
          %v681 = vpop.f32.mrf.mxu0
          %v682 = vpop.f32.mrf.mxu0
          %v683 = vadd.f32 %v589, %v682
          %v684 = vpop.f32.mrf.mxu0
          %685 = vdwg.mxu0
          %v686 = vmax.f32 %v680, 0.0
          %v687 = vmax.f32 %v683, 0.0
          %v688 = vpack.c.bf16 %v687, %v686
          %v690 = vunpack.c.l.b16 %v688
          %v691 = vunpack.c.h.b16 %v688
          %v692 = vpack.c.b16 %v690, %v690
          %v693 = vpack.c.b16 %v691, %v691
          %vm694 = vsmask.f32 4368
          %vm695 = vmor %vm508, %vm694
          %v697 = vshrl.u32 %v692, 16
          %v699 = vrot.slane %v697, 7
          %v700 = vshll.u32 %v692, 16
          %v702 = vor.u32 %v699, %v700
          %v703 = vrot.slane %v699, 4
          %v705 = vshrl.u32 %v693, 16
          %v707 = vrot.slane %v705, 7
          %v708 = vshll.u32 %v693, 16
          %v710 = vor.u32 %v707, %v708
          %v711 = vsel %vm695, %v703, %v710
          %v712 = vrot.slane %v707, 4
          %vm716 = vcmask 1043456
          %vm717 = vmand %vm716, %vm540
          %v718 = vld [vmem:[#allocation2] sm:$0xf]
          %v719 = vsel %vm717, %v702, %v718
          %720 = vst [vmem:[#allocation2] sm:$0xf] %v719
          %721 = vst [vmem:[#allocation2 + $0x4] sm:$0xf] %v711
          %v722 = vld [vmem:[#allocation2 + $0x8] sm:$0x1]
          %v723 = vsel %vm509, %v712, %v722
          %724 = vst [vmem:[#allocation2 + $0x8] sm:$0x1] %v723
        $region64: #{bottleneck_forward_nhwc.1} parent=55 // pred_fallthru
          _
        %p725 = scmp.eq.s32.totalorder %s28, 1
        // Predicated region
        $region65: #{bottleneck_forward_nhwc.1} parent=55 // pred_check
          %p726 = pneg %p725
        $region66: #{bottleneck_forward_nhwc.1} parent=55 // pred_check_branch
          %728 = sbr.rel (%p726) target = $region68
        $region67: #{bottleneck_forward_nhwc.1} parent=55 // pred_region
          %s729 = scalar_lea.vmem [#allocation2], 108
          %730 = vst [vmem:[%s729] sm:$0xf] 0
          %731 = vst [vmem:[%s729 + $0x4] sm:$0xf] 0
          %732 = vst [vmem:[%s729 + $0x8] sm:$0x1] 0
        $region68: #{bottleneck_forward_nhwc.1} parent=55 // pred_fallthru
          _
        %p733 = scmp.lt.s32.totalorder %s28, 1
        // Predicated region
        $region69: #{bottleneck_forward_nhwc.1} parent=55 // pred_check
          %p734 = pneg %p733
        $region70: #{bottleneck_forward_nhwc.1} parent=55 // pred_check_branch
          %736 = sbr.rel (%p734) target = $region72
        $region71: #{bottleneck_forward_nhwc.1} parent=55 // pred_region
          %v737 = vld [vmem:[%s483] sm:$0xf]
          %v738 = vld [vmem:[%s483 + $0x4] sm:$0xf]
          %v740 = vlaneseq
          %v741 = vshrl.u32 %v740, 7
          %v742 = vsub.s32 0, %v741
          %v743 = vrot.slane %v506, %v742
          %v747 = vunpack.c.l.b16 %v737
          %v748 = vunpack.c.l.b16 %v738
          %v749 = vpack.c.b16 %v748, %v747
          %v767 = vunpack.c.l.b16 %v490
          %v768 = vunpack.c.l.b16 %v491
          %v769 = vunpack.c.l.b16 %v492
          %v770 = vunpack.c.l.b16 %v493
          %v771 = vunpack.c.l.b16 %v494
          %v772 = vunpack.c.l.b16 %v495
          %v773 = vunpack.c.l.b16 %v496
          %v774 = vunpack.c.l.b16 %v497
          %v775 = vunpack.c.l.b16 %v498
          %v776 = vunpack.c.l.b16 %v499
          %v777 = vunpack.c.l.b16 %v500
          %v778 = vunpack.c.l.b16 %v501
          %v779 = vunpack.c.l.b16 %v502
          %v780 = vunpack.c.l.b16 %v503
          %v781 = vunpack.c.l.b16 %v504
          %v782 = vunpack.c.l.b16 %v505
          %v783 = vpack.c.b16 %v768, %v767
          %v784 = vpack.c.b16 %v770, %v769
          %v785 = vpack.c.b16 %v772, %v771
          %v786 = vpack.c.b16 %v774, %v773
          %v787 = vpack.c.b16 %v776, %v775
          %v788 = vpack.c.b16 %v778, %v777
          %v789 = vpack.c.b16 %v780, %v779
          %v790 = vpack.c.b16 %v782, %v781
          %799 = vmatprep.subr.bf16.mxu0 0
          %800 = vmatpush1.bf16.msra.mxu0 %v790
          %801 = vmatprep.subr.bf16.mxu0 0
          %802 = vmatpush1.bf16.msra.mxu0 %v789
          %803 = vmatprep.subr.bf16.mxu0 0
          %804 = vmatpush1.bf16.msra.mxu0 %v788
          %805 = vmatprep.subr.bf16.mxu0 0
          %806 = vmatpush1.bf16.msra.mxu0 %v787
          %807 = vmatprep.subr.bf16.mxu0 0
          %808 = vmatpush1.bf16.msra.mxu0 %v786
          %809 = vmatprep.subr.bf16.mxu0 0
          %810 = vmatpush1.bf16.msra.mxu0 %v785
          %811 = vmatprep.subr.bf16.mxu0 0
          %812 = vmatpush1.bf16.msra.mxu0 %v784
          %813 = vmatprep.subr.bf16.mxu0 0
          %814 = vmatpush1.bf16.msra.mxu0 %v783
          %815 = vmatprep.subr.bf16.mxu0 0
          %816 = vmatpush2.bf16.msra.mxu0 0
          %817 = vmatprep.subr.bf16.mxu0 0
          %818 = vmatpush2.bf16.msra.mxu0 0
          %819 = vmatprep.subr.bf16.mxu0 0
          %820 = vmatpush2.bf16.msra.mxu0 0
          %821 = vmatprep.subr.bf16.mxu0 0
          %822 = vmatpush2.bf16.msra.mxu0 0
          %823 = vmatprep.subr.bf16.mxu0 0
          %824 = vmatpush2.bf16.msra.mxu0 0
          %825 = vmatprep.subr.bf16.mxu0 0
          %826 = vmatpush2.bf16.msra.mxu0 0
          %827 = vmatprep.subr.bf16.mxu0 0
          %828 = vmatpush2.bf16.msra.mxu0 0
          %829 = vmatprep.subr.bf16.mxu0 0
          %830 = vmatpush2.bf16.msra.mxu0 0
          %831 = vmatprep.mubr.bf16.mxu0 0
          %832 = vmatmul.mubr.bf16.gmra.mxu0 %v749
          %v833 = vpop.f32.mrf.mxu0
          %v834 = vadd.f32 %v743, %v833
          %v835 = vpop.f32.mrf.mxu0
          %v836 = vpop.f32.mrf.mxu0
          %v837 = vadd.f32 %v743, %v836
          %v838 = vpop.f32.mrf.mxu0
          %839 = vdwg.mxu0
          %v840 = vmax.f32 %v834, 0.0
          %v841 = vmax.f32 %v837, 0.0
          %v842 = vpack.c.bf16 %v841, %v840
          %v844 = vunpack.c.l.b16 %v842
          %v845 = vunpack.c.h.b16 %v842
          %v846 = vpack.c.b16 %v844, %v844
          %v847 = vpack.c.b16 %v845, %v845
          %vm848 = vsmask.f32 4368
          %vm849 = vmor %vm508, %vm848
          %v851 = vshrl.u32 %v846, 16
          %v853 = vrot.slane %v851, 7
          %v854 = vshll.u32 %v846, 16
          %v856 = vor.u32 %v853, %v854
          %v857 = vrot.slane %v853, 4
          %v859 = vshrl.u32 %v847, 16
          %v861 = vrot.slane %v859, 7
          %v862 = vshll.u32 %v847, 16
          %v864 = vor.u32 %v861, %v862
          %v865 = vsel %vm849, %v857, %v864
          %v866 = vrot.slane %v861, 4
          %s870 = scalar_lea.vmem [#allocation2], 108
          %vm871 = vcmask 1043456
          %vm872 = vmand %vm871, %vm540
          %v873 = vld [vmem:[%s870] sm:$0xf]
          %v874 = vsel %vm872, %v856, %v873
          %875 = vst [vmem:[%s870] sm:$0xf] %v874
          %876 = vst [vmem:[%s870 + $0x4] sm:$0xf] %v865
          %v877 = vld [vmem:[%s870 + $0x8] sm:$0x1]
          %v878 = vsel %vm509, %v866, %v877
          %879 = vst [vmem:[%s870 + $0x8] sm:$0x1] %v878
        $region72: #{bottleneck_forward_nhwc.1} parent=55 // pred_fallthru
          _
        %v880 = vld [vmem:[%s452] sm:$0xf]
        %v881 = vld [vmem:[%s452 + $0x4] sm:$0xf]
        %v882 = vld [vmem:[%s452 + $0x8] sm:$0xf]
        %v883 = vld [vmem:[%s452 + $0xc] sm:$0xf]
        %v884 = vld [vmem:[%s452 + $0x10] sm:$0xf]
        %v885 = vld [vmem:[%s452 + $0x14] sm:$0xf]
        %v886 = vld [vmem:[%s452 + $0x18] sm:$0xf]
        %v887 = vld [vmem:[%s452 + $0x1c] sm:$0xf]
        %v888 = vld [vmem:[%s452 + $0x20] sm:$0xf]
        %v889 = vld [vmem:[%s452 + $0x24] sm:$0xf]
        %v890 = vld [vmem:[%s452 + $0x28] sm:$0xf]
        %v891 = vld [vmem:[%s452 + $0x2c] sm:$0xf]
        %v892 = vld [vmem:[%s452 + $0x30] sm:$0xf]
        %v893 = vld [vmem:[%s452 + $0x34] sm:$0xf]
        %v894 = vld [vmem:[%s452 + $0x38] sm:$0xf]
        %v895 = vld [vmem:[%s452 + $0x3c] sm:$0xf]
        %v897 = vlaneseq
        %v898 = vshrl.u32 %v897, 7
        %v899 = vsub.s32 0, %v898
        %v900 = vrot.slane %v506, %v899
        %v918 = vunpack.c.l.b16 %v880
        %v919 = vunpack.c.l.b16 %v881
        %v920 = vunpack.c.l.b16 %v882
        %v921 = vunpack.c.l.b16 %v883
        %v922 = vunpack.c.l.b16 %v884
        %v923 = vunpack.c.l.b16 %v885
        %v924 = vunpack.c.l.b16 %v886
        %v925 = vunpack.c.l.b16 %v887
        %v926 = vunpack.c.l.b16 %v888
        %v927 = vunpack.c.l.b16 %v889
        %v928 = vunpack.c.l.b16 %v890
        %v929 = vunpack.c.l.b16 %v891
        %v930 = vunpack.c.l.b16 %v892
        %v931 = vunpack.c.l.b16 %v893
        %v932 = vunpack.c.l.b16 %v894
        %v933 = vunpack.c.l.b16 %v895
        %v934 = vpack.c.b16 %v919, %v918
        %v935 = vpack.c.b16 %v921, %v920
        %v936 = vpack.c.b16 %v923, %v922
        %v937 = vpack.c.b16 %v925, %v924
        %v938 = vpack.c.b16 %v927, %v926
        %v939 = vpack.c.b16 %v929, %v928
        %v940 = vpack.c.b16 %v931, %v930
        %v941 = vpack.c.b16 %v933, %v932
        %v966 = vunpack.c.l.b16 %v490
        %v967 = vunpack.c.l.b16 %v491
        %v968 = vunpack.c.l.b16 %v492
        %v969 = vunpack.c.l.b16 %v493
        %v970 = vunpack.c.l.b16 %v494
        %v971 = vunpack.c.l.b16 %v495
        %v972 = vunpack.c.l.b16 %v496
        %v973 = vunpack.c.l.b16 %v497
        %v974 = vunpack.c.l.b16 %v498
        %v975 = vunpack.c.l.b16 %v499
        %v976 = vunpack.c.l.b16 %v500
        %v977 = vunpack.c.l.b16 %v501
        %v978 = vunpack.c.l.b16 %v502
        %v979 = vunpack.c.l.b16 %v503
        %v980 = vunpack.c.l.b16 %v504
        %v981 = vunpack.c.l.b16 %v505
        %v982 = vpack.c.b16 %v967, %v966
        %v983 = vpack.c.b16 %v969, %v968
        %v984 = vpack.c.b16 %v971, %v970
        %v985 = vpack.c.b16 %v973, %v972
        %v986 = vpack.c.b16 %v975, %v974
        %v987 = vpack.c.b16 %v977, %v976
        %v988 = vpack.c.b16 %v979, %v978
        %v989 = vpack.c.b16 %v981, %v980
        %998 = vmatprep.subr.bf16.mxu0 0
        %999 = vmatpush1.bf16.msra.mxu0 %v989
        %1000 = vmatprep.subr.bf16.mxu0 0
        %1001 = vmatpush1.bf16.msra.mxu0 %v988
        %1002 = vmatprep.subr.bf16.mxu0 0
        %1003 = vmatpush1.bf16.msra.mxu0 %v987
        %1004 = vmatprep.subr.bf16.mxu0 0
        %1005 = vmatpush1.bf16.msra.mxu0 %v986
        %1006 = vmatprep.subr.bf16.mxu0 0
        %1007 = vmatpush1.bf16.msra.mxu0 %v985
        %1008 = vmatprep.subr.bf16.mxu0 0
        %1009 = vmatpush1.bf16.msra.mxu0 %v984
        %1010 = vmatprep.subr.bf16.mxu0 0
        %1011 = vmatpush1.bf16.msra.mxu0 %v983
        %1012 = vmatprep.subr.bf16.mxu0 0
        %1013 = vmatpush1.bf16.msra.mxu0 %v982
        %1014 = vmatprep.subr.bf16.mxu0 0
        %1015 = vmatpush2.bf16.msra.mxu0 0
        %1016 = vmatprep.subr.bf16.mxu0 0
        %1017 = vmatpush2.bf16.msra.mxu0 0
        %1018 = vmatprep.subr.bf16.mxu0 0
        %1019 = vmatpush2.bf16.msra.mxu0 0
        %1020 = vmatprep.subr.bf16.mxu0 0
        %1021 = vmatpush2.bf16.msra.mxu0 0
        %1022 = vmatprep.subr.bf16.mxu0 0
        %1023 = vmatpush2.bf16.msra.mxu0 0
        %1024 = vmatprep.subr.bf16.mxu0 0
        %1025 = vmatpush2.bf16.msra.mxu0 0
        %1026 = vmatprep.subr.bf16.mxu0 0
        %1027 = vmatpush2.bf16.msra.mxu0 0
        %1028 = vmatprep.subr.bf16.mxu0 0
        %1029 = vmatpush2.bf16.msra.mxu0 0
        %1030 = vmatprep.mubr.bf16.mxu0 0
        %1031 = vmatmul.mubr.bf16.gmra.mxu0 %v934
        %v1032 = vpop.f32.mrf.mxu0
        %v1033 = vadd.f32 %v900, %v1032
        %v1034 = vpop.f32.mrf.mxu0
        %v1035 = vpop.f32.mrf.mxu0
        %v1036 = vadd.f32 %v900, %v1035
        %v1037 = vpop.f32.mrf.mxu0
        %1038 = vmatprep.mubr.bf16.mxu0 0
        %1039 = vmatmul.mubr.bf16.gmra.mxu0 %v935
        %v1040 = vpop.f32.mrf.mxu0
        %v1041 = vadd.f32 %v900, %v1040
        %v1042 = vpop.f32.mrf.mxu0
        %v1043 = vpop.f32.mrf.mxu0
        %v1044 = vadd.f32 %v900, %v1043
        %v1045 = vpop.f32.mrf.mxu0
        %1046 = vmatprep.mubr.bf16.mxu0 0
        %1047 = vmatmul.mubr.bf16.gmra.mxu0 %v936
        %v1048 = vpop.f32.mrf.mxu0
        %v1049 = vadd.f32 %v900, %v1048
        %v1050 = vpop.f32.mrf.mxu0
        %v1051 = vpop.f32.mrf.mxu0
        %v1052 = vadd.f32 %v900, %v1051
        %v1053 = vpop.f32.mrf.mxu0
        %1054 = vmatprep.mubr.bf16.mxu0 0
        %1055 = vmatmul.mubr.bf16.gmra.mxu0 %v937
        %v1056 = vpop.f32.mrf.mxu0
        %v1057 = vadd.f32 %v900, %v1056
        %v1058 = vpop.f32.mrf.mxu0
        %v1059 = vpop.f32.mrf.mxu0
        %v1060 = vadd.f32 %v900, %v1059
        %v1061 = vpop.f32.mrf.mxu0
        %1062 = vmatprep.mubr.bf16.mxu0 0
        %1063 = vmatmul.mubr.bf16.gmra.mxu0 %v938
        %v1064 = vpop.f32.mrf.mxu0
        %v1065 = vadd.f32 %v900, %v1064
        %v1066 = vpop.f32.mrf.mxu0
        %v1067 = vpop.f32.mrf.mxu0
        %v1068 = vadd.f32 %v900, %v1067
        %v1069 = vpop.f32.mrf.mxu0
        %1070 = vmatprep.mubr.bf16.mxu0 0
        %1071 = vmatmul.mubr.bf16.gmra.mxu0 %v939
        %v1072 = vpop.f32.mrf.mxu0
        %v1073 = vadd.f32 %v900, %v1072
        %v1074 = vpop.f32.mrf.mxu0
        %v1075 = vpop.f32.mrf.mxu0
        %v1076 = vadd.f32 %v900, %v1075
        %v1077 = vpop.f32.mrf.mxu0
        %1078 = vmatprep.mubr.bf16.mxu0 0
        %1079 = vmatmul.mubr.bf16.gmra.mxu0 %v940
        %v1080 = vpop.f32.mrf.mxu0
        %v1081 = vadd.f32 %v900, %v1080
        %v1082 = vpop.f32.mrf.mxu0
        %v1083 = vpop.f32.mrf.mxu0
        %v1084 = vadd.f32 %v900, %v1083
        %v1085 = vpop.f32.mrf.mxu0
        %1086 = vmatprep.mubr.bf16.mxu0 0
        %1087 = vmatmul.mubr.bf16.gmra.mxu0 %v941
        %v1088 = vpop.f32.mrf.mxu0
        %v1089 = vadd.f32 %v900, %v1088
        %v1090 = vpop.f32.mrf.mxu0
        %v1091 = vpop.f32.mrf.mxu0
        %v1092 = vadd.f32 %v900, %v1091
        %v1093 = vpop.f32.mrf.mxu0
        %1094 = vdwg.mxu0
        %v1095 = vmax.f32 %v1033, 0.0
        %v1096 = vmax.f32 %v1036, 0.0
        %v1097 = vmax.f32 %v1041, 0.0
        %v1098 = vmax.f32 %v1044, 0.0
        %v1099 = vmax.f32 %v1049, 0.0
        %v1100 = vmax.f32 %v1052, 0.0
        %v1101 = vmax.f32 %v1057, 0.0
        %v1102 = vmax.f32 %v1060, 0.0
        %v1103 = vmax.f32 %v1065, 0.0
        %v1104 = vmax.f32 %v1068, 0.0
        %v1105 = vmax.f32 %v1073, 0.0
        %v1106 = vmax.f32 %v1076, 0.0
        %v1107 = vmax.f32 %v1081, 0.0
        %v1108 = vmax.f32 %v1084, 0.0
        %v1109 = vmax.f32 %v1089, 0.0
        %v1110 = vmax.f32 %v1092, 0.0
        %v1111 = vpack.c.bf16 %v1096, %v1095
        %v1112 = vpack.c.bf16 %v1098, %v1097
        %v1113 = vpack.c.bf16 %v1100, %v1099
        %v1114 = vpack.c.bf16 %v1102, %v1101
        %v1115 = vpack.c.bf16 %v1104, %v1103
        %v1116 = vpack.c.bf16 %v1106, %v1105
        %v1117 = vpack.c.bf16 %v1108, %v1107
        %v1118 = vpack.c.bf16 %v1110, %v1109
        %v1127 = vunpack.c.l.b16 %v1111
        %v1128 = vunpack.c.h.b16 %v1111
        %v1129 = vunpack.c.l.b16 %v1112
        %v1130 = vunpack.c.h.b16 %v1112
        %v1131 = vunpack.c.l.b16 %v1113
        %v1132 = vunpack.c.h.b16 %v1113
        %v1133 = vunpack.c.l.b16 %v1114
        %v1134 = vunpack.c.h.b16 %v1114
        %v1135 = vunpack.c.l.b16 %v1115
        %v1136 = vunpack.c.h.b16 %v1115
        %v1137 = vunpack.c.l.b16 %v1116
        %v1138 = vunpack.c.h.b16 %v1116
        %v1139 = vunpack.c.l.b16 %v1117
        %v1140 = vunpack.c.h.b16 %v1117
        %v1141 = vunpack.c.l.b16 %v1118
        %v1142 = vunpack.c.h.b16 %v1118
        %v1143 = vpack.c.b16 %v1127, %v1127
        %v1144 = vpack.c.b16 %v1128, %v1128
        %v1145 = vpack.c.b16 %v1129, %v1129
        %v1146 = vpack.c.b16 %v1130, %v1130
        %v1147 = vpack.c.b16 %v1131, %v1131
        %v1148 = vpack.c.b16 %v1132, %v1132
        %v1149 = vpack.c.b16 %v1133, %v1133
        %v1150 = vpack.c.b16 %v1134, %v1134
        %v1151 = vpack.c.b16 %v1135, %v1135
        %v1152 = vpack.c.b16 %v1136, %v1136
        %v1153 = vpack.c.b16 %v1137, %v1137
        %v1154 = vpack.c.b16 %v1138, %v1138
        %v1155 = vpack.c.b16 %v1139, %v1139
        %v1156 = vpack.c.b16 %v1140, %v1140
        %v1157 = vpack.c.b16 %v1141, %v1141
        %v1158 = vpack.c.b16 %v1142, %v1142
        %vm1159 = vsmask.f32 4368
        %vm1160 = vmor %vm508, %vm1159
        %v1162 = vshrl.u32 %v1143, 16
        %v1164 = vrot.slane %v1162, 7
        %v1165 = vshll.u32 %v1143, 16
        %v1167 = vor.u32 %v1164, %v1165
        %v1168 = vrot.slane %v1164, 4
        %v1170 = vshrl.u32 %v1144, 16
        %v1172 = vrot.slane %v1170, 7
        %v1173 = vshll.u32 %v1144, 16
        %v1175 = vor.u32 %v1172, %v1173
        %v1176 = vsel %vm1160, %v1168, %v1175
        %v1177 = vrot.slane %v1172, 4
        %v1179 = vshrl.u32 %v1145, 16
        %v1181 = vrot.slane %v1179, 7
        %v1182 = vshll.u32 %v1145, 16
        %v1184 = vor.u32 %v1181, %v1182
        %v1185 = vrot.slane %v1181, 4
        %v1187 = vshrl.u32 %v1146, 16
        %v1189 = vrot.slane %v1187, 7
        %v1190 = vshll.u32 %v1146, 16
        %v1192 = vor.u32 %v1189, %v1190
        %v1193 = vsel %vm1160, %v1185, %v1192
        %v1194 = vrot.slane %v1189, 4
        %v1196 = vshrl.u32 %v1147, 16
        %v1198 = vrot.slane %v1196, 7
        %v1199 = vshll.u32 %v1147, 16
        %v1201 = vor.u32 %v1198, %v1199
        %v1202 = vrot.slane %v1198, 4
        %v1204 = vshrl.u32 %v1148, 16
        %v1206 = vrot.slane %v1204, 7
        %v1207 = vshll.u32 %v1148, 16
        %v1209 = vor.u32 %v1206, %v1207
        %v1210 = vsel %vm1160, %v1202, %v1209
        %v1211 = vrot.slane %v1206, 4
        %v1213 = vshrl.u32 %v1149, 16
        %v1215 = vrot.slane %v1213, 7
        %v1216 = vshll.u32 %v1149, 16
        %v1218 = vor.u32 %v1215, %v1216
        %v1219 = vrot.slane %v1215, 4
        %v1221 = vshrl.u32 %v1150, 16
        %v1223 = vrot.slane %v1221, 7
        %v1224 = vshll.u32 %v1150, 16
        %v1226 = vor.u32 %v1223, %v1224
        %v1227 = vsel %vm1160, %v1219, %v1226
        %v1228 = vrot.slane %v1223, 4
        %v1230 = vshrl.u32 %v1151, 16
        %v1232 = vrot.slane %v1230, 7
        %v1233 = vshll.u32 %v1151, 16
        %v1235 = vor.u32 %v1232, %v1233
        %v1236 = vrot.slane %v1232, 4
        %v1238 = vshrl.u32 %v1152, 16
        %v1240 = vrot.slane %v1238, 7
        %v1241 = vshll.u32 %v1152, 16
        %v1243 = vor.u32 %v1240, %v1241
        %v1244 = vsel %vm1160, %v1236, %v1243
        %v1245 = vrot.slane %v1240, 4
        %v1247 = vshrl.u32 %v1153, 16
        %v1249 = vrot.slane %v1247, 7
        %v1250 = vshll.u32 %v1153, 16
        %v1252 = vor.u32 %v1249, %v1250
        %v1253 = vrot.slane %v1249, 4
        %v1255 = vshrl.u32 %v1154, 16
        %v1257 = vrot.slane %v1255, 7
        %v1258 = vshll.u32 %v1154, 16
        %v1260 = vor.u32 %v1257, %v1258
        %v1261 = vsel %vm1160, %v1253, %v1260
        %v1262 = vrot.slane %v1257, 4
        %v1264 = vshrl.u32 %v1155, 16
        %v1266 = vrot.slane %v1264, 7
        %v1267 = vshll.u32 %v1155, 16
        %v1269 = vor.u32 %v1266, %v1267
        %v1270 = vrot.slane %v1266, 4
        %v1272 = vshrl.u32 %v1156, 16
        %v1274 = vrot.slane %v1272, 7
        %v1275 = vshll.u32 %v1156, 16
        %v1277 = vor.u32 %v1274, %v1275
        %v1278 = vsel %vm1160, %v1270, %v1277
        %v1279 = vrot.slane %v1274, 4
        %v1281 = vshrl.u32 %v1157, 16
        %v1283 = vrot.slane %v1281, 7
        %v1284 = vshll.u32 %v1157, 16
        %v1286 = vor.u32 %v1283, %v1284
        %v1287 = vrot.slane %v1283, 4
        %v1289 = vshrl.u32 %v1158, 16
        %v1291 = vrot.slane %v1289, 7
        %v1292 = vshll.u32 %v1158, 16
        %v1294 = vor.u32 %v1291, %v1292
        %v1295 = vsel %vm1160, %v1287, %v1294
        %v1296 = vrot.slane %v1291, 4
        %s1321 = scalar_lea.vmem [#allocation2], 12
        %vm1322 = vcmask 1043456
        %vm1323 = vmand %vm1322, %vm540
        %v1324 = vld [vmem:[%s1321] sm:$0xf]
        %v1325 = vsel %vm1323, %v1167, %v1324
        %1326 = vst [vmem:[%s1321] sm:$0xf] %v1325
        %1327 = vst [vmem:[%s1321 + $0x4] sm:$0xf] %v1176
        %v1328 = vld [vmem:[%s1321 + $0x8] sm:$0x1]
        %v1329 = vsel %vm509, %v1177, %v1328
        %1330 = vst [vmem:[%s1321 + $0x8] sm:$0x1] %v1329
        %v1331 = vld [vmem:[%s1321 + $0xc] sm:$0xf]
        %v1332 = vsel %vm1323, %v1184, %v1331
        %1333 = vst [vmem:[%s1321 + $0xc] sm:$0xf] %v1332
        %1334 = vst [vmem:[%s1321 + $0x10] sm:$0xf] %v1193
        %v1335 = vld [vmem:[%s1321 + $0x14] sm:$0x1]
        %v1336 = vsel %vm509, %v1194, %v1335
        %1337 = vst [vmem:[%s1321 + $0x14] sm:$0x1] %v1336
        %v1338 = vld [vmem:[%s1321 + $0x18] sm:$0xf]
        %v1339 = vsel %vm1323, %v1201, %v1338
        %1340 = vst [vmem:[%s1321 + $0x18] sm:$0xf] %v1339
        %1341 = vst [vmem:[%s1321 + $0x1c] sm:$0xf] %v1210
        %v1342 = vld [vmem:[%s1321 + $0x20] sm:$0x1]
        %v1343 = vsel %vm509, %v1211, %v1342
        %1344 = vst [vmem:[%s1321 + $0x20] sm:$0x1] %v1343
        %v1345 = vld [vmem:[%s1321 + $0x24] sm:$0xf]
        %v1346 = vsel %vm1323, %v1218, %v1345
        %1347 = vst [vmem:[%s1321 + $0x24] sm:$0xf] %v1346
        %1348 = vst [vmem:[%s1321 + $0x28] sm:$0xf] %v1227
        %v1349 = vld [vmem:[%s1321 + $0x2c] sm:$0x1]
        %v1350 = vsel %vm509, %v1228, %v1349
        %1351 = vst [vmem:[%s1321 + $0x2c] sm:$0x1] %v1350
        %v1352 = vld [vmem:[%s1321 + $0x30] sm:$0xf]
        %v1353 = vsel %vm1323, %v1235, %v1352
        %1354 = vst [vmem:[%s1321 + $0x30] sm:$0xf] %v1353
        %1355 = vst [vmem:[%s1321 + $0x34] sm:$0xf] %v1244
        %v1356 = vld [vmem:[%s1321 + $0x38] sm:$0x1]
        %v1357 = vsel %vm509, %v1245, %v1356
        %1358 = vst [vmem:[%s1321 + $0x38] sm:$0x1] %v1357
        %v1359 = vld [vmem:[%s1321 + $0x3c] sm:$0xf]
        %v1360 = vsel %vm1323, %v1252, %v1359
        %1361 = vst [vmem:[%s1321 + $0x3c] sm:$0xf] %v1360
        %1362 = vst [vmem:[%s1321 + $0x40] sm:$0xf] %v1261
        %v1363 = vld [vmem:[%s1321 + $0x44] sm:$0x1]
        %v1364 = vsel %vm509, %v1262, %v1363
        %1365 = vst [vmem:[%s1321 + $0x44] sm:$0x1] %v1364
        %v1366 = vld [vmem:[%s1321 + $0x48] sm:$0xf]
        %v1367 = vsel %vm1323, %v1269, %v1366
        %1368 = vst [vmem:[%s1321 + $0x48] sm:$0xf] %v1367
        %1369 = vst [vmem:[%s1321 + $0x4c] sm:$0xf] %v1278
        %v1370 = vld [vmem:[%s1321 + $0x50] sm:$0x1]
        %v1371 = vsel %vm509, %v1279, %v1370
        %1372 = vst [vmem:[%s1321 + $0x50] sm:$0x1] %v1371
        %v1373 = vld [vmem:[%s1321 + $0x54] sm:$0xf]
        %v1374 = vsel %vm1323, %v1286, %v1373
        %1375 = vst [vmem:[%s1321 + $0x54] sm:$0xf] %v1374
        %1376 = vst [vmem:[%s1321 + $0x58] sm:$0xf] %v1295
        %v1377 = vld [vmem:[%s1321 + $0x5c] sm:$0x1]
        %v1378 = vsel %vm509, %v1296, %v1377
        %1379 = vst [vmem:[%s1321 + $0x5c] sm:$0x1] %v1378
        %v1380 = vld [vmem:[%s5] sm:$0xf]
        %v1381 = vld [vmem:[%s5 + $0x4] sm:$0xf]
        %v1382 = vld [vmem:[%s5 + $0x8] sm:$0xf]
        %v1383 = vld [vmem:[%s5 + $0xc] sm:$0xf]
        %v1384 = vld [vmem:[%s5 + $0x10] sm:$0xf]
        %v1385 = vld [vmem:[%s5 + $0x14] sm:$0xf]
        %v1386 = vld [vmem:[%s5 + $0x18] sm:$0xf]
        %v1387 = vld [vmem:[%s5 + $0x1c] sm:$0xf]
        %v1388 = vld [vmem:[%s5 + $0x20] sm:$0xf]
        %v1389 = vld [vmem:[%s5 + $0x24] sm:$0xf]
        %v1390 = vld [vmem:[%s5 + $0x28] sm:$0xf]
        %v1391 = vld [vmem:[%s5 + $0x2c] sm:$0xf]
        %v1392 = vld [vmem:[%s5 + $0x30] sm:$0xf]
        %v1393 = vld [vmem:[%s5 + $0x34] sm:$0xf]
        %v1394 = vld [vmem:[%s5 + $0x38] sm:$0xf]
        %v1395 = vld [vmem:[%s5 + $0x3c] sm:$0xf]
        %v1396 = vld [vmem:[%s7] sm:$0x1]
        %v1397 = vld [vmem:[%s8] sm:$0x1]
        %v1398 = vld [vmem:[#allocation2] sm:$0xf]
        %v1399 = vld [vmem:[#allocation2 + $0x4] sm:$0xf]
        %v1400 = vld [vmem:[#allocation2 + $0x8] sm:$0x1]
        %v1401 = vld [vmem:[#allocation2 + $0xc] sm:$0xf]
        %v1402 = vld [vmem:[#allocation2 + $0x10] sm:$0xf]
        %v1403 = vld [vmem:[#allocation2 + $0x14] sm:$0x1]
        %v1404 = vld [vmem:[#allocation2 + $0x18] sm:$0xf]
        %v1405 = vld [vmem:[#allocation2 + $0x1c] sm:$0xf]
        %v1406 = vld [vmem:[#allocation2 + $0x20] sm:$0x1]
        %v1407 = vld [vmem:[#allocation2 + $0x24] sm:$0xf]
        %v1408 = vld [vmem:[#allocation2 + $0x28] sm:$0xf]
        %v1409 = vld [vmem:[#allocation2 + $0x2c] sm:$0x1]
        %v1410 = vld [vmem:[#allocation2 + $0x30] sm:$0xf]
        %v1411 = vld [vmem:[#allocation2 + $0x34] sm:$0xf]
        %v1412 = vld [vmem:[#allocation2 + $0x38] sm:$0x1]
        %v1413 = vld [vmem:[#allocation2 + $0x3c] sm:$0xf]
        %v1414 = vld [vmem:[#allocation2 + $0x40] sm:$0xf]
        %v1415 = vld [vmem:[#allocation2 + $0x44] sm:$0x1]
        %v1416 = vld [vmem:[#allocation2 + $0x48] sm:$0xf]
        %v1417 = vld [vmem:[#allocation2 + $0x4c] sm:$0xf]
        %v1418 = vld [vmem:[#allocation2 + $0x50] sm:$0x1]
        %v1419 = vld [vmem:[#allocation2 + $0x54] sm:$0xf]
        %v1420 = vld [vmem:[#allocation2 + $0x58] sm:$0xf]
        %v1421 = vld [vmem:[#allocation2 + $0x5c] sm:$0x1]
        %v1422 = vld [vmem:[%s4] sm:$0xf]
        %v1423 = vld [vmem:[%s4 + $0x4] sm:$0xf]
        %v1424 = vld [vmem:[%s4 + $0x8] sm:$0xf]
        %v1425 = vld [vmem:[%s4 + $0xc] sm:$0xf]
        %v1426 = vld [vmem:[%s4 + $0x10] sm:$0xf]
        %v1427 = vld [vmem:[%s4 + $0x14] sm:$0xf]
        %v1428 = vld [vmem:[%s4 + $0x18] sm:$0xf]
        %v1429 = vld [vmem:[%s4 + $0x1c] sm:$0xf]
        %v1430 = vld [vmem:[%s4 + $0x20] sm:$0xf]
        %v1431 = vld [vmem:[%s4 + $0x24] sm:$0xf]
        %v1432 = vld [vmem:[%s4 + $0x28] sm:$0xf]
        %v1433 = vld [vmem:[%s4 + $0x2c] sm:$0xf]
        %v1434 = vld [vmem:[%s4 + $0x30] sm:$0xf]
        %v1435 = vld [vmem:[%s4 + $0x34] sm:$0xf]
        %v1436 = vld [vmem:[%s4 + $0x38] sm:$0xf]
        %v1437 = vld [vmem:[%s4 + $0x3c] sm:$0xf]
        %vm1438 = vsmask.f32 3328
        %vm1439 = vsmask.f32 7440
        %vm1440 = vmor %vm1438, %vm1439
        %v1442 = vshrl.u32 %v1398, 16
        %v1444 = vrot.slane %v1442, 4
        %v1445 = vshll.u32 %v1398, 16
        %v1447 = vrot.slane %v1445, 5
        %v1448 = vor.u32 %v1444, %v1447
        %v1449 = vrot.slane %v1448, 4
        %v1451 = vshll.u32 %v1399, 16
        %v1453 = vrot.slane %v1451, 5
        %v1454 = vsel %vm1440, %v1449, %v1453
        %v1455 = vshrl.u32 %v1399, 16
        %v1457 = vrot.slane %v1455, 4
        %v1458 = vor.u32 %v1457, %v1453
        %v1459 = vrot.slane %v1458, 4
        %v1461 = vshll.u32 %v1400, 16
        %v1463 = vrot.slane %v1461, 5
        %v1464 = vsel %vm1440, %v1459, %v1463
        %v1466 = vshrl.u32 %v1401, 16
        %v1468 = vrot.slane %v1466, 4
        %v1469 = vshll.u32 %v1401, 16
        %v1471 = vrot.slane %v1469, 5
        %v1472 = vor.u32 %v1468, %v1471
        %v1473 = vrot.slane %v1472, 4
        %v1475 = vshll.u32 %v1402, 16
        %v1477 = vrot.slane %v1475, 5
        %v1478 = vsel %vm1440, %v1473, %v1477
        %v1479 = vshrl.u32 %v1402, 16
        %v1481 = vrot.slane %v1479, 4
        %v1482 = vor.u32 %v1481, %v1477
        %v1483 = vrot.slane %v1482, 4
        %v1485 = vshll.u32 %v1403, 16
        %v1487 = vrot.slane %v1485, 5
        %v1488 = vsel %vm1440, %v1483, %v1487
        %v1490 = vshrl.u32 %v1404, 16
        %v1492 = vrot.slane %v1490, 4
        %v1493 = vshll.u32 %v1404, 16
        %v1495 = vrot.slane %v1493, 5
        %v1496 = vor.u32 %v1492, %v1495
        %v1497 = vrot.slane %v1496, 4
        %v1499 = vshll.u32 %v1405, 16
        %v1501 = vrot.slane %v1499, 5
        %v1502 = vsel %vm1440, %v1497, %v1501
        %v1503 = vshrl.u32 %v1405, 16
        %v1505 = vrot.slane %v1503, 4
        %v1506 = vor.u32 %v1505, %v1501
        %v1507 = vrot.slane %v1506, 4
        %v1509 = vshll.u32 %v1406, 16
        %v1511 = vrot.slane %v1509, 5
        %v1512 = vsel %vm1440, %v1507, %v1511
        %v1514 = vshrl.u32 %v1407, 16
        %v1516 = vrot.slane %v1514, 4
        %v1517 = vshll.u32 %v1407, 16
        %v1519 = vrot.slane %v1517, 5
        %v1520 = vor.u32 %v1516, %v1519
        %v1521 = vrot.slane %v1520, 4
        %v1523 = vshll.u32 %v1408, 16
        %v1525 = vrot.slane %v1523, 5
        %v1526 = vsel %vm1440, %v1521, %v1525
        %v1527 = vshrl.u32 %v1408, 16
        %v1529 = vrot.slane %v1527, 4
        %v1530 = vor.u32 %v1529, %v1525
        %v1531 = vrot.slane %v1530, 4
        %v1533 = vshll.u32 %v1409, 16
        %v1535 = vrot.slane %v1533, 5
        %v1536 = vsel %vm1440, %v1531, %v1535
        %v1538 = vshrl.u32 %v1410, 16
        %v1540 = vrot.slane %v1538, 4
        %v1541 = vshll.u32 %v1410, 16
        %v1543 = vrot.slane %v1541, 5
        %v1544 = vor.u32 %v1540, %v1543
        %v1545 = vrot.slane %v1544, 4
        %v1547 = vshll.u32 %v1411, 16
        %v1549 = vrot.slane %v1547, 5
        %v1550 = vsel %vm1440, %v1545, %v1549
        %v1551 = vshrl.u32 %v1411, 16
        %v1553 = vrot.slane %v1551, 4
        %v1554 = vor.u32 %v1553, %v1549
        %v1555 = vrot.slane %v1554, 4
        %v1557 = vshll.u32 %v1412, 16
        %v1559 = vrot.slane %v1557, 5
        %v1560 = vsel %vm1440, %v1555, %v1559
        %v1562 = vshrl.u32 %v1413, 16
        %v1564 = vrot.slane %v1562, 4
        %v1565 = vshll.u32 %v1413, 16
        %v1567 = vrot.slane %v1565, 5
        %v1568 = vor.u32 %v1564, %v1567
        %v1569 = vrot.slane %v1568, 4
        %v1571 = vshll.u32 %v1414, 16
        %v1573 = vrot.slane %v1571, 5
        %v1574 = vsel %vm1440, %v1569, %v1573
        %v1575 = vshrl.u32 %v1414, 16
        %v1577 = vrot.slane %v1575, 4
        %v1578 = vor.u32 %v1577, %v1573
        %v1579 = vrot.slane %v1578, 4
        %v1581 = vshll.u32 %v1415, 16
        %v1583 = vrot.slane %v1581, 5
        %v1584 = vsel %vm1440, %v1579, %v1583
        %v1586 = vshrl.u32 %v1416, 16
        %v1588 = vrot.slane %v1586, 4
        %v1589 = vshll.u32 %v1416, 16
        %v1591 = vrot.slane %v1589, 5
        %v1592 = vor.u32 %v1588, %v1591
        %v1593 = vrot.slane %v1592, 4
        %v1595 = vshll.u32 %v1417, 16
        %v1597 = vrot.slane %v1595, 5
        %v1598 = vsel %vm1440, %v1593, %v1597
        %v1599 = vshrl.u32 %v1417, 16
        %v1601 = vrot.slane %v1599, 4
        %v1602 = vor.u32 %v1601, %v1597
        %v1603 = vrot.slane %v1602, 4
        %v1605 = vshll.u32 %v1418, 16
        %v1607 = vrot.slane %v1605, 5
        %v1608 = vsel %vm1440, %v1603, %v1607
        %v1610 = vshrl.u32 %v1419, 16
        %v1612 = vrot.slane %v1610, 4
        %v1613 = vshll.u32 %v1419, 16
        %v1615 = vrot.slane %v1613, 5
        %v1616 = vor.u32 %v1612, %v1615
        %v1617 = vrot.slane %v1616, 4
        %v1619 = vshll.u32 %v1420, 16
        %v1621 = vrot.slane %v1619, 5
        %v1622 = vsel %vm1440, %v1617, %v1621
        %v1623 = vshrl.u32 %v1420, 16
        %v1625 = vrot.slane %v1623, 4
        %v1626 = vor.u32 %v1625, %v1621
        %v1627 = vrot.slane %v1626, 4
        %v1629 = vshll.u32 %v1421, 16
        %v1631 = vrot.slane %v1629, 5
        %v1632 = vsel %vm1440, %v1627, %v1631
        %s1633 = scalar_lea.vmem %s4, 64
        %v1634 = vld [vmem:[%s1633] sm:$0xf]
        %v1635 = vld [vmem:[%s1633 + $0x4] sm:$0xf]
        %v1636 = vld [vmem:[%s1633 + $0x8] sm:$0xf]
        %v1637 = vld [vmem:[%s1633 + $0xc] sm:$0xf]
        %v1638 = vld [vmem:[%s1633 + $0x10] sm:$0xf]
        %v1639 = vld [vmem:[%s1633 + $0x14] sm:$0xf]
        %v1640 = vld [vmem:[%s1633 + $0x18] sm:$0xf]
        %v1641 = vld [vmem:[%s1633 + $0x1c] sm:$0xf]
        %v1642 = vld [vmem:[%s1633 + $0x20] sm:$0xf]
        %v1643 = vld [vmem:[%s1633 + $0x24] sm:$0xf]
        %v1644 = vld [vmem:[%s1633 + $0x28] sm:$0xf]
        %v1645 = vld [vmem:[%s1633 + $0x2c] sm:$0xf]
        %v1646 = vld [vmem:[%s1633 + $0x30] sm:$0xf]
        %v1647 = vld [vmem:[%s1633 + $0x34] sm:$0xf]
        %v1648 = vld [vmem:[%s1633 + $0x38] sm:$0xf]
        %v1649 = vld [vmem:[%s1633 + $0x3c] sm:$0xf]
        %v1650 = vunpack.c.l.b16 %v1454
        %v1651 = vunpack.c.l.b16 %v1464
        %v1652 = vunpack.c.l.b16 %v1478
        %v1653 = vunpack.c.l.b16 %v1488
        %v1654 = vunpack.c.l.b16 %v1502
        %v1655 = vunpack.c.l.b16 %v1512
        %v1656 = vunpack.c.l.b16 %v1526
        %v1657 = vunpack.c.l.b16 %v1536
        %v1658 = vunpack.c.l.b16 %v1550
        %v1659 = vunpack.c.l.b16 %v1560
        %v1660 = vunpack.c.l.b16 %v1574
        %v1661 = vunpack.c.l.b16 %v1584
        %v1662 = vunpack.c.l.b16 %v1598
        %v1663 = vunpack.c.l.b16 %v1608
        %v1664 = vunpack.c.l.b16 %v1622
        %v1665 = vunpack.c.l.b16 %v1632
        %v1666 = vpack.c.b16 %v1651, %v1650
        %v1667 = vpack.c.b16 %v1653, %v1652
        %v1668 = vpack.c.b16 %v1655, %v1654
        %v1669 = vpack.c.b16 %v1657, %v1656
        %v1670 = vpack.c.b16 %v1659, %v1658
        %v1671 = vpack.c.b16 %v1661, %v1660
        %v1672 = vpack.c.b16 %v1663, %v1662
        %v1673 = vpack.c.b16 %v1665, %v1664
        %v1698 = vunpack.c.l.b16 %v1634
        %v1699 = vunpack.c.l.b16 %v1635
        %v1700 = vunpack.c.l.b16 %v1636
        %v1701 = vunpack.c.l.b16 %v1637
        %v1702 = vunpack.c.l.b16 %v1638
        %v1703 = vunpack.c.l.b16 %v1639
        %v1704 = vunpack.c.l.b16 %v1640
        %v1705 = vunpack.c.l.b16 %v1641
        %v1706 = vunpack.c.l.b16 %v1642
        %v1707 = vunpack.c.l.b16 %v1643
        %v1708 = vunpack.c.l.b16 %v1644
        %v1709 = vunpack.c.l.b16 %v1645
        %v1710 = vunpack.c.l.b16 %v1646
        %v1711 = vunpack.c.l.b16 %v1647
        %v1712 = vunpack.c.l.b16 %v1648
        %v1713 = vunpack.c.l.b16 %v1649
        %v1714 = vpack.c.b16 %v1699, %v1698
        %v1715 = vpack.c.b16 %v1701, %v1700
        %v1716 = vpack.c.b16 %v1703, %v1702
        %v1717 = vpack.c.b16 %v1705, %v1704
        %v1718 = vpack.c.b16 %v1707, %v1706
        %v1719 = vpack.c.b16 %v1709, %v1708
        %v1720 = vpack.c.b16 %v1711, %v1710
        %v1721 = vpack.c.b16 %v1713, %v1712
        %1730 = vmatprep.subr.bf16.mxu0 0
        %1731 = vmatpush1.bf16.msra.mxu0 %v1721
        %1732 = vmatprep.subr.bf16.mxu0 0
        %1733 = vmatpush1.bf16.msra.mxu0 %v1720
        %1734 = vmatprep.subr.bf16.mxu0 0
        %1735 = vmatpush1.bf16.msra.mxu0 %v1719
        %1736 = vmatprep.subr.bf16.mxu0 0
        %1737 = vmatpush1.bf16.msra.mxu0 %v1718
        %1738 = vmatprep.subr.bf16.mxu0 0
        %1739 = vmatpush1.bf16.msra.mxu0 %v1717
        %1740 = vmatprep.subr.bf16.mxu0 0
        %1741 = vmatpush1.bf16.msra.mxu0 %v1716
        %1742 = vmatprep.subr.bf16.mxu0 0
        %1743 = vmatpush1.bf16.msra.mxu0 %v1715
        %1744 = vmatprep.subr.bf16.mxu0 0
        %1745 = vmatpush1.bf16.msra.mxu0 %v1714
        %1746 = vmatprep.subr.bf16.mxu0 0
        %1747 = vmatpush2.bf16.msra.mxu0 0
        %1748 = vmatprep.subr.bf16.mxu0 0
        %1749 = vmatpush2.bf16.msra.mxu0 0
        %1750 = vmatprep.subr.bf16.mxu0 0
        %1751 = vmatpush2.bf16.msra.mxu0 0
        %1752 = vmatprep.subr.bf16.mxu0 0
        %1753 = vmatpush2.bf16.msra.mxu0 0
        %1754 = vmatprep.subr.bf16.mxu0 0
        %1755 = vmatpush2.bf16.msra.mxu0 0
        %1756 = vmatprep.subr.bf16.mxu0 0
        %1757 = vmatpush2.bf16.msra.mxu0 0
        %1758 = vmatprep.subr.bf16.mxu0 0
        %1759 = vmatpush2.bf16.msra.mxu0 0
        %1760 = vmatprep.subr.bf16.mxu0 0
        %1761 = vmatpush2.bf16.msra.mxu0 0
        %1762 = vmatprep.mubr.bf16.mxu0 0
        %1763 = vmatmul.mubr.bf16.gmra.mxu0 %v1666
        %v1764 = vpop.f32.mrf.mxu0
        %v1765 = vadd.f32 0.0, %v1764
        %v1766 = vpop.f32.mrf.mxu0
        %v1767 = vpop.f32.mrf.mxu0
        %v1768 = vadd.f32 0.0, %v1767
        %v1769 = vpop.f32.mrf.mxu0
        %1770 = vmatprep.mubr.bf16.mxu0 0
        %1771 = vmatmul.mubr.bf16.gmra.mxu0 %v1667
        %v1772 = vpop.f32.mrf.mxu0
        %v1773 = vadd.f32 0.0, %v1772
        %v1774 = vpop.f32.mrf.mxu0
        %v1775 = vpop.f32.mrf.mxu0
        %v1776 = vadd.f32 0.0, %v1775
        %v1777 = vpop.f32.mrf.mxu0
        %1778 = vmatprep.mubr.bf16.mxu0 0
        %1779 = vmatmul.mubr.bf16.gmra.mxu0 %v1668
        %v1780 = vpop.f32.mrf.mxu0
        %v1781 = vadd.f32 0.0, %v1780
        %v1782 = vpop.f32.mrf.mxu0
        %v1783 = vpop.f32.mrf.mxu0
        %v1784 = vadd.f32 0.0, %v1783
        %v1785 = vpop.f32.mrf.mxu0
        %1786 = vmatprep.mubr.bf16.mxu0 0
        %1787 = vmatmul.mubr.bf16.gmra.mxu0 %v1669
        %v1788 = vpop.f32.mrf.mxu0
        %v1789 = vadd.f32 0.0, %v1788
        %v1790 = vpop.f32.mrf.mxu0
        %v1791 = vpop.f32.mrf.mxu0
        %v1792 = vadd.f32 0.0, %v1791
        %v1793 = vpop.f32.mrf.mxu0
        %1794 = vmatprep.mubr.bf16.mxu0 0
        %1795 = vmatmul.mubr.bf16.gmra.mxu0 %v1670
        %v1796 = vpop.f32.mrf.mxu0
        %v1797 = vadd.f32 0.0, %v1796
        %v1798 = vpop.f32.mrf.mxu0
        %v1799 = vpop.f32.mrf.mxu0
        %v1800 = vadd.f32 0.0, %v1799
        %v1801 = vpop.f32.mrf.mxu0
        %1802 = vmatprep.mubr.bf16.mxu0 0
        %1803 = vmatmul.mubr.bf16.gmra.mxu0 %v1671
        %v1804 = vpop.f32.mrf.mxu0
        %v1805 = vadd.f32 0.0, %v1804
        %v1806 = vpop.f32.mrf.mxu0
        %v1807 = vpop.f32.mrf.mxu0
        %v1808 = vadd.f32 0.0, %v1807
        %v1809 = vpop.f32.mrf.mxu0
        %1810 = vmatprep.mubr.bf16.mxu0 0
        %1811 = vmatmul.mubr.bf16.gmra.mxu0 %v1672
        %v1812 = vpop.f32.mrf.mxu0
        %v1813 = vadd.f32 0.0, %v1812
        %v1814 = vpop.f32.mrf.mxu0
        %v1815 = vpop.f32.mrf.mxu0
        %v1816 = vadd.f32 0.0, %v1815
        %v1817 = vpop.f32.mrf.mxu0
        %1818 = vmatprep.mubr.bf16.mxu0 0
        %1819 = vmatmul.mubr.bf16.gmra.mxu0 %v1673
        %v1820 = vpop.f32.mrf.mxu0
        %v1821 = vadd.f32 0.0, %v1820
        %v1822 = vpop.f32.mrf.mxu0
        %v1823 = vpop.f32.mrf.mxu0
        %v1824 = vadd.f32 0.0, %v1823
        %v1825 = vpop.f32.mrf.mxu0
        %1826 = vdwg.mxu0
        %v1843 = vunpack.c.l.b16 %v1398
        %v1844 = vunpack.c.l.b16 %v1399
        %v1845 = vunpack.c.l.b16 %v1401
        %v1846 = vunpack.c.l.b16 %v1402
        %v1847 = vunpack.c.l.b16 %v1404
        %v1848 = vunpack.c.l.b16 %v1405
        %v1849 = vunpack.c.l.b16 %v1407
        %v1850 = vunpack.c.l.b16 %v1408
        %v1851 = vunpack.c.l.b16 %v1410
        %v1852 = vunpack.c.l.b16 %v1411
        %v1853 = vunpack.c.l.b16 %v1413
        %v1854 = vunpack.c.l.b16 %v1414
        %v1855 = vunpack.c.l.b16 %v1416
        %v1856 = vunpack.c.l.b16 %v1417
        %v1857 = vunpack.c.l.b16 %v1419
        %v1858 = vunpack.c.l.b16 %v1420
        %v1859 = vpack.c.b16 %v1844, %v1843
        %v1860 = vpack.c.b16 %v1846, %v1845
        %v1861 = vpack.c.b16 %v1848, %v1847
        %v1862 = vpack.c.b16 %v1850, %v1849
        %v1863 = vpack.c.b16 %v1852, %v1851
        %v1864 = vpack.c.b16 %v1854, %v1853
        %v1865 = vpack.c.b16 %v1856, %v1855
        %v1866 = vpack.c.b16 %v1858, %v1857
        %v1891 = vunpack.c.l.b16 %v1422
        %v1892 = vunpack.c.l.b16 %v1423
        %v1893 = vunpack.c.l.b16 %v1424
        %v1894 = vunpack.c.l.b16 %v1425
        %v1895 = vunpack.c.l.b16 %v1426
        %v1896 = vunpack.c.l.b16 %v1427
        %v1897 = vunpack.c.l.b16 %v1428
        %v1898 = vunpack.c.l.b16 %v1429
        %v1899 = vunpack.c.l.b16 %v1430
        %v1900 = vunpack.c.l.b16 %v1431
        %v1901 = vunpack.c.l.b16 %v1432
        %v1902 = vunpack.c.l.b16 %v1433
        %v1903 = vunpack.c.l.b16 %v1434
        %v1904 = vunpack.c.l.b16 %v1435
        %v1905 = vunpack.c.l.b16 %v1436
        %v1906 = vunpack.c.l.b16 %v1437
        %v1907 = vpack.c.b16 %v1892, %v1891
        %v1908 = vpack.c.b16 %v1894, %v1893
        %v1909 = vpack.c.b16 %v1896, %v1895
        %v1910 = vpack.c.b16 %v1898, %v1897
        %v1911 = vpack.c.b16 %v1900, %v1899
        %v1912 = vpack.c.b16 %v1902, %v1901
        %v1913 = vpack.c.b16 %v1904, %v1903
        %v1914 = vpack.c.b16 %v1906, %v1905
        %1923 = vmatprep.subr.bf16.mxu0 0
        %1924 = vmatpush1.bf16.msra.mxu0 %v1914
        %1925 = vmatprep.subr.bf16.mxu0 0
        %1926 = vmatpush1.bf16.msra.mxu0 %v1913
        %1927 = vmatprep.subr.bf16.mxu0 0
        %1928 = vmatpush1.bf16.msra.mxu0 %v1912
        %1929 = vmatprep.subr.bf16.mxu0 0
        %1930 = vmatpush1.bf16.msra.mxu0 %v1911
        %1931 = vmatprep.subr.bf16.mxu0 0
        %1932 = vmatpush1.bf16.msra.mxu0 %v1910
        %1933 = vmatprep.subr.bf16.mxu0 0
        %1934 = vmatpush1.bf16.msra.mxu0 %v1909
        %1935 = vmatprep.subr.bf16.mxu0 0
        %1936 = vmatpush1.bf16.msra.mxu0 %v1908
        %1937 = vmatprep.subr.bf16.mxu0 0
        %1938 = vmatpush1.bf16.msra.mxu0 %v1907
        %1939 = vmatprep.subr.bf16.mxu0 0
        %1940 = vmatpush2.bf16.msra.mxu0 0
        %1941 = vmatprep.subr.bf16.mxu0 0
        %1942 = vmatpush2.bf16.msra.mxu0 0
        %1943 = vmatprep.subr.bf16.mxu0 0
        %1944 = vmatpush2.bf16.msra.mxu0 0
        %1945 = vmatprep.subr.bf16.mxu0 0
        %1946 = vmatpush2.bf16.msra.mxu0 0
        %1947 = vmatprep.subr.bf16.mxu0 0
        %1948 = vmatpush2.bf16.msra.mxu0 0
        %1949 = vmatprep.subr.bf16.mxu0 0
        %1950 = vmatpush2.bf16.msra.mxu0 0
        %1951 = vmatprep.subr.bf16.mxu0 0
        %1952 = vmatpush2.bf16.msra.mxu0 0
        %1953 = vmatprep.subr.bf16.mxu0 0
        %1954 = vmatpush2.bf16.msra.mxu0 0
        %1955 = vmatprep.mubr.bf16.mxu0 0
        %1956 = vmatmul.mubr.bf16.gmra.mxu0 %v1859
        %v1957 = vpop.f32.mrf.mxu0
        %v1958 = vadd.f32 %v1765, %v1957
        %v1959 = vpop.f32.mrf.mxu0
        %v1960 = vpop.f32.mrf.mxu0
        %v1961 = vadd.f32 %v1768, %v1960
        %v1962 = vpop.f32.mrf.mxu0
        %1963 = vmatprep.mubr.bf16.mxu0 0
        %1964 = vmatmul.mubr.bf16.gmra.mxu0 %v1860
        %v1965 = vpop.f32.mrf.mxu0
        %v1966 = vadd.f32 %v1773, %v1965
        %v1967 = vpop.f32.mrf.mxu0
        %v1968 = vpop.f32.mrf.mxu0
        %v1969 = vadd.f32 %v1776, %v1968
        %v1970 = vpop.f32.mrf.mxu0
        %1971 = vmatprep.mubr.bf16.mxu0 0
        %1972 = vmatmul.mubr.bf16.gmra.mxu0 %v1861
        %v1973 = vpop.f32.mrf.mxu0
        %v1974 = vadd.f32 %v1781, %v1973
        %v1975 = vpop.f32.mrf.mxu0
        %v1976 = vpop.f32.mrf.mxu0
        %v1977 = vadd.f32 %v1784, %v1976
        %v1978 = vpop.f32.mrf.mxu0
        %1979 = vmatprep.mubr.bf16.mxu0 0
        %1980 = vmatmul.mubr.bf16.gmra.mxu0 %v1862
        %v1981 = vpop.f32.mrf.mxu0
        %v1982 = vadd.f32 %v1789, %v1981
        %v1983 = vpop.f32.mrf.mxu0
        %v1984 = vpop.f32.mrf.mxu0
        %v1985 = vadd.f32 %v1792, %v1984
        %v1986 = vpop.f32.mrf.mxu0
        %1987 = vmatprep.mubr.bf16.mxu0 0
        %1988 = vmatmul.mubr.bf16.gmra.mxu0 %v1863
        %v1989 = vpop.f32.mrf.mxu0
        %v1990 = vadd.f32 %v1797, %v1989
        %v1991 = vpop.f32.mrf.mxu0
        %v1992 = vpop.f32.mrf.mxu0
        %v1993 = vadd.f32 %v1800, %v1992
        %v1994 = vpop.f32.mrf.mxu0
        %1995 = vmatprep.mubr.bf16.mxu0 0
        %1996 = vmatmul.mubr.bf16.gmra.mxu0 %v1864
        %v1997 = vpop.f32.mrf.mxu0
        %v1998 = vadd.f32 %v1805, %v1997
        %v1999 = vpop.f32.mrf.mxu0
        %v2000 = vpop.f32.mrf.mxu0
        %v2001 = vadd.f32 %v1808, %v2000
        %v2002 = vpop.f32.mrf.mxu0
        %2003 = vmatprep.mubr.bf16.mxu0 0
        %2004 = vmatmul.mubr.bf16.gmra.mxu0 %v1865
        %v2005 = vpop.f32.mrf.mxu0
        %v2006 = vadd.f32 %v1813, %v2005
        %v2007 = vpop.f32.mrf.mxu0
        %v2008 = vpop.f32.mrf.mxu0
        %v2009 = vadd.f32 %v1816, %v2008
        %v2010 = vpop.f32.mrf.mxu0
        %2011 = vmatprep.mubr.bf16.mxu0 0
        %2012 = vmatmul.mubr.bf16.gmra.mxu0 %v1866
        %v2013 = vpop.f32.mrf.mxu0
        %v2014 = vadd.f32 %v1821, %v2013
        %v2015 = vpop.f32.mrf.mxu0
        %v2016 = vpop.f32.mrf.mxu0
        %v2017 = vadd.f32 %v1824, %v2016
        %v2018 = vpop.f32.mrf.mxu0
        %2019 = vdwg.mxu0
        %vm2028 = vcmask 1042432
        %vm2029 = vcmask 1046532
        %vm2030 = vmor %vm2028, %vm2029
        %v2031 = vrot.slane %v1398, 5
        %v2032 = vrot.slane %v2031, 4
        %v2033 = vrot.slane %v1399, 5
        %v2034 = vsel %vm2030, %v2032, %v2033
        %v2035 = vrot.slane %v2033, 4
        %v2036 = vrot.slane %v1400, 5
        %v2037 = vsel %vm2030, %v2035, %v2036
        %v2038 = vrot.slane %v1401, 5
        %v2039 = vrot.slane %v2038, 4
        %v2040 = vrot.slane %v1402, 5
        %v2041 = vsel %vm2030, %v2039, %v2040
        %v2042 = vrot.slane %v2040, 4
        %v2043 = vrot.slane %v1403, 5
        %v2044 = vsel %vm2030, %v2042, %v2043
        %v2045 = vrot.slane %v1404, 5
        %v2046 = vrot.slane %v2045, 4
        %v2047 = vrot.slane %v1405, 5
        %v2048 = vsel %vm2030, %v2046, %v2047
        %v2049 = vrot.slane %v2047, 4
        %v2050 = vrot.slane %v1406, 5
        %v2051 = vsel %vm2030, %v2049, %v2050
        %v2052 = vrot.slane %v1407, 5
        %v2053 = vrot.slane %v2052, 4
        %v2054 = vrot.slane %v1408, 5
        %v2055 = vsel %vm2030, %v2053, %v2054
        %v2056 = vrot.slane %v2054, 4
        %v2057 = vrot.slane %v1409, 5
        %v2058 = vsel %vm2030, %v2056, %v2057
        %v2059 = vrot.slane %v1410, 5
        %v2060 = vrot.slane %v2059, 4
        %v2061 = vrot.slane %v1411, 5
        %v2062 = vsel %vm2030, %v2060, %v2061
        %v2063 = vrot.slane %v2061, 4
        %v2064 = vrot.slane %v1412, 5
        %v2065 = vsel %vm2030, %v2063, %v2064
        %v2066 = vrot.slane %v1413, 5
        %v2067 = vrot.slane %v2066, 4
        %v2068 = vrot.slane %v1414, 5
        %v2069 = vsel %vm2030, %v2067, %v2068
        %v2070 = vrot.slane %v2068, 4
        %v2071 = vrot.slane %v1415, 5
        %v2072 = vsel %vm2030, %v2070, %v2071
        %v2073 = vrot.slane %v1416, 5
        %v2074 = vrot.slane %v2073, 4
        %v2075 = vrot.slane %v1417, 5
        %v2076 = vsel %vm2030, %v2074, %v2075
        %v2077 = vrot.slane %v2075, 4
        %v2078 = vrot.slane %v1418, 5
        %v2079 = vsel %vm2030, %v2077, %v2078
        %v2080 = vrot.slane %v1419, 5
        %v2081 = vrot.slane %v2080, 4
        %v2082 = vrot.slane %v1420, 5
        %v2083 = vsel %vm2030, %v2081, %v2082
        %v2084 = vrot.slane %v2082, 4
        %v2085 = vrot.slane %v1421, 5
        %v2086 = vsel %vm2030, %v2084, %v2085
        %s2087 = scalar_lea.vmem %s4, 128
        %v2088 = vld [vmem:[%s2087] sm:$0xf]
        %v2089 = vld [vmem:[%s2087 + $0x4] sm:$0xf]
        %v2090 = vld [vmem:[%s2087 + $0x8] sm:$0xf]
        %v2091 = vld [vmem:[%s2087 + $0xc] sm:$0xf]
        %v2092 = vld [vmem:[%s2087 + $0x10] sm:$0xf]
        %v2093 = vld [vmem:[%s2087 + $0x14] sm:$0xf]
        %v2094 = vld [vmem:[%s2087 + $0x18] sm:$0xf]
        %v2095 = vld [vmem:[%s2087 + $0x1c] sm:$0xf]
        %v2096 = vld [vmem:[%s2087 + $0x20] sm:$0xf]
        %v2097 = vld [vmem:[%s2087 + $0x24] sm:$0xf]
        %v2098 = vld [vmem:[%s2087 + $0x28] sm:$0xf]
        %v2099 = vld [vmem:[%s2087 + $0x2c] sm:$0xf]
        %v2100 = vld [vmem:[%s2087 + $0x30] sm:$0xf]
        %v2101 = vld [vmem:[%s2087 + $0x34] sm:$0xf]
        %v2102 = vld [vmem:[%s2087 + $0x38] sm:$0xf]
        %v2103 = vld [vmem:[%s2087 + $0x3c] sm:$0xf]
        %v2104 = vunpack.c.l.b16 %v2034
        %v2105 = vunpack.c.l.b16 %v2037
        %v2106 = vunpack.c.l.b16 %v2041
        %v2107 = vunpack.c.l.b16 %v2044
        %v2108 = vunpack.c.l.b16 %v2048
        %v2109 = vunpack.c.l.b16 %v2051
        %v2110 = vunpack.c.l.b16 %v2055
        %v2111 = vunpack.c.l.b16 %v2058
        %v2112 = vunpack.c.l.b16 %v2062
        %v2113 = vunpack.c.l.b16 %v2065
        %v2114 = vunpack.c.l.b16 %v2069
        %v2115 = vunpack.c.l.b16 %v2072
        %v2116 = vunpack.c.l.b16 %v2076
        %v2117 = vunpack.c.l.b16 %v2079
        %v2118 = vunpack.c.l.b16 %v2083
        %v2119 = vunpack.c.l.b16 %v2086
        %v2120 = vpack.c.b16 %v2105, %v2104
        %v2121 = vpack.c.b16 %v2107, %v2106
        %v2122 = vpack.c.b16 %v2109, %v2108
        %v2123 = vpack.c.b16 %v2111, %v2110
        %v2124 = vpack.c.b16 %v2113, %v2112
        %v2125 = vpack.c.b16 %v2115, %v2114
        %v2126 = vpack.c.b16 %v2117, %v2116
        %v2127 = vpack.c.b16 %v2119, %v2118
        %v2152 = vunpack.c.l.b16 %v2088
        %v2153 = vunpack.c.l.b16 %v2089
        %v2154 = vunpack.c.l.b16 %v2090
        %v2155 = vunpack.c.l.b16 %v2091
        %v2156 = vunpack.c.l.b16 %v2092
        %v2157 = vunpack.c.l.b16 %v2093
        %v2158 = vunpack.c.l.b16 %v2094
        %v2159 = vunpack.c.l.b16 %v2095
        %v2160 = vunpack.c.l.b16 %v2096
        %v2161 = vunpack.c.l.b16 %v2097
        %v2162 = vunpack.c.l.b16 %v2098
        %v2163 = vunpack.c.l.b16 %v2099
        %v2164 = vunpack.c.l.b16 %v2100
        %v2165 = vunpack.c.l.b16 %v2101
        %v2166 = vunpack.c.l.b16 %v2102
        %v2167 = vunpack.c.l.b16 %v2103
        %v2168 = vpack.c.b16 %v2153, %v2152
        %v2169 = vpack.c.b16 %v2155, %v2154
        %v2170 = vpack.c.b16 %v2157, %v2156
        %v2171 = vpack.c.b16 %v2159, %v2158
        %v2172 = vpack.c.b16 %v2161, %v2160
        %v2173 = vpack.c.b16 %v2163, %v2162
        %v2174 = vpack.c.b16 %v2165, %v2164
        %v2175 = vpack.c.b16 %v2167, %v2166
        %2184 = vmatprep.subr.bf16.mxu0 0
        %2185 = vmatpush1.bf16.msra.mxu0 %v2175
        %2186 = vmatprep.subr.bf16.mxu0 0
        %2187 = vmatpush1.bf16.msra.mxu0 %v2174
        %2188 = vmatprep.subr.bf16.mxu0 0
        %2189 = vmatpush1.bf16.msra.mxu0 %v2173
        %2190 = vmatprep.subr.bf16.mxu0 0
        %2191 = vmatpush1.bf16.msra.mxu0 %v2172
        %2192 = vmatprep.subr.bf16.mxu0 0
        %2193 = vmatpush1.bf16.msra.mxu0 %v2171
        %2194 = vmatprep.subr.bf16.mxu0 0
        %2195 = vmatpush1.bf16.msra.mxu0 %v2170
        %2196 = vmatprep.subr.bf16.mxu0 0
        %2197 = vmatpush1.bf16.msra.mxu0 %v2169
        %2198 = vmatprep.subr.bf16.mxu0 0
        %2199 = vmatpush1.bf16.msra.mxu0 %v2168
        %2200 = vmatprep.subr.bf16.mxu0 0
        %2201 = vmatpush2.bf16.msra.mxu0 0
        %2202 = vmatprep.subr.bf16.mxu0 0
        %2203 = vmatpush2.bf16.msra.mxu0 0
        %2204 = vmatprep.subr.bf16.mxu0 0
        %2205 = vmatpush2.bf16.msra.mxu0 0
        %2206 = vmatprep.subr.bf16.mxu0 0
        %2207 = vmatpush2.bf16.msra.mxu0 0
        %2208 = vmatprep.subr.bf16.mxu0 0
        %2209 = vmatpush2.bf16.msra.mxu0 0
        %2210 = vmatprep.subr.bf16.mxu0 0
        %2211 = vmatpush2.bf16.msra.mxu0 0
        %2212 = vmatprep.subr.bf16.mxu0 0
        %2213 = vmatpush2.bf16.msra.mxu0 0
        %2214 = vmatprep.subr.bf16.mxu0 0
        %2215 = vmatpush2.bf16.msra.mxu0 0
        %2216 = vmatprep.mubr.bf16.mxu0 0
        %2217 = vmatmul.mubr.bf16.gmra.mxu0 %v2120
        %v2218 = vpop.f32.mrf.mxu0
        %v2219 = vadd.f32 0.0, %v2218
        %v2220 = vpop.f32.mrf.mxu0
        %v2221 = vpop.f32.mrf.mxu0
        %v2222 = vadd.f32 0.0, %v2221
        %v2223 = vpop.f32.mrf.mxu0
        %2224 = vmatprep.mubr.bf16.mxu0 0
        %2225 = vmatmul.mubr.bf16.gmra.mxu0 %v2121
        %v2226 = vpop.f32.mrf.mxu0
        %v2227 = vadd.f32 0.0, %v2226
        %v2228 = vpop.f32.mrf.mxu0
        %v2229 = vpop.f32.mrf.mxu0
        %v2230 = vadd.f32 0.0, %v2229
        %v2231 = vpop.f32.mrf.mxu0
        %2232 = vmatprep.mubr.bf16.mxu0 0
        %2233 = vmatmul.mubr.bf16.gmra.mxu0 %v2122
        %v2234 = vpop.f32.mrf.mxu0
        %v2235 = vadd.f32 0.0, %v2234
        %v2236 = vpop.f32.mrf.mxu0
        %v2237 = vpop.f32.mrf.mxu0
        %v2238 = vadd.f32 0.0, %v2237
        %v2239 = vpop.f32.mrf.mxu0
        %2240 = vmatprep.mubr.bf16.mxu0 0
        %2241 = vmatmul.mubr.bf16.gmra.mxu0 %v2123
        %v2242 = vpop.f32.mrf.mxu0
        %v2243 = vadd.f32 0.0, %v2242
        %v2244 = vpop.f32.mrf.mxu0
        %v2245 = vpop.f32.mrf.mxu0
        %v2246 = vadd.f32 0.0, %v2245
        %v2247 = vpop.f32.mrf.mxu0
        %2248 = vmatprep.mubr.bf16.mxu0 0
        %2249 = vmatmul.mubr.bf16.gmra.mxu0 %v2124
        %v2250 = vpop.f32.mrf.mxu0
        %v2251 = vadd.f32 0.0, %v2250
        %v2252 = vpop.f32.mrf.mxu0
        %v2253 = vpop.f32.mrf.mxu0
        %v2254 = vadd.f32 0.0, %v2253
        %v2255 = vpop.f32.mrf.mxu0
        %2256 = vmatprep.mubr.bf16.mxu0 0
        %2257 = vmatmul.mubr.bf16.gmra.mxu0 %v2125
        %v2258 = vpop.f32.mrf.mxu0
        %v2259 = vadd.f32 0.0, %v2258
        %v2260 = vpop.f32.mrf.mxu0
        %v2261 = vpop.f32.mrf.mxu0
        %v2262 = vadd.f32 0.0, %v2261
        %v2263 = vpop.f32.mrf.mxu0
        %2264 = vmatprep.mubr.bf16.mxu0 0
        %2265 = vmatmul.mubr.bf16.gmra.mxu0 %v2126
        %v2266 = vpop.f32.mrf.mxu0
        %v2267 = vadd.f32 0.0, %v2266
        %v2268 = vpop.f32.mrf.mxu0
        %v2269 = vpop.f32.mrf.mxu0
        %v2270 = vadd.f32 0.0, %v2269
        %v2271 = vpop.f32.mrf.mxu0
        %2272 = vmatprep.mubr.bf16.mxu0 0
        %2273 = vmatmul.mubr.bf16.gmra.mxu0 %v2127
        %v2274 = vpop.f32.mrf.mxu0
        %v2275 = vadd.f32 0.0, %v2274
        %v2276 = vpop.f32.mrf.mxu0
        %v2277 = vpop.f32.mrf.mxu0
        %v2278 = vadd.f32 0.0, %v2277
        %v2279 = vpop.f32.mrf.mxu0
        %2280 = vdwg.mxu0
        %v2281 = vadd.f32 %v1958, %v2219
        %v2282 = vadd.f32 %v1961, %v2222
        %v2283 = vadd.f32 %v1966, %v2227
        %v2284 = vadd.f32 %v1969, %v2230
        %v2285 = vadd.f32 %v1974, %v2235
        %v2286 = vadd.f32 %v1977, %v2238
        %v2287 = vadd.f32 %v1982, %v2243
        %v2288 = vadd.f32 %v1985, %v2246
        %v2289 = vadd.f32 %v1990, %v2251
        %v2290 = vadd.f32 %v1993, %v2254
        %v2291 = vadd.f32 %v1998, %v2259
        %v2292 = vadd.f32 %v2001, %v2262
        %v2293 = vadd.f32 %v2006, %v2267
        %v2294 = vadd.f32 %v2009, %v2270
        %v2295 = vadd.f32 %v2014, %v2275
        %v2296 = vadd.f32 %v2017, %v2278
        %v2297 = vld [vmem:[%s1321] sm:$0xf]
        %v2298 = vld [vmem:[%s1321 + $0x4] sm:$0xf]
        %v2299 = vld [vmem:[%s1321 + $0x8] sm:$0x1]
        %v2300 = vld [vmem:[%s1321 + $0xc] sm:$0xf]
        %v2301 = vld [vmem:[%s1321 + $0x10] sm:$0xf]
        %v2302 = vld [vmem:[%s1321 + $0x14] sm:$0x1]
        %v2303 = vld [vmem:[%s1321 + $0x18] sm:$0xf]
        %v2304 = vld [vmem:[%s1321 + $0x1c] sm:$0xf]
        %v2305 = vld [vmem:[%s1321 + $0x20] sm:$0x1]
        %v2306 = vld [vmem:[%s1321 + $0x24] sm:$0xf]
        %v2307 = vld [vmem:[%s1321 + $0x28] sm:$0xf]
        %v2308 = vld [vmem:[%s1321 + $0x2c] sm:$0x1]
        %v2309 = vld [vmem:[%s1321 + $0x30] sm:$0xf]
        %v2310 = vld [vmem:[%s1321 + $0x34] sm:$0xf]
        %v2311 = vld [vmem:[%s1321 + $0x38] sm:$0x1]
        %v2312 = vld [vmem:[%s1321 + $0x3c] sm:$0xf]
        %v2313 = vld [vmem:[%s1321 + $0x40] sm:$0xf]
        %v2314 = vld [vmem:[%s1321 + $0x44] sm:$0x1]
        %v2315 = vld [vmem:[%s1321 + $0x48] sm:$0xf]
        %v2316 = vld [vmem:[%s1321 + $0x4c] sm:$0xf]
        %v2317 = vld [vmem:[%s1321 + $0x50] sm:$0x1]
        %v2318 = vld [vmem:[%s1321 + $0x54] sm:$0xf]
        %v2319 = vld [vmem:[%s1321 + $0x58] sm:$0xf]
        %v2320 = vld [vmem:[%s1321 + $0x5c] sm:$0x1]
        %s2321 = scalar_lea.vmem %s4, 192
        %v2322 = vld [vmem:[%s2321] sm:$0xf]
        %v2323 = vld [vmem:[%s2321 + $0x4] sm:$0xf]
        %v2324 = vld [vmem:[%s2321 + $0x8] sm:$0xf]
        %v2325 = vld [vmem:[%s2321 + $0xc] sm:$0xf]
        %v2326 = vld [vmem:[%s2321 + $0x10] sm:$0xf]
        %v2327 = vld [vmem:[%s2321 + $0x14] sm:$0xf]
        %v2328 = vld [vmem:[%s2321 + $0x18] sm:$0xf]
        %v2329 = vld [vmem:[%s2321 + $0x1c] sm:$0xf]
        %v2330 = vld [vmem:[%s2321 + $0x20] sm:$0xf]
        %v2331 = vld [vmem:[%s2321 + $0x24] sm:$0xf]
        %v2332 = vld [vmem:[%s2321 + $0x28] sm:$0xf]
        %v2333 = vld [vmem:[%s2321 + $0x2c] sm:$0xf]
        %v2334 = vld [vmem:[%s2321 + $0x30] sm:$0xf]
        %v2335 = vld [vmem:[%s2321 + $0x34] sm:$0xf]
        %v2336 = vld [vmem:[%s2321 + $0x38] sm:$0xf]
        %v2337 = vld [vmem:[%s2321 + $0x3c] sm:$0xf]
        %v2354 = vunpack.c.l.b16 %v2297
        %v2355 = vunpack.c.l.b16 %v2298
        %v2356 = vunpack.c.l.b16 %v2300
        %v2357 = vunpack.c.l.b16 %v2301
        %v2358 = vunpack.c.l.b16 %v2303
        %v2359 = vunpack.c.l.b16 %v2304
        %v2360 = vunpack.c.l.b16 %v2306
        %v2361 = vunpack.c.l.b16 %v2307
        %v2362 = vunpack.c.l.b16 %v2309
        %v2363 = vunpack.c.l.b16 %v2310
        %v2364 = vunpack.c.l.b16 %v2312
        %v2365 = vunpack.c.l.b16 %v2313
        %v2366 = vunpack.c.l.b16 %v2315
        %v2367 = vunpack.c.l.b16 %v2316
        %v2368 = vunpack.c.l.b16 %v2318
        %v2369 = vunpack.c.l.b16 %v2319
        %v2370 = vpack.c.b16 %v2355, %v2354
        %v2371 = vpack.c.b16 %v2357, %v2356
        %v2372 = vpack.c.b16 %v2359, %v2358
        %v2373 = vpack.c.b16 %v2361, %v2360
        %v2374 = vpack.c.b16 %v2363, %v2362
        %v2375 = vpack.c.b16 %v2365, %v2364
        %v2376 = vpack.c.b16 %v2367, %v2366
        %v2377 = vpack.c.b16 %v2369, %v2368
        %v2402 = vunpack.c.l.b16 %v2322
        %v2403 = vunpack.c.l.b16 %v2323
        %v2404 = vunpack.c.l.b16 %v2324
        %v2405 = vunpack.c.l.b16 %v2325
        %v2406 = vunpack.c.l.b16 %v2326
        %v2407 = vunpack.c.l.b16 %v2327
        %v2408 = vunpack.c.l.b16 %v2328
        %v2409 = vunpack.c.l.b16 %v2329
        %v2410 = vunpack.c.l.b16 %v2330
        %v2411 = vunpack.c.l.b16 %v2331
        %v2412 = vunpack.c.l.b16 %v2332
        %v2413 = vunpack.c.l.b16 %v2333
        %v2414 = vunpack.c.l.b16 %v2334
        %v2415 = vunpack.c.l.b16 %v2335
        %v2416 = vunpack.c.l.b16 %v2336
        %v2417 = vunpack.c.l.b16 %v2337
        %v2418 = vpack.c.b16 %v2403, %v2402
        %v2419 = vpack.c.b16 %v2405, %v2404
        %v2420 = vpack.c.b16 %v2407, %v2406
        %v2421 = vpack.c.b16 %v2409, %v2408
        %v2422 = vpack.c.b16 %v2411, %v2410
        %v2423 = vpack.c.b16 %v2413, %v2412
        %v2424 = vpack.c.b16 %v2415, %v2414
        %v2425 = vpack.c.b16 %v2417, %v2416
        %2434 = vmatprep.subr.bf16.mxu0 0
        %2435 = vmatpush1.bf16.msra.mxu0 %v2425
        %2436 = vmatprep.subr.bf16.mxu0 0
        %2437 = vmatpush1.bf16.msra.mxu0 %v2424
        %2438 = vmatprep.subr.bf16.mxu0 0
        %2439 = vmatpush1.bf16.msra.mxu0 %v2423
        %2440 = vmatprep.subr.bf16.mxu0 0
        %2441 = vmatpush1.bf16.msra.mxu0 %v2422
        %2442 = vmatprep.subr.bf16.mxu0 0
        %2443 = vmatpush1.bf16.msra.mxu0 %v2421
        %2444 = vmatprep.subr.bf16.mxu0 0
        %2445 = vmatpush1.bf16.msra.mxu0 %v2420
        %2446 = vmatprep.subr.bf16.mxu0 0
        %2447 = vmatpush1.bf16.msra.mxu0 %v2419
        %2448 = vmatprep.subr.bf16.mxu0 0
        %2449 = vmatpush1.bf16.msra.mxu0 %v2418
        %2450 = vmatprep.subr.bf16.mxu0 0
        %2451 = vmatpush2.bf16.msra.mxu0 0
        %2452 = vmatprep.subr.bf16.mxu0 0
        %2453 = vmatpush2.bf16.msra.mxu0 0
        %2454 = vmatprep.subr.bf16.mxu0 0
        %2455 = vmatpush2.bf16.msra.mxu0 0
        %2456 = vmatprep.subr.bf16.mxu0 0
        %2457 = vmatpush2.bf16.msra.mxu0 0
        %2458 = vmatprep.subr.bf16.mxu0 0
        %2459 = vmatpush2.bf16.msra.mxu0 0
        %2460 = vmatprep.subr.bf16.mxu0 0
        %2461 = vmatpush2.bf16.msra.mxu0 0
        %2462 = vmatprep.subr.bf16.mxu0 0
        %2463 = vmatpush2.bf16.msra.mxu0 0
        %2464 = vmatprep.subr.bf16.mxu0 0
        %2465 = vmatpush2.bf16.msra.mxu0 0
        %2466 = vmatprep.mubr.bf16.mxu0 0
        %2467 = vmatmul.mubr.bf16.gmra.mxu0 %v2370
        %v2468 = vpop.f32.mrf.mxu0
        %v2469 = vadd.f32 0.0, %v2468
        %v2470 = vpop.f32.mrf.mxu0
        %v2471 = vpop.f32.mrf.mxu0
        %v2472 = vadd.f32 0.0, %v2471
        %v2473 = vpop.f32.mrf.mxu0
        %2474 = vmatprep.mubr.bf16.mxu0 0
        %2475 = vmatmul.mubr.bf16.gmra.mxu0 %v2371
        %v2476 = vpop.f32.mrf.mxu0
        %v2477 = vadd.f32 0.0, %v2476
        %v2478 = vpop.f32.mrf.mxu0
        %v2479 = vpop.f32.mrf.mxu0
        %v2480 = vadd.f32 0.0, %v2479
        %v2481 = vpop.f32.mrf.mxu0
        %2482 = vmatprep.mubr.bf16.mxu0 0
        %2483 = vmatmul.mubr.bf16.gmra.mxu0 %v2372
        %v2484 = vpop.f32.mrf.mxu0
        %v2485 = vadd.f32 0.0, %v2484
        %v2486 = vpop.f32.mrf.mxu0
        %v2487 = vpop.f32.mrf.mxu0
        %v2488 = vadd.f32 0.0, %v2487
        %v2489 = vpop.f32.mrf.mxu0
        %2490 = vmatprep.mubr.bf16.mxu0 0
        %2491 = vmatmul.mubr.bf16.gmra.mxu0 %v2373
        %v2492 = vpop.f32.mrf.mxu0
        %v2493 = vadd.f32 0.0, %v2492
        %v2494 = vpop.f32.mrf.mxu0
        %v2495 = vpop.f32.mrf.mxu0
        %v2496 = vadd.f32 0.0, %v2495
        %v2497 = vpop.f32.mrf.mxu0
        %2498 = vmatprep.mubr.bf16.mxu0 0
        %2499 = vmatmul.mubr.bf16.gmra.mxu0 %v2374
        %v2500 = vpop.f32.mrf.mxu0
        %v2501 = vadd.f32 0.0, %v2500
        %v2502 = vpop.f32.mrf.mxu0
        %v2503 = vpop.f32.mrf.mxu0
        %v2504 = vadd.f32 0.0, %v2503
        %v2505 = vpop.f32.mrf.mxu0
        %2506 = vmatprep.mubr.bf16.mxu0 0
        %2507 = vmatmul.mubr.bf16.gmra.mxu0 %v2375
        %v2508 = vpop.f32.mrf.mxu0
        %v2509 = vadd.f32 0.0, %v2508
        %v2510 = vpop.f32.mrf.mxu0
        %v2511 = vpop.f32.mrf.mxu0
        %v2512 = vadd.f32 0.0, %v2511
        %v2513 = vpop.f32.mrf.mxu0
        %2514 = vmatprep.mubr.bf16.mxu0 0
        %2515 = vmatmul.mubr.bf16.gmra.mxu0 %v2376
        %v2516 = vpop.f32.mrf.mxu0
        %v2517 = vadd.f32 0.0, %v2516
        %v2518 = vpop.f32.mrf.mxu0
        %v2519 = vpop.f32.mrf.mxu0
        %v2520 = vadd.f32 0.0, %v2519
        %v2521 = vpop.f32.mrf.mxu0
        %2522 = vmatprep.mubr.bf16.mxu0 0
        %2523 = vmatmul.mubr.bf16.gmra.mxu0 %v2377
        %v2524 = vpop.f32.mrf.mxu0
        %v2525 = vadd.f32 0.0, %v2524
        %v2526 = vpop.f32.mrf.mxu0
        %v2527 = vpop.f32.mrf.mxu0
        %v2528 = vadd.f32 0.0, %v2527
        %v2529 = vpop.f32.mrf.mxu0
        %2530 = vdwg.mxu0
        %v2531 = vadd.f32 %v2281, %v2469
        %v2532 = vadd.f32 %v2282, %v2472
        %v2533 = vadd.f32 %v2283, %v2477
        %v2534 = vadd.f32 %v2284, %v2480
        %v2535 = vadd.f32 %v2285, %v2485
        %v2536 = vadd.f32 %v2286, %v2488
        %v2537 = vadd.f32 %v2287, %v2493
        %v2538 = vadd.f32 %v2288, %v2496
        %v2539 = vadd.f32 %v2289, %v2501
        %v2540 = vadd.f32 %v2290, %v2504
        %v2541 = vadd.f32 %v2291, %v2509
        %v2542 = vadd.f32 %v2292, %v2512
        %v2543 = vadd.f32 %v2293, %v2517
        %v2544 = vadd.f32 %v2294, %v2520
        %v2545 = vadd.f32 %v2295, %v2525
        %v2546 = vadd.f32 %v2296, %v2528
        %v2548 = vshrl.u32 %v2297, 16
        %v2550 = vrot.slane %v2548, 4
        %v2551 = vshll.u32 %v2297, 16
        %v2553 = vrot.slane %v2551, 5
        %v2554 = vor.u32 %v2550, %v2553
        %v2555 = vrot.slane %v2554, 4
        %v2557 = vshll.u32 %v2298, 16
        %v2559 = vrot.slane %v2557, 5
        %v2560 = vsel %vm1440, %v2555, %v2559
        %v2561 = vshrl.u32 %v2298, 16
        %v2563 = vrot.slane %v2561, 4
        %v2564 = vor.u32 %v2563, %v2559
        %v2565 = vrot.slane %v2564, 4
        %v2567 = vshll.u32 %v2299, 16
        %v2569 = vrot.slane %v2567, 5
        %v2570 = vsel %vm1440, %v2565, %v2569
        %v2572 = vshrl.u32 %v2300, 16
        %v2574 = vrot.slane %v2572, 4
        %v2575 = vshll.u32 %v2300, 16
        %v2577 = vrot.slane %v2575, 5
        %v2578 = vor.u32 %v2574, %v2577
        %v2579 = vrot.slane %v2578, 4
        %v2581 = vshll.u32 %v2301, 16
        %v2583 = vrot.slane %v2581, 5
        %v2584 = vsel %vm1440, %v2579, %v2583
        %v2585 = vshrl.u32 %v2301, 16
        %v2587 = vrot.slane %v2585, 4
        %v2588 = vor.u32 %v2587, %v2583
        %v2589 = vrot.slane %v2588, 4
        %v2591 = vshll.u32 %v2302, 16
        %v2593 = vrot.slane %v2591, 5
        %v2594 = vsel %vm1440, %v2589, %v2593
        %v2596 = vshrl.u32 %v2303, 16
        %v2598 = vrot.slane %v2596, 4
        %v2599 = vshll.u32 %v2303, 16
        %v2601 = vrot.slane %v2599, 5
        %v2602 = vor.u32 %v2598, %v2601
        %v2603 = vrot.slane %v2602, 4
        %v2605 = vshll.u32 %v2304, 16
        %v2607 = vrot.slane %v2605, 5
        %v2608 = vsel %vm1440, %v2603, %v2607
        %v2609 = vshrl.u32 %v2304, 16
        %v2611 = vrot.slane %v2609, 4
        %v2612 = vor.u32 %v2611, %v2607
        %v2613 = vrot.slane %v2612, 4
        %v2615 = vshll.u32 %v2305, 16
        %v2617 = vrot.slane %v2615, 5
        %v2618 = vsel %vm1440, %v2613, %v2617
        %v2620 = vshrl.u32 %v2306, 16
        %v2622 = vrot.slane %v2620, 4
        %v2623 = vshll.u32 %v2306, 16
        %v2625 = vrot.slane %v2623, 5
        %v2626 = vor.u32 %v2622, %v2625
        %v2627 = vrot.slane %v2626, 4
        %v2629 = vshll.u32 %v2307, 16
        %v2631 = vrot.slane %v2629, 5
        %v2632 = vsel %vm1440, %v2627, %v2631
        %v2633 = vshrl.u32 %v2307, 16
        %v2635 = vrot.slane %v2633, 4
        %v2636 = vor.u32 %v2635, %v2631
        %v2637 = vrot.slane %v2636, 4
        %v2639 = vshll.u32 %v2308, 16
        %v2641 = vrot.slane %v2639, 5
        %v2642 = vsel %vm1440, %v2637, %v2641
        %v2644 = vshrl.u32 %v2309, 16
        %v2646 = vrot.slane %v2644, 4
        %v2647 = vshll.u32 %v2309, 16
        %v2649 = vrot.slane %v2647, 5
        %v2650 = vor.u32 %v2646, %v2649
        %v2651 = vrot.slane %v2650, 4
        %v2653 = vshll.u32 %v2310, 16
        %v2655 = vrot.slane %v2653, 5
        %v2656 = vsel %vm1440, %v2651, %v2655
        %v2657 = vshrl.u32 %v2310, 16
        %v2659 = vrot.slane %v2657, 4
        %v2660 = vor.u32 %v2659, %v2655
        %v2661 = vrot.slane %v2660, 4
        %v2663 = vshll.u32 %v2311, 16
        %v2665 = vrot.slane %v2663, 5
        %v2666 = vsel %vm1440, %v2661, %v2665
        %v2668 = vshrl.u32 %v2312, 16
        %v2670 = vrot.slane %v2668, 4
        %v2671 = vshll.u32 %v2312, 16
        %v2673 = vrot.slane %v2671, 5
        %v2674 = vor.u32 %v2670, %v2673
        %v2675 = vrot.slane %v2674, 4
        %v2677 = vshll.u32 %v2313, 16
        %v2679 = vrot.slane %v2677, 5
        %v2680 = vsel %vm1440, %v2675, %v2679
        %v2681 = vshrl.u32 %v2313, 16
        %v2683 = vrot.slane %v2681, 4
        %v2684 = vor.u32 %v2683, %v2679
        %v2685 = vrot.slane %v2684, 4
        %v2687 = vshll.u32 %v2314, 16
        %v2689 = vrot.slane %v2687, 5
        %v2690 = vsel %vm1440, %v2685, %v2689
        %v2692 = vshrl.u32 %v2315, 16
        %v2694 = vrot.slane %v2692, 4
        %v2695 = vshll.u32 %v2315, 16
        %v2697 = vrot.slane %v2695, 5
        %v2698 = vor.u32 %v2694, %v2697
        %v2699 = vrot.slane %v2698, 4
        %v2701 = vshll.u32 %v2316, 16
        %v2703 = vrot.slane %v2701, 5
        %v2704 = vsel %vm1440, %v2699, %v2703
        %v2705 = vshrl.u32 %v2316, 16
        %v2707 = vrot.slane %v2705, 4
        %v2708 = vor.u32 %v2707, %v2703
        %v2709 = vrot.slane %v2708, 4
        %v2711 = vshll.u32 %v2317, 16
        %v2713 = vrot.slane %v2711, 5
        %v2714 = vsel %vm1440, %v2709, %v2713
        %v2716 = vshrl.u32 %v2318, 16
        %v2718 = vrot.slane %v2716, 4
        %v2719 = vshll.u32 %v2318, 16
        %v2721 = vrot.slane %v2719, 5
        %v2722 = vor.u32 %v2718, %v2721
        %v2723 = vrot.slane %v2722, 4
        %v2725 = vshll.u32 %v2319, 16
        %v2727 = vrot.slane %v2725, 5
        %v2728 = vsel %vm1440, %v2723, %v2727
        %v2729 = vshrl.u32 %v2319, 16
        %v2731 = vrot.slane %v2729, 4
        %v2732 = vor.u32 %v2731, %v2727
        %v2733 = vrot.slane %v2732, 4
        %v2735 = vshll.u32 %v2320, 16
        %v2737 = vrot.slane %v2735, 5
        %v2738 = vsel %vm1440, %v2733, %v2737
        %s2739 = scalar_lea.vmem %s4, 256
        %v2740 = vld [vmem:[%s2739] sm:$0xf]
        %v2741 = vld [vmem:[%s2739 + $0x4] sm:$0xf]
        %v2742 = vld [vmem:[%s2739 + $0x8] sm:$0xf]
        %v2743 = vld [vmem:[%s2739 + $0xc] sm:$0xf]
        %v2744 = vld [vmem:[%s2739 + $0x10] sm:$0xf]
        %v2745 = vld [vmem:[%s2739 + $0x14] sm:$0xf]
        %v2746 = vld [vmem:[%s2739 + $0x18] sm:$0xf]
        %v2747 = vld [vmem:[%s2739 + $0x1c] sm:$0xf]
        %v2748 = vld [vmem:[%s2739 + $0x20] sm:$0xf]
        %v2749 = vld [vmem:[%s2739 + $0x24] sm:$0xf]
        %v2750 = vld [vmem:[%s2739 + $0x28] sm:$0xf]
        %v2751 = vld [vmem:[%s2739 + $0x2c] sm:$0xf]
        %v2752 = vld [vmem:[%s2739 + $0x30] sm:$0xf]
        %v2753 = vld [vmem:[%s2739 + $0x34] sm:$0xf]
        %v2754 = vld [vmem:[%s2739 + $0x38] sm:$0xf]
        %v2755 = vld [vmem:[%s2739 + $0x3c] sm:$0xf]
        %v2756 = vunpack.c.l.b16 %v2560
        %v2757 = vunpack.c.l.b16 %v2570
        %v2758 = vunpack.c.l.b16 %v2584
        %v2759 = vunpack.c.l.b16 %v2594
        %v2760 = vunpack.c.l.b16 %v2608
        %v2761 = vunpack.c.l.b16 %v2618
        %v2762 = vunpack.c.l.b16 %v2632
        %v2763 = vunpack.c.l.b16 %v2642
        %v2764 = vunpack.c.l.b16 %v2656
        %v2765 = vunpack.c.l.b16 %v2666
        %v2766 = vunpack.c.l.b16 %v2680
        %v2767 = vunpack.c.l.b16 %v2690
        %v2768 = vunpack.c.l.b16 %v2704
        %v2769 = vunpack.c.l.b16 %v2714
        %v2770 = vunpack.c.l.b16 %v2728
        %v2771 = vunpack.c.l.b16 %v2738
        %v2772 = vpack.c.b16 %v2757, %v2756
        %v2773 = vpack.c.b16 %v2759, %v2758
        %v2774 = vpack.c.b16 %v2761, %v2760
        %v2775 = vpack.c.b16 %v2763, %v2762
        %v2776 = vpack.c.b16 %v2765, %v2764
        %v2777 = vpack.c.b16 %v2767, %v2766
        %v2778 = vpack.c.b16 %v2769, %v2768
        %v2779 = vpack.c.b16 %v2771, %v2770
        %v2804 = vunpack.c.l.b16 %v2740
        %v2805 = vunpack.c.l.b16 %v2741
        %v2806 = vunpack.c.l.b16 %v2742
        %v2807 = vunpack.c.l.b16 %v2743
        %v2808 = vunpack.c.l.b16 %v2744
        %v2809 = vunpack.c.l.b16 %v2745
        %v2810 = vunpack.c.l.b16 %v2746
        %v2811 = vunpack.c.l.b16 %v2747
        %v2812 = vunpack.c.l.b16 %v2748
        %v2813 = vunpack.c.l.b16 %v2749
        %v2814 = vunpack.c.l.b16 %v2750
        %v2815 = vunpack.c.l.b16 %v2751
        %v2816 = vunpack.c.l.b16 %v2752
        %v2817 = vunpack.c.l.b16 %v2753
        %v2818 = vunpack.c.l.b16 %v2754
        %v2819 = vunpack.c.l.b16 %v2755
        %v2820 = vpack.c.b16 %v2805, %v2804
        %v2821 = vpack.c.b16 %v2807, %v2806
        %v2822 = vpack.c.b16 %v2809, %v2808
        %v2823 = vpack.c.b16 %v2811, %v2810
        %v2824 = vpack.c.b16 %v2813, %v2812
        %v2825 = vpack.c.b16 %v2815, %v2814
        %v2826 = vpack.c.b16 %v2817, %v2816
        %v2827 = vpack.c.b16 %v2819, %v2818
        %2836 = vmatprep.subr.bf16.mxu0 0
        %2837 = vmatpush1.bf16.msra.mxu0 %v2827
        %2838 = vmatprep.subr.bf16.mxu0 0
        %2839 = vmatpush1.bf16.msra.mxu0 %v2826
        %2840 = vmatprep.subr.bf16.mxu0 0
        %2841 = vmatpush1.bf16.msra.mxu0 %v2825
        %2842 = vmatprep.subr.bf16.mxu0 0
        %2843 = vmatpush1.bf16.msra.mxu0 %v2824
        %2844 = vmatprep.subr.bf16.mxu0 0
        %2845 = vmatpush1.bf16.msra.mxu0 %v2823
        %2846 = vmatprep.subr.bf16.mxu0 0
        %2847 = vmatpush1.bf16.msra.mxu0 %v2822
        %2848 = vmatprep.subr.bf16.mxu0 0
        %2849 = vmatpush1.bf16.msra.mxu0 %v2821
        %2850 = vmatprep.subr.bf16.mxu0 0
        %2851 = vmatpush1.bf16.msra.mxu0 %v2820
        %2852 = vmatprep.subr.bf16.mxu0 0
        %2853 = vmatpush2.bf16.msra.mxu0 0
        %2854 = vmatprep.subr.bf16.mxu0 0
        %2855 = vmatpush2.bf16.msra.mxu0 0
        %2856 = vmatprep.subr.bf16.mxu0 0
        %2857 = vmatpush2.bf16.msra.mxu0 0
        %2858 = vmatprep.subr.bf16.mxu0 0
        %2859 = vmatpush2.bf16.msra.mxu0 0
        %2860 = vmatprep.subr.bf16.mxu0 0
        %2861 = vmatpush2.bf16.msra.mxu0 0
        %2862 = vmatprep.subr.bf16.mxu0 0
        %2863 = vmatpush2.bf16.msra.mxu0 0
        %2864 = vmatprep.subr.bf16.mxu0 0
        %2865 = vmatpush2.bf16.msra.mxu0 0
        %2866 = vmatprep.subr.bf16.mxu0 0
        %2867 = vmatpush2.bf16.msra.mxu0 0
        %2868 = vmatprep.mubr.bf16.mxu0 0
        %2869 = vmatmul.mubr.bf16.gmra.mxu0 %v2772
        %v2870 = vpop.f32.mrf.mxu0
        %v2871 = vadd.f32 0.0, %v2870
        %v2872 = vpop.f32.mrf.mxu0
        %v2873 = vpop.f32.mrf.mxu0
        %v2874 = vadd.f32 0.0, %v2873
        %v2875 = vpop.f32.mrf.mxu0
        %2876 = vmatprep.mubr.bf16.mxu0 0
        %2877 = vmatmul.mubr.bf16.gmra.mxu0 %v2773
        %v2878 = vpop.f32.mrf.mxu0
        %v2879 = vadd.f32 0.0, %v2878
        %v2880 = vpop.f32.mrf.mxu0
        %v2881 = vpop.f32.mrf.mxu0
        %v2882 = vadd.f32 0.0, %v2881
        %v2883 = vpop.f32.mrf.mxu0
        %2884 = vmatprep.mubr.bf16.mxu0 0
        %2885 = vmatmul.mubr.bf16.gmra.mxu0 %v2774
        %v2886 = vpop.f32.mrf.mxu0
        %v2887 = vadd.f32 0.0, %v2886
        %v2888 = vpop.f32.mrf.mxu0
        %v2889 = vpop.f32.mrf.mxu0
        %v2890 = vadd.f32 0.0, %v2889
        %v2891 = vpop.f32.mrf.mxu0
        %2892 = vmatprep.mubr.bf16.mxu0 0
        %2893 = vmatmul.mubr.bf16.gmra.mxu0 %v2775
        %v2894 = vpop.f32.mrf.mxu0
        %v2895 = vadd.f32 0.0, %v2894
        %v2896 = vpop.f32.mrf.mxu0
        %v2897 = vpop.f32.mrf.mxu0
        %v2898 = vadd.f32 0.0, %v2897
        %v2899 = vpop.f32.mrf.mxu0
        %2900 = vmatprep.mubr.bf16.mxu0 0
        %2901 = vmatmul.mubr.bf16.gmra.mxu0 %v2776
        %v2902 = vpop.f32.mrf.mxu0
        %v2903 = vadd.f32 0.0, %v2902
        %v2904 = vpop.f32.mrf.mxu0
        %v2905 = vpop.f32.mrf.mxu0
        %v2906 = vadd.f32 0.0, %v2905
        %v2907 = vpop.f32.mrf.mxu0
        %2908 = vmatprep.mubr.bf16.mxu0 0
        %2909 = vmatmul.mubr.bf16.gmra.mxu0 %v2777
        %v2910 = vpop.f32.mrf.mxu0
        %v2911 = vadd.f32 0.0, %v2910
        %v2912 = vpop.f32.mrf.mxu0
        %v2913 = vpop.f32.mrf.mxu0
        %v2914 = vadd.f32 0.0, %v2913
        %v2915 = vpop.f32.mrf.mxu0
        %2916 = vmatprep.mubr.bf16.mxu0 0
        %2917 = vmatmul.mubr.bf16.gmra.mxu0 %v2778
        %v2918 = vpop.f32.mrf.mxu0
        %v2919 = vadd.f32 0.0, %v2918
        %v2920 = vpop.f32.mrf.mxu0
        %v2921 = vpop.f32.mrf.mxu0
        %v2922 = vadd.f32 0.0, %v2921
        %v2923 = vpop.f32.mrf.mxu0
        %2924 = vmatprep.mubr.bf16.mxu0 0
        %2925 = vmatmul.mubr.bf16.gmra.mxu0 %v2779
        %v2926 = vpop.f32.mrf.mxu0
        %v2927 = vadd.f32 0.0, %v2926
        %v2928 = vpop.f32.mrf.mxu0
        %v2929 = vpop.f32.mrf.mxu0
        %v2930 = vadd.f32 0.0, %v2929
        %v2931 = vpop.f32.mrf.mxu0
        %2932 = vdwg.mxu0
        %v2933 = vadd.f32 %v2531, %v2871
        %v2934 = vadd.f32 %v2532, %v2874
        %v2935 = vadd.f32 %v2533, %v2879
        %v2936 = vadd.f32 %v2534, %v2882
        %v2937 = vadd.f32 %v2535, %v2887
        %v2938 = vadd.f32 %v2536, %v2890
        %v2939 = vadd.f32 %v2537, %v2895
        %v2940 = vadd.f32 %v2538, %v2898
        %v2941 = vadd.f32 %v2539, %v2903
        %v2942 = vadd.f32 %v2540, %v2906
        %v2943 = vadd.f32 %v2541, %v2911
        %v2944 = vadd.f32 %v2542, %v2914
        %v2945 = vadd.f32 %v2543, %v2919
        %v2946 = vadd.f32 %v2544, %v2922
        %v2947 = vadd.f32 %v2545, %v2927
        %v2948 = vadd.f32 %v2546, %v2930
        %v2957 = vrot.slane %v2297, 5
        %v2958 = vrot.slane %v2957, 4
        %v2959 = vrot.slane %v2298, 5
        %v2960 = vsel %vm2030, %v2958, %v2959
        %v2961 = vrot.slane %v2959, 4
        %v2962 = vrot.slane %v2299, 5
        %v2963 = vsel %vm2030, %v2961, %v2962
        %v2964 = vrot.slane %v2300, 5
        %v2965 = vrot.slane %v2964, 4
        %v2966 = vrot.slane %v2301, 5
        %v2967 = vsel %vm2030, %v2965, %v2966
        %v2968 = vrot.slane %v2966, 4
        %v2969 = vrot.slane %v2302, 5
        %v2970 = vsel %vm2030, %v2968, %v2969
        %v2971 = vrot.slane %v2303, 5
        %v2972 = vrot.slane %v2971, 4
        %v2973 = vrot.slane %v2304, 5
        %v2974 = vsel %vm2030, %v2972, %v2973
        %v2975 = vrot.slane %v2973, 4
        %v2976 = vrot.slane %v2305, 5
        %v2977 = vsel %vm2030, %v2975, %v2976
        %v2978 = vrot.slane %v2306, 5
        %v2979 = vrot.slane %v2978, 4
        %v2980 = vrot.slane %v2307, 5
        %v2981 = vsel %vm2030, %v2979, %v2980
        %v2982 = vrot.slane %v2980, 4
        %v2983 = vrot.slane %v2308, 5
        %v2984 = vsel %vm2030, %v2982, %v2983
        %v2985 = vrot.slane %v2309, 5
        %v2986 = vrot.slane %v2985, 4
        %v2987 = vrot.slane %v2310, 5
        %v2988 = vsel %vm2030, %v2986, %v2987
        %v2989 = vrot.slane %v2987, 4
        %v2990 = vrot.slane %v2311, 5
        %v2991 = vsel %vm2030, %v2989, %v2990
        %v2992 = vrot.slane %v2312, 5
        %v2993 = vrot.slane %v2992, 4
        %v2994 = vrot.slane %v2313, 5
        %v2995 = vsel %vm2030, %v2993, %v2994
        %v2996 = vrot.slane %v2994, 4
        %v2997 = vrot.slane %v2314, 5
        %v2998 = vsel %vm2030, %v2996, %v2997
        %v2999 = vrot.slane %v2315, 5
        %v3000 = vrot.slane %v2999, 4
        %v3001 = vrot.slane %v2316, 5
        %v3002 = vsel %vm2030, %v3000, %v3001
        %v3003 = vrot.slane %v3001, 4
        %v3004 = vrot.slane %v2317, 5
        %v3005 = vsel %vm2030, %v3003, %v3004
        %v3006 = vrot.slane %v2318, 5
        %v3007 = vrot.slane %v3006, 4
        %v3008 = vrot.slane %v2319, 5
        %v3009 = vsel %vm2030, %v3007, %v3008
        %v3010 = vrot.slane %v3008, 4
        %v3011 = vrot.slane %v2320, 5
        %v3012 = vsel %vm2030, %v3010, %v3011
        %s3013 = scalar_lea.vmem %s4, 320
        %v3014 = vld [vmem:[%s3013] sm:$0xf]
        %v3015 = vld [vmem:[%s3013 + $0x4] sm:$0xf]
        %v3016 = vld [vmem:[%s3013 + $0x8] sm:$0xf]
        %v3017 = vld [vmem:[%s3013 + $0xc] sm:$0xf]
        %v3018 = vld [vmem:[%s3013 + $0x10] sm:$0xf]
        %v3019 = vld [vmem:[%s3013 + $0x14] sm:$0xf]
        %v3020 = vld [vmem:[%s3013 + $0x18] sm:$0xf]
        %v3021 = vld [vmem:[%s3013 + $0x1c] sm:$0xf]
        %v3022 = vld [vmem:[%s3013 + $0x20] sm:$0xf]
        %v3023 = vld [vmem:[%s3013 + $0x24] sm:$0xf]
        %v3024 = vld [vmem:[%s3013 + $0x28] sm:$0xf]
        %v3025 = vld [vmem:[%s3013 + $0x2c] sm:$0xf]
        %v3026 = vld [vmem:[%s3013 + $0x30] sm:$0xf]
        %v3027 = vld [vmem:[%s3013 + $0x34] sm:$0xf]
        %v3028 = vld [vmem:[%s3013 + $0x38] sm:$0xf]
        %v3029 = vld [vmem:[%s3013 + $0x3c] sm:$0xf]
        %v3030 = vunpack.c.l.b16 %v2960
        %v3031 = vunpack.c.l.b16 %v2963
        %v3032 = vunpack.c.l.b16 %v2967
        %v3033 = vunpack.c.l.b16 %v2970
        %v3034 = vunpack.c.l.b16 %v2974
        %v3035 = vunpack.c.l.b16 %v2977
        %v3036 = vunpack.c.l.b16 %v2981
        %v3037 = vunpack.c.l.b16 %v2984
        %v3038 = vunpack.c.l.b16 %v2988
        %v3039 = vunpack.c.l.b16 %v2991
        %v3040 = vunpack.c.l.b16 %v2995
        %v3041 = vunpack.c.l.b16 %v2998
        %v3042 = vunpack.c.l.b16 %v3002
        %v3043 = vunpack.c.l.b16 %v3005
        %v3044 = vunpack.c.l.b16 %v3009
        %v3045 = vunpack.c.l.b16 %v3012
        %v3046 = vpack.c.b16 %v3031, %v3030
        %v3047 = vpack.c.b16 %v3033, %v3032
        %v3048 = vpack.c.b16 %v3035, %v3034
        %v3049 = vpack.c.b16 %v3037, %v3036
        %v3050 = vpack.c.b16 %v3039, %v3038
        %v3051 = vpack.c.b16 %v3041, %v3040
        %v3052 = vpack.c.b16 %v3043, %v3042
        %v3053 = vpack.c.b16 %v3045, %v3044
        %v3078 = vunpack.c.l.b16 %v3014
        %v3079 = vunpack.c.l.b16 %v3015
        %v3080 = vunpack.c.l.b16 %v3016
        %v3081 = vunpack.c.l.b16 %v3017
        %v3082 = vunpack.c.l.b16 %v3018
        %v3083 = vunpack.c.l.b16 %v3019
        %v3084 = vunpack.c.l.b16 %v3020
        %v3085 = vunpack.c.l.b16 %v3021
        %v3086 = vunpack.c.l.b16 %v3022
        %v3087 = vunpack.c.l.b16 %v3023
        %v3088 = vunpack.c.l.b16 %v3024
        %v3089 = vunpack.c.l.b16 %v3025
        %v3090 = vunpack.c.l.b16 %v3026
        %v3091 = vunpack.c.l.b16 %v3027
        %v3092 = vunpack.c.l.b16 %v3028
        %v3093 = vunpack.c.l.b16 %v3029
        %v3094 = vpack.c.b16 %v3079, %v3078
        %v3095 = vpack.c.b16 %v3081, %v3080
        %v3096 = vpack.c.b16 %v3083, %v3082
        %v3097 = vpack.c.b16 %v3085, %v3084
        %v3098 = vpack.c.b16 %v3087, %v3086
        %v3099 = vpack.c.b16 %v3089, %v3088
        %v3100 = vpack.c.b16 %v3091, %v3090
        %v3101 = vpack.c.b16 %v3093, %v3092
        %3110 = vmatprep.subr.bf16.mxu0 0
        %3111 = vmatpush1.bf16.msra.mxu0 %v3101
        %3112 = vmatprep.subr.bf16.mxu0 0
        %3113 = vmatpush1.bf16.msra.mxu0 %v3100
        %3114 = vmatprep.subr.bf16.mxu0 0
        %3115 = vmatpush1.bf16.msra.mxu0 %v3099
        %3116 = vmatprep.subr.bf16.mxu0 0
        %3117 = vmatpush1.bf16.msra.mxu0 %v3098
        %3118 = vmatprep.subr.bf16.mxu0 0
        %3119 = vmatpush1.bf16.msra.mxu0 %v3097
        %3120 = vmatprep.subr.bf16.mxu0 0
        %3121 = vmatpush1.bf16.msra.mxu0 %v3096
        %3122 = vmatprep.subr.bf16.mxu0 0
        %3123 = vmatpush1.bf16.msra.mxu0 %v3095
        %3124 = vmatprep.subr.bf16.mxu0 0
        %3125 = vmatpush1.bf16.msra.mxu0 %v3094
        %3126 = vmatprep.subr.bf16.mxu0 0
        %3127 = vmatpush2.bf16.msra.mxu0 0
        %3128 = vmatprep.subr.bf16.mxu0 0
        %3129 = vmatpush2.bf16.msra.mxu0 0
        %3130 = vmatprep.subr.bf16.mxu0 0
        %3131 = vmatpush2.bf16.msra.mxu0 0
        %3132 = vmatprep.subr.bf16.mxu0 0
        %3133 = vmatpush2.bf16.msra.mxu0 0
        %3134 = vmatprep.subr.bf16.mxu0 0
        %3135 = vmatpush2.bf16.msra.mxu0 0
        %3136 = vmatprep.subr.bf16.mxu0 0
        %3137 = vmatpush2.bf16.msra.mxu0 0
        %3138 = vmatprep.subr.bf16.mxu0 0
        %3139 = vmatpush2.bf16.msra.mxu0 0
        %3140 = vmatprep.subr.bf16.mxu0 0
        %3141 = vmatpush2.bf16.msra.mxu0 0
        %3142 = vmatprep.mubr.bf16.mxu0 0
        %3143 = vmatmul.mubr.bf16.gmra.mxu0 %v3046
        %v3144 = vpop.f32.mrf.mxu0
        %v3145 = vadd.f32 0.0, %v3144
        %v3146 = vpop.f32.mrf.mxu0
        %v3147 = vpop.f32.mrf.mxu0
        %v3148 = vadd.f32 0.0, %v3147
        %v3149 = vpop.f32.mrf.mxu0
        %3150 = vmatprep.mubr.bf16.mxu0 0
        %3151 = vmatmul.mubr.bf16.gmra.mxu0 %v3047
        %v3152 = vpop.f32.mrf.mxu0
        %v3153 = vadd.f32 0.0, %v3152
        %v3154 = vpop.f32.mrf.mxu0
        %v3155 = vpop.f32.mrf.mxu0
        %v3156 = vadd.f32 0.0, %v3155
        %v3157 = vpop.f32.mrf.mxu0
        %3158 = vmatprep.mubr.bf16.mxu0 0
        %3159 = vmatmul.mubr.bf16.gmra.mxu0 %v3048
        %v3160 = vpop.f32.mrf.mxu0
        %v3161 = vadd.f32 0.0, %v3160
        %v3162 = vpop.f32.mrf.mxu0
        %v3163 = vpop.f32.mrf.mxu0
        %v3164 = vadd.f32 0.0, %v3163
        %v3165 = vpop.f32.mrf.mxu0
        %3166 = vmatprep.mubr.bf16.mxu0 0
        %3167 = vmatmul.mubr.bf16.gmra.mxu0 %v3049
        %v3168 = vpop.f32.mrf.mxu0
        %v3169 = vadd.f32 0.0, %v3168
        %v3170 = vpop.f32.mrf.mxu0
        %v3171 = vpop.f32.mrf.mxu0
        %v3172 = vadd.f32 0.0, %v3171
        %v3173 = vpop.f32.mrf.mxu0
        %3174 = vmatprep.mubr.bf16.mxu0 0
        %3175 = vmatmul.mubr.bf16.gmra.mxu0 %v3050
        %v3176 = vpop.f32.mrf.mxu0
        %v3177 = vadd.f32 0.0, %v3176
        %v3178 = vpop.f32.mrf.mxu0
        %v3179 = vpop.f32.mrf.mxu0
        %v3180 = vadd.f32 0.0, %v3179
        %v3181 = vpop.f32.mrf.mxu0
        %3182 = vmatprep.mubr.bf16.mxu0 0
        %3183 = vmatmul.mubr.bf16.gmra.mxu0 %v3051
        %v3184 = vpop.f32.mrf.mxu0
        %v3185 = vadd.f32 0.0, %v3184
        %v3186 = vpop.f32.mrf.mxu0
        %v3187 = vpop.f32.mrf.mxu0
        %v3188 = vadd.f32 0.0, %v3187
        %v3189 = vpop.f32.mrf.mxu0
        %3190 = vmatprep.mubr.bf16.mxu0 0
        %3191 = vmatmul.mubr.bf16.gmra.mxu0 %v3052
        %v3192 = vpop.f32.mrf.mxu0
        %v3193 = vadd.f32 0.0, %v3192
        %v3194 = vpop.f32.mrf.mxu0
        %v3195 = vpop.f32.mrf.mxu0
        %v3196 = vadd.f32 0.0, %v3195
        %v3197 = vpop.f32.mrf.mxu0
        %3198 = vmatprep.mubr.bf16.mxu0 0
        %3199 = vmatmul.mubr.bf16.gmra.mxu0 %v3053
        %v3200 = vpop.f32.mrf.mxu0
        %v3201 = vadd.f32 0.0, %v3200
        %v3202 = vpop.f32.mrf.mxu0
        %v3203 = vpop.f32.mrf.mxu0
        %v3204 = vadd.f32 0.0, %v3203
        %v3205 = vpop.f32.mrf.mxu0
        %3206 = vdwg.mxu0
        %v3207 = vadd.f32 %v2933, %v3145
        %v3208 = vadd.f32 %v2934, %v3148
        %v3209 = vadd.f32 %v2935, %v3153
        %v3210 = vadd.f32 %v2936, %v3156
        %v3211 = vadd.f32 %v2937, %v3161
        %v3212 = vadd.f32 %v2938, %v3164
        %v3213 = vadd.f32 %v2939, %v3169
        %v3214 = vadd.f32 %v2940, %v3172
        %v3215 = vadd.f32 %v2941, %v3177
        %v3216 = vadd.f32 %v2942, %v3180
        %v3217 = vadd.f32 %v2943, %v3185
        %v3218 = vadd.f32 %v2944, %v3188
        %v3219 = vadd.f32 %v2945, %v3193
        %v3220 = vadd.f32 %v2946, %v3196
        %v3221 = vadd.f32 %v2947, %v3201
        %v3222 = vadd.f32 %v2948, %v3204
        %s3223 = scalar_lea.vmem [#allocation2], 24
        %v3224 = vld [vmem:[%s3223] sm:$0xf]
        %v3225 = vld [vmem:[%s3223 + $0x4] sm:$0xf]
        %v3226 = vld [vmem:[%s3223 + $0x8] sm:$0x1]
        %v3227 = vld [vmem:[%s3223 + $0xc] sm:$0xf]
        %v3228 = vld [vmem:[%s3223 + $0x10] sm:$0xf]
        %v3229 = vld [vmem:[%s3223 + $0x14] sm:$0x1]
        %v3230 = vld [vmem:[%s3223 + $0x18] sm:$0xf]
        %v3231 = vld [vmem:[%s3223 + $0x1c] sm:$0xf]
        %v3232 = vld [vmem:[%s3223 + $0x20] sm:$0x1]
        %v3233 = vld [vmem:[%s3223 + $0x24] sm:$0xf]
        %v3234 = vld [vmem:[%s3223 + $0x28] sm:$0xf]
        %v3235 = vld [vmem:[%s3223 + $0x2c] sm:$0x1]
        %v3236 = vld [vmem:[%s3223 + $0x30] sm:$0xf]
        %v3237 = vld [vmem:[%s3223 + $0x34] sm:$0xf]
        %v3238 = vld [vmem:[%s3223 + $0x38] sm:$0x1]
        %v3239 = vld [vmem:[%s3223 + $0x3c] sm:$0xf]
        %v3240 = vld [vmem:[%s3223 + $0x40] sm:$0xf]
        %v3241 = vld [vmem:[%s3223 + $0x44] sm:$0x1]
        %v3242 = vld [vmem:[%s3223 + $0x48] sm:$0xf]
        %v3243 = vld [vmem:[%s3223 + $0x4c] sm:$0xf]
        %v3244 = vld [vmem:[%s3223 + $0x50] sm:$0x1]
        %v3245 = vld [vmem:[%s3223 + $0x54] sm:$0xf]
        %v3246 = vld [vmem:[%s3223 + $0x58] sm:$0xf]
        %v3247 = vld [vmem:[%s3223 + $0x5c] sm:$0x1]
        %s3248 = scalar_lea.vmem %s4, 384
        %v3249 = vld [vmem:[%s3248] sm:$0xf]
        %v3250 = vld [vmem:[%s3248 + $0x4] sm:$0xf]
        %v3251 = vld [vmem:[%s3248 + $0x8] sm:$0xf]
        %v3252 = vld [vmem:[%s3248 + $0xc] sm:$0xf]
        %v3253 = vld [vmem:[%s3248 + $0x10] sm:$0xf]
        %v3254 = vld [vmem:[%s3248 + $0x14] sm:$0xf]
        %v3255 = vld [vmem:[%s3248 + $0x18] sm:$0xf]
        %v3256 = vld [vmem:[%s3248 + $0x1c] sm:$0xf]
        %v3257 = vld [vmem:[%s3248 + $0x20] sm:$0xf]
        %v3258 = vld [vmem:[%s3248 + $0x24] sm:$0xf]
        %v3259 = vld [vmem:[%s3248 + $0x28] sm:$0xf]
        %v3260 = vld [vmem:[%s3248 + $0x2c] sm:$0xf]
        %v3261 = vld [vmem:[%s3248 + $0x30] sm:$0xf]
        %v3262 = vld [vmem:[%s3248 + $0x34] sm:$0xf]
        %v3263 = vld [vmem:[%s3248 + $0x38] sm:$0xf]
        %v3264 = vld [vmem:[%s3248 + $0x3c] sm:$0xf]
        %v3281 = vunpack.c.l.b16 %v3224
        %v3282 = vunpack.c.l.b16 %v3225
        %v3283 = vunpack.c.l.b16 %v3227
        %v3284 = vunpack.c.l.b16 %v3228
        %v3285 = vunpack.c.l.b16 %v3230
        %v3286 = vunpack.c.l.b16 %v3231
        %v3287 = vunpack.c.l.b16 %v3233
        %v3288 = vunpack.c.l.b16 %v3234
        %v3289 = vunpack.c.l.b16 %v3236
        %v3290 = vunpack.c.l.b16 %v3237
        %v3291 = vunpack.c.l.b16 %v3239
        %v3292 = vunpack.c.l.b16 %v3240
        %v3293 = vunpack.c.l.b16 %v3242
        %v3294 = vunpack.c.l.b16 %v3243
        %v3295 = vunpack.c.l.b16 %v3245
        %v3296 = vunpack.c.l.b16 %v3246
        %v3297 = vpack.c.b16 %v3282, %v3281
        %v3298 = vpack.c.b16 %v3284, %v3283
        %v3299 = vpack.c.b16 %v3286, %v3285
        %v3300 = vpack.c.b16 %v3288, %v3287
        %v3301 = vpack.c.b16 %v3290, %v3289
        %v3302 = vpack.c.b16 %v3292, %v3291
        %v3303 = vpack.c.b16 %v3294, %v3293
        %v3304 = vpack.c.b16 %v3296, %v3295
        %v3329 = vunpack.c.l.b16 %v3249
        %v3330 = vunpack.c.l.b16 %v3250
        %v3331 = vunpack.c.l.b16 %v3251
        %v3332 = vunpack.c.l.b16 %v3252
        %v3333 = vunpack.c.l.b16 %v3253
        %v3334 = vunpack.c.l.b16 %v3254
        %v3335 = vunpack.c.l.b16 %v3255
        %v3336 = vunpack.c.l.b16 %v3256
        %v3337 = vunpack.c.l.b16 %v3257
        %v3338 = vunpack.c.l.b16 %v3258
        %v3339 = vunpack.c.l.b16 %v3259
        %v3340 = vunpack.c.l.b16 %v3260
        %v3341 = vunpack.c.l.b16 %v3261
        %v3342 = vunpack.c.l.b16 %v3262
        %v3343 = vunpack.c.l.b16 %v3263
        %v3344 = vunpack.c.l.b16 %v3264
        %v3345 = vpack.c.b16 %v3330, %v3329
        %v3346 = vpack.c.b16 %v3332, %v3331
        %v3347 = vpack.c.b16 %v3334, %v3333
        %v3348 = vpack.c.b16 %v3336, %v3335
        %v3349 = vpack.c.b16 %v3338, %v3337
        %v3350 = vpack.c.b16 %v3340, %v3339
        %v3351 = vpack.c.b16 %v3342, %v3341
        %v3352 = vpack.c.b16 %v3344, %v3343
        %3361 = vmatprep.subr.bf16.mxu0 0
        %3362 = vmatpush1.bf16.msra.mxu0 %v3352
        %3363 = vmatprep.subr.bf16.mxu0 0
        %3364 = vmatpush1.bf16.msra.mxu0 %v3351
        %3365 = vmatprep.subr.bf16.mxu0 0
        %3366 = vmatpush1.bf16.msra.mxu0 %v3350
        %3367 = vmatprep.subr.bf16.mxu0 0
        %3368 = vmatpush1.bf16.msra.mxu0 %v3349
        %3369 = vmatprep.subr.bf16.mxu0 0
        %3370 = vmatpush1.bf16.msra.mxu0 %v3348
        %3371 = vmatprep.subr.bf16.mxu0 0
        %3372 = vmatpush1.bf16.msra.mxu0 %v3347
        %3373 = vmatprep.subr.bf16.mxu0 0
        %3374 = vmatpush1.bf16.msra.mxu0 %v3346
        %3375 = vmatprep.subr.bf16.mxu0 0
        %3376 = vmatpush1.bf16.msra.mxu0 %v3345
        %3377 = vmatprep.subr.bf16.mxu0 0
        %3378 = vmatpush2.bf16.msra.mxu0 0
        %3379 = vmatprep.subr.bf16.mxu0 0
        %3380 = vmatpush2.bf16.msra.mxu0 0
        %3381 = vmatprep.subr.bf16.mxu0 0
        %3382 = vmatpush2.bf16.msra.mxu0 0
        %3383 = vmatprep.subr.bf16.mxu0 0
        %3384 = vmatpush2.bf16.msra.mxu0 0
        %3385 = vmatprep.subr.bf16.mxu0 0
        %3386 = vmatpush2.bf16.msra.mxu0 0
        %3387 = vmatprep.subr.bf16.mxu0 0
        %3388 = vmatpush2.bf16.msra.mxu0 0
        %3389 = vmatprep.subr.bf16.mxu0 0
        %3390 = vmatpush2.bf16.msra.mxu0 0
        %3391 = vmatprep.subr.bf16.mxu0 0
        %3392 = vmatpush2.bf16.msra.mxu0 0
        %3393 = vmatprep.mubr.bf16.mxu0 0
        %3394 = vmatmul.mubr.bf16.gmra.mxu0 %v3297
        %v3395 = vpop.f32.mrf.mxu0
        %v3396 = vadd.f32 0.0, %v3395
        %v3397 = vpop.f32.mrf.mxu0
        %v3398 = vpop.f32.mrf.mxu0
        %v3399 = vadd.f32 0.0, %v3398
        %v3400 = vpop.f32.mrf.mxu0
        %3401 = vmatprep.mubr.bf16.mxu0 0
        %3402 = vmatmul.mubr.bf16.gmra.mxu0 %v3298
        %v3403 = vpop.f32.mrf.mxu0
        %v3404 = vadd.f32 0.0, %v3403
        %v3405 = vpop.f32.mrf.mxu0
        %v3406 = vpop.f32.mrf.mxu0
        %v3407 = vadd.f32 0.0, %v3406
        %v3408 = vpop.f32.mrf.mxu0
        %3409 = vmatprep.mubr.bf16.mxu0 0
        %3410 = vmatmul.mubr.bf16.gmra.mxu0 %v3299
        %v3411 = vpop.f32.mrf.mxu0
        %v3412 = vadd.f32 0.0, %v3411
        %v3413 = vpop.f32.mrf.mxu0
        %v3414 = vpop.f32.mrf.mxu0
        %v3415 = vadd.f32 0.0, %v3414
        %v3416 = vpop.f32.mrf.mxu0
        %3417 = vmatprep.mubr.bf16.mxu0 0
        %3418 = vmatmul.mubr.bf16.gmra.mxu0 %v3300
        %v3419 = vpop.f32.mrf.mxu0
        %v3420 = vadd.f32 0.0, %v3419
        %v3421 = vpop.f32.mrf.mxu0
        %v3422 = vpop.f32.mrf.mxu0
        %v3423 = vadd.f32 0.0, %v3422
        %v3424 = vpop.f32.mrf.mxu0
        %3425 = vmatprep.mubr.bf16.mxu0 0
        %3426 = vmatmul.mubr.bf16.gmra.mxu0 %v3301
        %v3427 = vpop.f32.mrf.mxu0
        %v3428 = vadd.f32 0.0, %v3427
        %v3429 = vpop.f32.mrf.mxu0
        %v3430 = vpop.f32.mrf.mxu0
        %v3431 = vadd.f32 0.0, %v3430
        %v3432 = vpop.f32.mrf.mxu0
        %3433 = vmatprep.mubr.bf16.mxu0 0
        %3434 = vmatmul.mubr.bf16.gmra.mxu0 %v3302
        %v3435 = vpop.f32.mrf.mxu0
        %v3436 = vadd.f32 0.0, %v3435
        %v3437 = vpop.f32.mrf.mxu0
        %v3438 = vpop.f32.mrf.mxu0
        %v3439 = vadd.f32 0.0, %v3438
        %v3440 = vpop.f32.mrf.mxu0
        %3441 = vmatprep.mubr.bf16.mxu0 0
        %3442 = vmatmul.mubr.bf16.gmra.mxu0 %v3303
        %v3443 = vpop.f32.mrf.mxu0
        %v3444 = vadd.f32 0.0, %v3443
        %v3445 = vpop.f32.mrf.mxu0
        %v3446 = vpop.f32.mrf.mxu0
        %v3447 = vadd.f32 0.0, %v3446
        %v3448 = vpop.f32.mrf.mxu0
        %3449 = vmatprep.mubr.bf16.mxu0 0
        %3450 = vmatmul.mubr.bf16.gmra.mxu0 %v3304
        %v3451 = vpop.f32.mrf.mxu0
        %v3452 = vadd.f32 0.0, %v3451
        %v3453 = vpop.f32.mrf.mxu0
        %v3454 = vpop.f32.mrf.mxu0
        %v3455 = vadd.f32 0.0, %v3454
        %v3456 = vpop.f32.mrf.mxu0
        %3457 = vdwg.mxu0
        %v3458 = vadd.f32 %v3207, %v3396
        %v3459 = vadd.f32 %v3208, %v3399
        %v3460 = vadd.f32 %v3209, %v3404
        %v3461 = vadd.f32 %v3210, %v3407
        %v3462 = vadd.f32 %v3211, %v3412
        %v3463 = vadd.f32 %v3212, %v3415
        %v3464 = vadd.f32 %v3213, %v3420
        %v3465 = vadd.f32 %v3214, %v3423
        %v3466 = vadd.f32 %v3215, %v3428
        %v3467 = vadd.f32 %v3216, %v3431
        %v3468 = vadd.f32 %v3217, %v3436
        %v3469 = vadd.f32 %v3218, %v3439
        %v3470 = vadd.f32 %v3219, %v3444
        %v3471 = vadd.f32 %v3220, %v3447
        %v3472 = vadd.f32 %v3221, %v3452
        %v3473 = vadd.f32 %v3222, %v3455
        %v3475 = vshrl.u32 %v3224, 16
        %v3477 = vrot.slane %v3475, 4
        %v3478 = vshll.u32 %v3224, 16
        %v3480 = vrot.slane %v3478, 5
        %v3481 = vor.u32 %v3477, %v3480
        %v3482 = vrot.slane %v3481, 4
        %v3484 = vshll.u32 %v3225, 16
        %v3486 = vrot.slane %v3484, 5
        %v3487 = vsel %vm1440, %v3482, %v3486
        %v3488 = vshrl.u32 %v3225, 16
        %v3490 = vrot.slane %v3488, 4
        %v3491 = vor.u32 %v3490, %v3486
        %v3492 = vrot.slane %v3491, 4
        %v3494 = vshll.u32 %v3226, 16
        %v3496 = vrot.slane %v3494, 5
        %v3497 = vsel %vm1440, %v3492, %v3496
        %v3499 = vshrl.u32 %v3227, 16
        %v3501 = vrot.slane %v3499, 4
        %v3502 = vshll.u32 %v3227, 16
        %v3504 = vrot.slane %v3502, 5
        %v3505 = vor.u32 %v3501, %v3504
        %v3506 = vrot.slane %v3505, 4
        %v3508 = vshll.u32 %v3228, 16
        %v3510 = vrot.slane %v3508, 5
        %v3511 = vsel %vm1440, %v3506, %v3510
        %v3512 = vshrl.u32 %v3228, 16
        %v3514 = vrot.slane %v3512, 4
        %v3515 = vor.u32 %v3514, %v3510
        %v3516 = vrot.slane %v3515, 4
        %v3518 = vshll.u32 %v3229, 16
        %v3520 = vrot.slane %v3518, 5
        %v3521 = vsel %vm1440, %v3516, %v3520
        %v3523 = vshrl.u32 %v3230, 16
        %v3525 = vrot.slane %v3523, 4
        %v3526 = vshll.u32 %v3230, 16
        %v3528 = vrot.slane %v3526, 5
        %v3529 = vor.u32 %v3525, %v3528
        %v3530 = vrot.slane %v3529, 4
        %v3532 = vshll.u32 %v3231, 16
        %v3534 = vrot.slane %v3532, 5
        %v3535 = vsel %vm1440, %v3530, %v3534
        %v3536 = vshrl.u32 %v3231, 16
        %v3538 = vrot.slane %v3536, 4
        %v3539 = vor.u32 %v3538, %v3534
        %v3540 = vrot.slane %v3539, 4
        %v3542 = vshll.u32 %v3232, 16
        %v3544 = vrot.slane %v3542, 5
        %v3545 = vsel %vm1440, %v3540, %v3544
        %v3547 = vshrl.u32 %v3233, 16
        %v3549 = vrot.slane %v3547, 4
        %v3550 = vshll.u32 %v3233, 16
        %v3552 = vrot.slane %v3550, 5
        %v3553 = vor.u32 %v3549, %v3552
        %v3554 = vrot.slane %v3553, 4
        %v3556 = vshll.u32 %v3234, 16
        %v3558 = vrot.slane %v3556, 5
        %v3559 = vsel %vm1440, %v3554, %v3558
        %v3560 = vshrl.u32 %v3234, 16
        %v3562 = vrot.slane %v3560, 4
        %v3563 = vor.u32 %v3562, %v3558
        %v3564 = vrot.slane %v3563, 4
        %v3566 = vshll.u32 %v3235, 16
        %v3568 = vrot.slane %v3566, 5
        %v3569 = vsel %vm1440, %v3564, %v3568
        %v3571 = vshrl.u32 %v3236, 16
        %v3573 = vrot.slane %v3571, 4
        %v3574 = vshll.u32 %v3236, 16
        %v3576 = vrot.slane %v3574, 5
        %v3577 = vor.u32 %v3573, %v3576
        %v3578 = vrot.slane %v3577, 4
        %v3580 = vshll.u32 %v3237, 16
        %v3582 = vrot.slane %v3580, 5
        %v3583 = vsel %vm1440, %v3578, %v3582
        %v3584 = vshrl.u32 %v3237, 16
        %v3586 = vrot.slane %v3584, 4
        %v3587 = vor.u32 %v3586, %v3582
        %v3588 = vrot.slane %v3587, 4
        %v3590 = vshll.u32 %v3238, 16
        %v3592 = vrot.slane %v3590, 5
        %v3593 = vsel %vm1440, %v3588, %v3592
        %v3595 = vshrl.u32 %v3239, 16
        %v3597 = vrot.slane %v3595, 4
        %v3598 = vshll.u32 %v3239, 16
        %v3600 = vrot.slane %v3598, 5
        %v3601 = vor.u32 %v3597, %v3600
        %v3602 = vrot.slane %v3601, 4
        %v3604 = vshll.u32 %v3240, 16
        %v3606 = vrot.slane %v3604, 5
        %v3607 = vsel %vm1440, %v3602, %v3606
        %v3608 = vshrl.u32 %v3240, 16
        %v3610 = vrot.slane %v3608, 4
        %v3611 = vor.u32 %v3610, %v3606
        %v3612 = vrot.slane %v3611, 4
        %v3614 = vshll.u32 %v3241, 16
        %v3616 = vrot.slane %v3614, 5
        %v3617 = vsel %vm1440, %v3612, %v3616
        %v3619 = vshrl.u32 %v3242, 16
        %v3621 = vrot.slane %v3619, 4
        %v3622 = vshll.u32 %v3242, 16
        %v3624 = vrot.slane %v3622, 5
        %v3625 = vor.u32 %v3621, %v3624
        %v3626 = vrot.slane %v3625, 4
        %v3628 = vshll.u32 %v3243, 16
        %v3630 = vrot.slane %v3628, 5
        %v3631 = vsel %vm1440, %v3626, %v3630
        %v3632 = vshrl.u32 %v3243, 16
        %v3634 = vrot.slane %v3632, 4
        %v3635 = vor.u32 %v3634, %v3630
        %v3636 = vrot.slane %v3635, 4
        %v3638 = vshll.u32 %v3244, 16
        %v3640 = vrot.slane %v3638, 5
        %v3641 = vsel %vm1440, %v3636, %v3640
        %v3643 = vshrl.u32 %v3245, 16
        %v3645 = vrot.slane %v3643, 4
        %v3646 = vshll.u32 %v3245, 16
        %v3648 = vrot.slane %v3646, 5
        %v3649 = vor.u32 %v3645, %v3648
        %v3650 = vrot.slane %v3649, 4
        %v3652 = vshll.u32 %v3246, 16
        %v3654 = vrot.slane %v3652, 5
        %v3655 = vsel %vm1440, %v3650, %v3654
        %v3656 = vshrl.u32 %v3246, 16
        %v3658 = vrot.slane %v3656, 4
        %v3659 = vor.u32 %v3658, %v3654
        %v3660 = vrot.slane %v3659, 4
        %v3662 = vshll.u32 %v3247, 16
        %v3664 = vrot.slane %v3662, 5
        %v3665 = vsel %vm1440, %v3660, %v3664
        %s3666 = scalar_lea.vmem %s4, 448
        %v3667 = vld [vmem:[%s3666] sm:$0xf]
        %v3668 = vld [vmem:[%s3666 + $0x4] sm:$0xf]
        %v3669 = vld [vmem:[%s3666 + $0x8] sm:$0xf]
        %v3670 = vld [vmem:[%s3666 + $0xc] sm:$0xf]
        %v3671 = vld [vmem:[%s3666 + $0x10] sm:$0xf]
        %v3672 = vld [vmem:[%s3666 + $0x14] sm:$0xf]
        %v3673 = vld [vmem:[%s3666 + $0x18] sm:$0xf]
        %v3674 = vld [vmem:[%s3666 + $0x1c] sm:$0xf]
        %v3675 = vld [vmem:[%s3666 + $0x20] sm:$0xf]
        %v3676 = vld [vmem:[%s3666 + $0x24] sm:$0xf]
        %v3677 = vld [vmem:[%s3666 + $0x28] sm:$0xf]
        %v3678 = vld [vmem:[%s3666 + $0x2c] sm:$0xf]
        %v3679 = vld [vmem:[%s3666 + $0x30] sm:$0xf]
        %v3680 = vld [vmem:[%s3666 + $0x34] sm:$0xf]
        %v3681 = vld [vmem:[%s3666 + $0x38] sm:$0xf]
        %v3682 = vld [vmem:[%s3666 + $0x3c] sm:$0xf]
        %v3683 = vunpack.c.l.b16 %v3487
        %v3684 = vunpack.c.l.b16 %v3497
        %v3685 = vunpack.c.l.b16 %v3511
        %v3686 = vunpack.c.l.b16 %v3521
        %v3687 = vunpack.c.l.b16 %v3535
        %v3688 = vunpack.c.l.b16 %v3545
        %v3689 = vunpack.c.l.b16 %v3559
        %v3690 = vunpack.c.l.b16 %v3569
        %v3691 = vunpack.c.l.b16 %v3583
        %v3692 = vunpack.c.l.b16 %v3593
        %v3693 = vunpack.c.l.b16 %v3607
        %v3694 = vunpack.c.l.b16 %v3617
        %v3695 = vunpack.c.l.b16 %v3631
        %v3696 = vunpack.c.l.b16 %v3641
        %v3697 = vunpack.c.l.b16 %v3655
        %v3698 = vunpack.c.l.b16 %v3665
        %v3699 = vpack.c.b16 %v3684, %v3683
        %v3700 = vpack.c.b16 %v3686, %v3685
        %v3701 = vpack.c.b16 %v3688, %v3687
        %v3702 = vpack.c.b16 %v3690, %v3689
        %v3703 = vpack.c.b16 %v3692, %v3691
        %v3704 = vpack.c.b16 %v3694, %v3693
        %v3705 = vpack.c.b16 %v3696, %v3695
        %v3706 = vpack.c.b16 %v3698, %v3697
        %v3731 = vunpack.c.l.b16 %v3667
        %v3732 = vunpack.c.l.b16 %v3668
        %v3733 = vunpack.c.l.b16 %v3669
        %v3734 = vunpack.c.l.b16 %v3670
        %v3735 = vunpack.c.l.b16 %v3671
        %v3736 = vunpack.c.l.b16 %v3672
        %v3737 = vunpack.c.l.b16 %v3673
        %v3738 = vunpack.c.l.b16 %v3674
        %v3739 = vunpack.c.l.b16 %v3675
        %v3740 = vunpack.c.l.b16 %v3676
        %v3741 = vunpack.c.l.b16 %v3677
        %v3742 = vunpack.c.l.b16 %v3678
        %v3743 = vunpack.c.l.b16 %v3679
        %v3744 = vunpack.c.l.b16 %v3680
        %v3745 = vunpack.c.l.b16 %v3681
        %v3746 = vunpack.c.l.b16 %v3682
        %v3747 = vpack.c.b16 %v3732, %v3731
        %v3748 = vpack.c.b16 %v3734, %v3733
        %v3749 = vpack.c.b16 %v3736, %v3735
        %v3750 = vpack.c.b16 %v3738, %v3737
        %v3751 = vpack.c.b16 %v3740, %v3739
        %v3752 = vpack.c.b16 %v3742, %v3741
        %v3753 = vpack.c.b16 %v3744, %v3743
        %v3754 = vpack.c.b16 %v3746, %v3745
        %3763 = vmatprep.subr.bf16.mxu0 0
        %3764 = vmatpush1.bf16.msra.mxu0 %v3754
        %3765 = vmatprep.subr.bf16.mxu0 0
        %3766 = vmatpush1.bf16.msra.mxu0 %v3753
        %3767 = vmatprep.subr.bf16.mxu0 0
        %3768 = vmatpush1.bf16.msra.mxu0 %v3752
        %3769 = vmatprep.subr.bf16.mxu0 0
        %3770 = vmatpush1.bf16.msra.mxu0 %v3751
        %3771 = vmatprep.subr.bf16.mxu0 0
        %3772 = vmatpush1.bf16.msra.mxu0 %v3750
        %3773 = vmatprep.subr.bf16.mxu0 0
        %3774 = vmatpush1.bf16.msra.mxu0 %v3749
        %3775 = vmatprep.subr.bf16.mxu0 0
        %3776 = vmatpush1.bf16.msra.mxu0 %v3748
        %3777 = vmatprep.subr.bf16.mxu0 0
        %3778 = vmatpush1.bf16.msra.mxu0 %v3747
        %3779 = vmatprep.subr.bf16.mxu0 0
        %3780 = vmatpush2.bf16.msra.mxu0 0
        %3781 = vmatprep.subr.bf16.mxu0 0
        %3782 = vmatpush2.bf16.msra.mxu0 0
        %3783 = vmatprep.subr.bf16.mxu0 0
        %3784 = vmatpush2.bf16.msra.mxu0 0
        %3785 = vmatprep.subr.bf16.mxu0 0
        %3786 = vmatpush2.bf16.msra.mxu0 0
        %3787 = vmatprep.subr.bf16.mxu0 0
        %3788 = vmatpush2.bf16.msra.mxu0 0
        %3789 = vmatprep.subr.bf16.mxu0 0
        %3790 = vmatpush2.bf16.msra.mxu0 0
        %3791 = vmatprep.subr.bf16.mxu0 0
        %3792 = vmatpush2.bf16.msra.mxu0 0
        %3793 = vmatprep.subr.bf16.mxu0 0
        %3794 = vmatpush2.bf16.msra.mxu0 0
        %3795 = vmatprep.mubr.bf16.mxu0 0
        %3796 = vmatmul.mubr.bf16.gmra.mxu0 %v3699
        %v3797 = vpop.f32.mrf.mxu0
        %v3798 = vadd.f32 0.0, %v3797
        %v3799 = vpop.f32.mrf.mxu0
        %v3800 = vpop.f32.mrf.mxu0
        %v3801 = vadd.f32 0.0, %v3800
        %v3802 = vpop.f32.mrf.mxu0
        %3803 = vmatprep.mubr.bf16.mxu0 0
        %3804 = vmatmul.mubr.bf16.gmra.mxu0 %v3700
        %v3805 = vpop.f32.mrf.mxu0
        %v3806 = vadd.f32 0.0, %v3805
        %v3807 = vpop.f32.mrf.mxu0
        %v3808 = vpop.f32.mrf.mxu0
        %v3809 = vadd.f32 0.0, %v3808
        %v3810 = vpop.f32.mrf.mxu0
        %3811 = vmatprep.mubr.bf16.mxu0 0
        %3812 = vmatmul.mubr.bf16.gmra.mxu0 %v3701
        %v3813 = vpop.f32.mrf.mxu0
        %v3814 = vadd.f32 0.0, %v3813
        %v3815 = vpop.f32.mrf.mxu0
        %v3816 = vpop.f32.mrf.mxu0
        %v3817 = vadd.f32 0.0, %v3816
        %v3818 = vpop.f32.mrf.mxu0
        %3819 = vmatprep.mubr.bf16.mxu0 0
        %3820 = vmatmul.mubr.bf16.gmra.mxu0 %v3702
        %v3821 = vpop.f32.mrf.mxu0
        %v3822 = vadd.f32 0.0, %v3821
        %v3823 = vpop.f32.mrf.mxu0
        %v3824 = vpop.f32.mrf.mxu0
        %v3825 = vadd.f32 0.0, %v3824
        %v3826 = vpop.f32.mrf.mxu0
        %3827 = vmatprep.mubr.bf16.mxu0 0
        %3828 = vmatmul.mubr.bf16.gmra.mxu0 %v3703
        %v3829 = vpop.f32.mrf.mxu0
        %v3830 = vadd.f32 0.0, %v3829
        %v3831 = vpop.f32.mrf.mxu0
        %v3832 = vpop.f32.mrf.mxu0
        %v3833 = vadd.f32 0.0, %v3832
        %v3834 = vpop.f32.mrf.mxu0
        %3835 = vmatprep.mubr.bf16.mxu0 0
        %3836 = vmatmul.mubr.bf16.gmra.mxu0 %v3704
        %v3837 = vpop.f32.mrf.mxu0
        %v3838 = vadd.f32 0.0, %v3837
        %v3839 = vpop.f32.mrf.mxu0
        %v3840 = vpop.f32.mrf.mxu0
        %v3841 = vadd.f32 0.0, %v3840
        %v3842 = vpop.f32.mrf.mxu0
        %3843 = vmatprep.mubr.bf16.mxu0 0
        %3844 = vmatmul.mubr.bf16.gmra.mxu0 %v3705
        %v3845 = vpop.f32.mrf.mxu0
        %v3846 = vadd.f32 0.0, %v3845
        %v3847 = vpop.f32.mrf.mxu0
        %v3848 = vpop.f32.mrf.mxu0
        %v3849 = vadd.f32 0.0, %v3848
        %v3850 = vpop.f32.mrf.mxu0
        %3851 = vmatprep.mubr.bf16.mxu0 0
        %3852 = vmatmul.mubr.bf16.gmra.mxu0 %v3706
        %v3853 = vpop.f32.mrf.mxu0
        %v3854 = vadd.f32 0.0, %v3853
        %v3855 = vpop.f32.mrf.mxu0
        %v3856 = vpop.f32.mrf.mxu0
        %v3857 = vadd.f32 0.0, %v3856
        %v3858 = vpop.f32.mrf.mxu0
        %3859 = vdwg.mxu0
        %v3860 = vadd.f32 %v3458, %v3798
        %v3861 = vadd.f32 %v3459, %v3801
        %v3862 = vadd.f32 %v3460, %v3806
        %v3863 = vadd.f32 %v3461, %v3809
        %v3864 = vadd.f32 %v3462, %v3814
        %v3865 = vadd.f32 %v3463, %v3817
        %v3866 = vadd.f32 %v3464, %v3822
        %v3867 = vadd.f32 %v3465, %v3825
        %v3868 = vadd.f32 %v3466, %v3830
        %v3869 = vadd.f32 %v3467, %v3833
        %v3870 = vadd.f32 %v3468, %v3838
        %v3871 = vadd.f32 %v3469, %v3841
        %v3872 = vadd.f32 %v3470, %v3846
        %v3873 = vadd.f32 %v3471, %v3849
        %v3874 = vadd.f32 %v3472, %v3854
        %v3875 = vadd.f32 %v3473, %v3857
        %v3884 = vrot.slane %v3224, 5
        %v3885 = vrot.slane %v3884, 4
        %v3886 = vrot.slane %v3225, 5
        %v3887 = vsel %vm2030, %v3885, %v3886
        %v3888 = vrot.slane %v3886, 4
        %v3889 = vrot.slane %v3226, 5
        %v3890 = vsel %vm2030, %v3888, %v3889
        %v3891 = vrot.slane %v3227, 5
        %v3892 = vrot.slane %v3891, 4
        %v3893 = vrot.slane %v3228, 5
        %v3894 = vsel %vm2030, %v3892, %v3893
        %v3895 = vrot.slane %v3893, 4
        %v3896 = vrot.slane %v3229, 5
        %v3897 = vsel %vm2030, %v3895, %v3896
        %v3898 = vrot.slane %v3230, 5
        %v3899 = vrot.slane %v3898, 4
        %v3900 = vrot.slane %v3231, 5
        %v3901 = vsel %vm2030, %v3899, %v3900
        %v3902 = vrot.slane %v3900, 4
        %v3903 = vrot.slane %v3232, 5
        %v3904 = vsel %vm2030, %v3902, %v3903
        %v3905 = vrot.slane %v3233, 5
        %v3906 = vrot.slane %v3905, 4
        %v3907 = vrot.slane %v3234, 5
        %v3908 = vsel %vm2030, %v3906, %v3907
        %v3909 = vrot.slane %v3907, 4
        %v3910 = vrot.slane %v3235, 5
        %v3911 = vsel %vm2030, %v3909, %v3910
        %v3912 = vrot.slane %v3236, 5
        %v3913 = vrot.slane %v3912, 4
        %v3914 = vrot.slane %v3237, 5
        %v3915 = vsel %vm2030, %v3913, %v3914
        %v3916 = vrot.slane %v3914, 4
        %v3917 = vrot.slane %v3238, 5
        %v3918 = vsel %vm2030, %v3916, %v3917
        %v3919 = vrot.slane %v3239, 5
        %v3920 = vrot.slane %v3919, 4
        %v3921 = vrot.slane %v3240, 5
        %v3922 = vsel %vm2030, %v3920, %v3921
        %v3923 = vrot.slane %v3921, 4
        %v3924 = vrot.slane %v3241, 5
        %v3925 = vsel %vm2030, %v3923, %v3924
        %v3926 = vrot.slane %v3242, 5
        %v3927 = vrot.slane %v3926, 4
        %v3928 = vrot.slane %v3243, 5
        %v3929 = vsel %vm2030, %v3927, %v3928
        %v3930 = vrot.slane %v3928, 4
        %v3931 = vrot.slane %v3244, 5
        %v3932 = vsel %vm2030, %v3930, %v3931
        %v3933 = vrot.slane %v3245, 5
        %v3934 = vrot.slane %v3933, 4
        %v3935 = vrot.slane %v3246, 5
        %v3936 = vsel %vm2030, %v3934, %v3935
        %v3937 = vrot.slane %v3935, 4
        %v3938 = vrot.slane %v3247, 5
        %v3939 = vsel %vm2030, %v3937, %v3938
        %s3940 = scalar_lea.vmem %s4, 512
        %v3941 = vld [vmem:[%s3940] sm:$0xf]
        %v3942 = vld [vmem:[%s3940 + $0x4] sm:$0xf]
        %v3943 = vld [vmem:[%s3940 + $0x8] sm:$0xf]
        %v3944 = vld [vmem:[%s3940 + $0xc] sm:$0xf]
        %v3945 = vld [vmem:[%s3940 + $0x10] sm:$0xf]
        %v3946 = vld [vmem:[%s3940 + $0x14] sm:$0xf]
        %v3947 = vld [vmem:[%s3940 + $0x18] sm:$0xf]
        %v3948 = vld [vmem:[%s3940 + $0x1c] sm:$0xf]
        %v3949 = vld [vmem:[%s3940 + $0x20] sm:$0xf]
        %v3950 = vld [vmem:[%s3940 + $0x24] sm:$0xf]
        %v3951 = vld [vmem:[%s3940 + $0x28] sm:$0xf]
        %v3952 = vld [vmem:[%s3940 + $0x2c] sm:$0xf]
        %v3953 = vld [vmem:[%s3940 + $0x30] sm:$0xf]
        %v3954 = vld [vmem:[%s3940 + $0x34] sm:$0xf]
        %v3955 = vld [vmem:[%s3940 + $0x38] sm:$0xf]
        %v3956 = vld [vmem:[%s3940 + $0x3c] sm:$0xf]
        %v3957 = vunpack.c.l.b16 %v3887
        %v3958 = vunpack.c.l.b16 %v3890
        %v3959 = vunpack.c.l.b16 %v3894
        %v3960 = vunpack.c.l.b16 %v3897
        %v3961 = vunpack.c.l.b16 %v3901
        %v3962 = vunpack.c.l.b16 %v3904
        %v3963 = vunpack.c.l.b16 %v3908
        %v3964 = vunpack.c.l.b16 %v3911
        %v3965 = vunpack.c.l.b16 %v3915
        %v3966 = vunpack.c.l.b16 %v3918
        %v3967 = vunpack.c.l.b16 %v3922
        %v3968 = vunpack.c.l.b16 %v3925
        %v3969 = vunpack.c.l.b16 %v3929
        %v3970 = vunpack.c.l.b16 %v3932
        %v3971 = vunpack.c.l.b16 %v3936
        %v3972 = vunpack.c.l.b16 %v3939
        %v3973 = vpack.c.b16 %v3958, %v3957
        %v3974 = vpack.c.b16 %v3960, %v3959
        %v3975 = vpack.c.b16 %v3962, %v3961
        %v3976 = vpack.c.b16 %v3964, %v3963
        %v3977 = vpack.c.b16 %v3966, %v3965
        %v3978 = vpack.c.b16 %v3968, %v3967
        %v3979 = vpack.c.b16 %v3970, %v3969
        %v3980 = vpack.c.b16 %v3972, %v3971
        %v4005 = vunpack.c.l.b16 %v3941
        %v4006 = vunpack.c.l.b16 %v3942
        %v4007 = vunpack.c.l.b16 %v3943
        %v4008 = vunpack.c.l.b16 %v3944
        %v4009 = vunpack.c.l.b16 %v3945
        %v4010 = vunpack.c.l.b16 %v3946
        %v4011 = vunpack.c.l.b16 %v3947
        %v4012 = vunpack.c.l.b16 %v3948
        %v4013 = vunpack.c.l.b16 %v3949
        %v4014 = vunpack.c.l.b16 %v3950
        %v4015 = vunpack.c.l.b16 %v3951
        %v4016 = vunpack.c.l.b16 %v3952
        %v4017 = vunpack.c.l.b16 %v3953
        %v4018 = vunpack.c.l.b16 %v3954
        %v4019 = vunpack.c.l.b16 %v3955
        %v4020 = vunpack.c.l.b16 %v3956
        %v4021 = vpack.c.b16 %v4006, %v4005
        %v4022 = vpack.c.b16 %v4008, %v4007
        %v4023 = vpack.c.b16 %v4010, %v4009
        %v4024 = vpack.c.b16 %v4012, %v4011
        %v4025 = vpack.c.b16 %v4014, %v4013
        %v4026 = vpack.c.b16 %v4016, %v4015
        %v4027 = vpack.c.b16 %v4018, %v4017
        %v4028 = vpack.c.b16 %v4020, %v4019
        %4037 = vmatprep.subr.bf16.mxu0 0
        %4038 = vmatpush1.bf16.msra.mxu0 %v4028
        %4039 = vmatprep.subr.bf16.mxu0 0
        %4040 = vmatpush1.bf16.msra.mxu0 %v4027
        %4041 = vmatprep.subr.bf16.mxu0 0
        %4042 = vmatpush1.bf16.msra.mxu0 %v4026
        %4043 = vmatprep.subr.bf16.mxu0 0
        %4044 = vmatpush1.bf16.msra.mxu0 %v4025
        %4045 = vmatprep.subr.bf16.mxu0 0
        %4046 = vmatpush1.bf16.msra.mxu0 %v4024
        %4047 = vmatprep.subr.bf16.mxu0 0
        %4048 = vmatpush1.bf16.msra.mxu0 %v4023
        %4049 = vmatprep.subr.bf16.mxu0 0
        %4050 = vmatpush1.bf16.msra.mxu0 %v4022
        %4051 = vmatprep.subr.bf16.mxu0 0
        %4052 = vmatpush1.bf16.msra.mxu0 %v4021
        %4053 = vmatprep.subr.bf16.mxu0 0
        %4054 = vmatpush2.bf16.msra.mxu0 0
        %4055 = vmatprep.subr.bf16.mxu0 0
        %4056 = vmatpush2.bf16.msra.mxu0 0
        %4057 = vmatprep.subr.bf16.mxu0 0
        %4058 = vmatpush2.bf16.msra.mxu0 0
        %4059 = vmatprep.subr.bf16.mxu0 0
        %4060 = vmatpush2.bf16.msra.mxu0 0
        %4061 = vmatprep.subr.bf16.mxu0 0
        %4062 = vmatpush2.bf16.msra.mxu0 0
        %4063 = vmatprep.subr.bf16.mxu0 0
        %4064 = vmatpush2.bf16.msra.mxu0 0
        %4065 = vmatprep.subr.bf16.mxu0 0
        %4066 = vmatpush2.bf16.msra.mxu0 0
        %4067 = vmatprep.subr.bf16.mxu0 0
        %4068 = vmatpush2.bf16.msra.mxu0 0
        %4069 = vmatprep.mubr.bf16.mxu0 0
        %4070 = vmatmul.mubr.bf16.gmra.mxu0 %v3973
        %v4071 = vpop.f32.mrf.mxu0
        %v4072 = vadd.f32 0.0, %v4071
        %v4073 = vpop.f32.mrf.mxu0
        %v4074 = vpop.f32.mrf.mxu0
        %v4075 = vadd.f32 0.0, %v4074
        %v4076 = vpop.f32.mrf.mxu0
        %4077 = vmatprep.mubr.bf16.mxu0 0
        %4078 = vmatmul.mubr.bf16.gmra.mxu0 %v3974
        %v4079 = vpop.f32.mrf.mxu0
        %v4080 = vadd.f32 0.0, %v4079
        %v4081 = vpop.f32.mrf.mxu0
        %v4082 = vpop.f32.mrf.mxu0
        %v4083 = vadd.f32 0.0, %v4082
        %v4084 = vpop.f32.mrf.mxu0
        %4085 = vmatprep.mubr.bf16.mxu0 0
        %4086 = vmatmul.mubr.bf16.gmra.mxu0 %v3975
        %v4087 = vpop.f32.mrf.mxu0
        %v4088 = vadd.f32 0.0, %v4087
        %v4089 = vpop.f32.mrf.mxu0
        %v4090 = vpop.f32.mrf.mxu0
        %v4091 = vadd.f32 0.0, %v4090
        %v4092 = vpop.f32.mrf.mxu0
        %4093 = vmatprep.mubr.bf16.mxu0 0
        %4094 = vmatmul.mubr.bf16.gmra.mxu0 %v3976
        %v4095 = vpop.f32.mrf.mxu0
        %v4096 = vadd.f32 0.0, %v4095
        %v4097 = vpop.f32.mrf.mxu0
        %v4098 = vpop.f32.mrf.mxu0
        %v4099 = vadd.f32 0.0, %v4098
        %v4100 = vpop.f32.mrf.mxu0
        %4101 = vmatprep.mubr.bf16.mxu0 0
        %4102 = vmatmul.mubr.bf16.gmra.mxu0 %v3977
        %v4103 = vpop.f32.mrf.mxu0
        %v4104 = vadd.f32 0.0, %v4103
        %v4105 = vpop.f32.mrf.mxu0
        %v4106 = vpop.f32.mrf.mxu0
        %v4107 = vadd.f32 0.0, %v4106
        %v4108 = vpop.f32.mrf.mxu0
        %4109 = vmatprep.mubr.bf16.mxu0 0
        %4110 = vmatmul.mubr.bf16.gmra.mxu0 %v3978
        %v4111 = vpop.f32.mrf.mxu0
        %v4112 = vadd.f32 0.0, %v4111
        %v4113 = vpop.f32.mrf.mxu0
        %v4114 = vpop.f32.mrf.mxu0
        %v4115 = vadd.f32 0.0, %v4114
        %v4116 = vpop.f32.mrf.mxu0
        %4117 = vmatprep.mubr.bf16.mxu0 0
        %4118 = vmatmul.mubr.bf16.gmra.mxu0 %v3979
        %v4119 = vpop.f32.mrf.mxu0
        %v4120 = vadd.f32 0.0, %v4119
        %v4121 = vpop.f32.mrf.mxu0
        %v4122 = vpop.f32.mrf.mxu0
        %v4123 = vadd.f32 0.0, %v4122
        %v4124 = vpop.f32.mrf.mxu0
        %4125 = vmatprep.mubr.bf16.mxu0 0
        %4126 = vmatmul.mubr.bf16.gmra.mxu0 %v3980
        %v4127 = vpop.f32.mrf.mxu0
        %v4128 = vadd.f32 0.0, %v4127
        %v4129 = vpop.f32.mrf.mxu0
        %v4130 = vpop.f32.mrf.mxu0
        %v4131 = vadd.f32 0.0, %v4130
        %v4132 = vpop.f32.mrf.mxu0
        %4133 = vdwg.mxu0
        %v4134 = vadd.f32 %v3860, %v4072
        %v4135 = vadd.f32 %v3861, %v4075
        %v4136 = vadd.f32 %v3862, %v4080
        %v4137 = vadd.f32 %v3863, %v4083
        %v4138 = vadd.f32 %v3864, %v4088
        %v4139 = vadd.f32 %v3865, %v4091
        %v4140 = vadd.f32 %v3866, %v4096
        %v4141 = vadd.f32 %v3867, %v4099
        %v4142 = vadd.f32 %v3868, %v4104
        %v4143 = vadd.f32 %v3869, %v4107
        %v4144 = vadd.f32 %v3870, %v4112
        %v4145 = vadd.f32 %v3871, %v4115
        %v4146 = vadd.f32 %v3872, %v4120
        %v4147 = vadd.f32 %v3873, %v4123
        %v4148 = vadd.f32 %v3874, %v4128
        %v4149 = vadd.f32 %v3875, %v4131
        %v4151 = vlaneseq
        %v4152 = vshrl.u32 %v4151, 7
        %v4153 = vsub.s32 0, %v4152
        %v4154 = vrot.slane %v1396, %v4153
        %v4156 = vadd.f32 %v4134, %v4154
        %v4157 = vadd.f32 %v4135, %v4154
        %v4158 = vadd.f32 %v4136, %v4154
        %v4159 = vadd.f32 %v4137, %v4154
        %v4160 = vadd.f32 %v4138, %v4154
        %v4161 = vadd.f32 %v4139, %v4154
        %v4162 = vadd.f32 %v4140, %v4154
        %v4163 = vadd.f32 %v4141, %v4154
        %v4164 = vadd.f32 %v4142, %v4154
        %v4165 = vadd.f32 %v4143, %v4154
        %v4166 = vadd.f32 %v4144, %v4154
        %v4167 = vadd.f32 %v4145, %v4154
        %v4168 = vadd.f32 %v4146, %v4154
        %v4169 = vadd.f32 %v4147, %v4154
        %v4170 = vadd.f32 %v4148, %v4154
        %v4171 = vadd.f32 %v4149, %v4154
        %v4172 = vmax.f32 %v4156, 0.0
        %v4173 = vmax.f32 %v4157, 0.0
        %v4174 = vmax.f32 %v4158, 0.0
        %v4175 = vmax.f32 %v4159, 0.0
        %v4176 = vmax.f32 %v4160, 0.0
        %v4177 = vmax.f32 %v4161, 0.0
        %v4178 = vmax.f32 %v4162, 0.0
        %v4179 = vmax.f32 %v4163, 0.0
        %v4180 = vmax.f32 %v4164, 0.0
        %v4181 = vmax.f32 %v4165, 0.0
        %v4182 = vmax.f32 %v4166, 0.0
        %v4183 = vmax.f32 %v4167, 0.0
        %v4184 = vmax.f32 %v4168, 0.0
        %v4185 = vmax.f32 %v4169, 0.0
        %v4186 = vmax.f32 %v4170, 0.0
        %v4187 = vmax.f32 %v4171, 0.0
        %v4188 = vpack.c.bf16 %v4173, %v4172
        %v4189 = vpack.c.bf16 %v4175, %v4174
        %v4190 = vpack.c.bf16 %v4177, %v4176
        %v4191 = vpack.c.bf16 %v4179, %v4178
        %v4192 = vpack.c.bf16 %v4181, %v4180
        %v4193 = vpack.c.bf16 %v4183, %v4182
        %v4194 = vpack.c.bf16 %v4185, %v4184
        %v4195 = vpack.c.bf16 %v4187, %v4186
        %v4196 = vld [vmem:[%s452] sm:$0xf]
        %v4197 = vld [vmem:[%s452 + $0x4] sm:$0xf]
        %v4198 = vld [vmem:[%s452 + $0x8] sm:$0xf]
        %v4199 = vld [vmem:[%s452 + $0xc] sm:$0xf]
        %v4200 = vld [vmem:[%s452 + $0x10] sm:$0xf]
        %v4201 = vld [vmem:[%s452 + $0x14] sm:$0xf]
        %v4202 = vld [vmem:[%s452 + $0x18] sm:$0xf]
        %v4203 = vld [vmem:[%s452 + $0x1c] sm:$0xf]
        %v4204 = vld [vmem:[%s452 + $0x20] sm:$0xf]
        %v4205 = vld [vmem:[%s452 + $0x24] sm:$0xf]
        %v4206 = vld [vmem:[%s452 + $0x28] sm:$0xf]
        %v4207 = vld [vmem:[%s452 + $0x2c] sm:$0xf]
        %v4208 = vld [vmem:[%s452 + $0x30] sm:$0xf]
        %v4209 = vld [vmem:[%s452 + $0x34] sm:$0xf]
        %v4210 = vld [vmem:[%s452 + $0x38] sm:$0xf]
        %v4211 = vld [vmem:[%s452 + $0x3c] sm:$0xf]
        %v4212 = vunpack.c.l.bf16 %v4196
        %v4213 = vunpack.c.l.bf16 %v4197
        %v4214 = vunpack.c.l.bf16 %v4198
        %v4215 = vunpack.c.l.bf16 %v4199
        %v4216 = vunpack.c.l.bf16 %v4200
        %v4217 = vunpack.c.l.bf16 %v4201
        %v4218 = vunpack.c.l.bf16 %v4202
        %v4219 = vunpack.c.l.bf16 %v4203
        %v4220 = vunpack.c.l.bf16 %v4204
        %v4221 = vunpack.c.l.bf16 %v4205
        %v4222 = vunpack.c.l.bf16 %v4206
        %v4223 = vunpack.c.l.bf16 %v4207
        %v4224 = vunpack.c.l.bf16 %v4208
        %v4225 = vunpack.c.l.bf16 %v4209
        %v4226 = vunpack.c.l.bf16 %v4210
        %v4227 = vunpack.c.l.bf16 %v4211
        %v4229 = vlaneseq
        %v4230 = vshrl.u32 %v4229, 7
        %v4231 = vsub.s32 0, %v4230
        %v4232 = vrot.slane %v1397, %v4231
        %v4250 = vunpack.c.l.b16 %v1380
        %v4251 = vunpack.c.l.b16 %v1381
        %v4252 = vunpack.c.l.b16 %v1382
        %v4253 = vunpack.c.l.b16 %v1383
        %v4254 = vunpack.c.l.b16 %v1384
        %v4255 = vunpack.c.l.b16 %v1385
        %v4256 = vunpack.c.l.b16 %v1386
        %v4257 = vunpack.c.l.b16 %v1387
        %v4258 = vunpack.c.l.b16 %v1388
        %v4259 = vunpack.c.l.b16 %v1389
        %v4260 = vunpack.c.l.b16 %v1390
        %v4261 = vunpack.c.l.b16 %v1391
        %v4262 = vunpack.c.l.b16 %v1392
        %v4263 = vunpack.c.l.b16 %v1393
        %v4264 = vunpack.c.l.b16 %v1394
        %v4265 = vunpack.c.l.b16 %v1395
        %v4266 = vpack.c.b16 %v4251, %v4250
        %v4267 = vpack.c.b16 %v4253, %v4252
        %v4268 = vpack.c.b16 %v4255, %v4254
        %v4269 = vpack.c.b16 %v4257, %v4256
        %v4270 = vpack.c.b16 %v4259, %v4258
        %v4271 = vpack.c.b16 %v4261, %v4260
        %v4272 = vpack.c.b16 %v4263, %v4262
        %v4273 = vpack.c.b16 %v4265, %v4264
        %4282 = vmatprep.subr.bf16.mxu0 0
        %4283 = vmatpush1.bf16.msra.mxu0 %v4273
        %4284 = vmatprep.subr.bf16.mxu0 0
        %4285 = vmatpush1.bf16.msra.mxu0 %v4272
        %4286 = vmatprep.subr.bf16.mxu0 0
        %4287 = vmatpush1.bf16.msra.mxu0 %v4271
        %4288 = vmatprep.subr.bf16.mxu0 0
        %4289 = vmatpush1.bf16.msra.mxu0 %v4270
        %4290 = vmatprep.subr.bf16.mxu0 0
        %4291 = vmatpush1.bf16.msra.mxu0 %v4269
        %4292 = vmatprep.subr.bf16.mxu0 0
        %4293 = vmatpush1.bf16.msra.mxu0 %v4268
        %4294 = vmatprep.subr.bf16.mxu0 0
        %4295 = vmatpush1.bf16.msra.mxu0 %v4267
        %4296 = vmatprep.subr.bf16.mxu0 0
        %4297 = vmatpush1.bf16.msra.mxu0 %v4266
        %4298 = vmatprep.subr.bf16.mxu0 0
        %4299 = vmatpush2.bf16.msra.mxu0 0
        %4300 = vmatprep.subr.bf16.mxu0 0
        %4301 = vmatpush2.bf16.msra.mxu0 0
        %4302 = vmatprep.subr.bf16.mxu0 0
        %4303 = vmatpush2.bf16.msra.mxu0 0
        %4304 = vmatprep.subr.bf16.mxu0 0
        %4305 = vmatpush2.bf16.msra.mxu0 0
        %4306 = vmatprep.subr.bf16.mxu0 0
        %4307 = vmatpush2.bf16.msra.mxu0 0
        %4308 = vmatprep.subr.bf16.mxu0 0
        %4309 = vmatpush2.bf16.msra.mxu0 0
        %4310 = vmatprep.subr.bf16.mxu0 0
        %4311 = vmatpush2.bf16.msra.mxu0 0
        %4312 = vmatprep.subr.bf16.mxu0 0
        %4313 = vmatpush2.bf16.msra.mxu0 0
        %4314 = vmatprep.mubr.bf16.mxu0 0
        %4315 = vmatmul.mubr.bf16.gmra.mxu0 %v4188
        %v4316 = vpop.f32.mrf.mxu0
        %v4317 = vadd.f32 %v4232, %v4316
        %v4318 = vpop.f32.mrf.mxu0
        %v4319 = vpop.f32.mrf.mxu0
        %v4320 = vadd.f32 %v4232, %v4319
        %v4321 = vpop.f32.mrf.mxu0
        %4322 = vmatprep.mubr.bf16.mxu0 0
        %4323 = vmatmul.mubr.bf16.gmra.mxu0 %v4189
        %v4324 = vpop.f32.mrf.mxu0
        %v4325 = vadd.f32 %v4232, %v4324
        %v4326 = vpop.f32.mrf.mxu0
        %v4327 = vpop.f32.mrf.mxu0
        %v4328 = vadd.f32 %v4232, %v4327
        %v4329 = vpop.f32.mrf.mxu0
        %4330 = vmatprep.mubr.bf16.mxu0 0
        %4331 = vmatmul.mubr.bf16.gmra.mxu0 %v4190
        %v4332 = vpop.f32.mrf.mxu0
        %v4333 = vadd.f32 %v4232, %v4332
        %v4334 = vpop.f32.mrf.mxu0
        %v4335 = vpop.f32.mrf.mxu0
        %v4336 = vadd.f32 %v4232, %v4335
        %v4337 = vpop.f32.mrf.mxu0
        %4338 = vmatprep.mubr.bf16.mxu0 0
        %4339 = vmatmul.mubr.bf16.gmra.mxu0 %v4191
        %v4340 = vpop.f32.mrf.mxu0
        %v4341 = vadd.f32 %v4232, %v4340
        %v4342 = vpop.f32.mrf.mxu0
        %v4343 = vpop.f32.mrf.mxu0
        %v4344 = vadd.f32 %v4232, %v4343
        %v4345 = vpop.f32.mrf.mxu0
        %4346 = vmatprep.mubr.bf16.mxu0 0
        %4347 = vmatmul.mubr.bf16.gmra.mxu0 %v4192
        %v4348 = vpop.f32.mrf.mxu0
        %v4349 = vadd.f32 %v4232, %v4348
        %v4350 = vpop.f32.mrf.mxu0
        %v4351 = vpop.f32.mrf.mxu0
        %v4352 = vadd.f32 %v4232, %v4351
        %v4353 = vpop.f32.mrf.mxu0
        %4354 = vmatprep.mubr.bf16.mxu0 0
        %4355 = vmatmul.mubr.bf16.gmra.mxu0 %v4193
        %v4356 = vpop.f32.mrf.mxu0
        %v4357 = vadd.f32 %v4232, %v4356
        %v4358 = vpop.f32.mrf.mxu0
        %v4359 = vpop.f32.mrf.mxu0
        %v4360 = vadd.f32 %v4232, %v4359
        %v4361 = vpop.f32.mrf.mxu0
        %4362 = vmatprep.mubr.bf16.mxu0 0
        %4363 = vmatmul.mubr.bf16.gmra.mxu0 %v4194
        %v4364 = vpop.f32.mrf.mxu0
        %v4365 = vadd.f32 %v4232, %v4364
        %v4366 = vpop.f32.mrf.mxu0
        %v4367 = vpop.f32.mrf.mxu0
        %v4368 = vadd.f32 %v4232, %v4367
        %v4369 = vpop.f32.mrf.mxu0
        %4370 = vmatprep.mubr.bf16.mxu0 0
        %4371 = vmatmul.mubr.bf16.gmra.mxu0 %v4195
        %v4372 = vpop.f32.mrf.mxu0
        %v4373 = vadd.f32 %v4232, %v4372
        %v4374 = vpop.f32.mrf.mxu0
        %v4375 = vpop.f32.mrf.mxu0
        %v4376 = vadd.f32 %v4232, %v4375
        %v4377 = vpop.f32.mrf.mxu0
        %4378 = vdwg.mxu0
        %v4379 = vadd.f32 %v4317, %v4212
        %v4380 = vadd.f32 %v4320, %v4213
        %v4381 = vadd.f32 %v4325, %v4214
        %v4382 = vadd.f32 %v4328, %v4215
        %v4383 = vadd.f32 %v4333, %v4216
        %v4384 = vadd.f32 %v4336, %v4217
        %v4385 = vadd.f32 %v4341, %v4218
        %v4386 = vadd.f32 %v4344, %v4219
        %v4387 = vadd.f32 %v4349, %v4220
        %v4388 = vadd.f32 %v4352, %v4221
        %v4389 = vadd.f32 %v4357, %v4222
        %v4390 = vadd.f32 %v4360, %v4223
        %v4391 = vadd.f32 %v4365, %v4224
        %v4392 = vadd.f32 %v4368, %v4225
        %v4393 = vadd.f32 %v4373, %v4226
        %v4394 = vadd.f32 %v4376, %v4227
        %v4395 = vmax.f32 %v4379, 0.0
        %v4396 = vmax.f32 %v4380, 0.0
        %v4397 = vmax.f32 %v4381, 0.0
        %v4398 = vmax.f32 %v4382, 0.0
        %v4399 = vmax.f32 %v4383, 0.0
        %v4400 = vmax.f32 %v4384, 0.0
        %v4401 = vmax.f32 %v4385, 0.0
        %v4402 = vmax.f32 %v4386, 0.0
        %v4403 = vmax.f32 %v4387, 0.0
        %v4404 = vmax.f32 %v4388, 0.0
        %v4405 = vmax.f32 %v4389, 0.0
        %v4406 = vmax.f32 %v4390, 0.0
        %v4407 = vmax.f32 %v4391, 0.0
        %v4408 = vmax.f32 %v4392, 0.0
        %v4409 = vmax.f32 %v4393, 0.0
        %v4410 = vmax.f32 %v4394, 0.0
        %v4411 = vpack.c.bf16 %v4396, %v4395
        %v4412 = vpack.c.bf16 %v4398, %v4397
        %v4413 = vpack.c.bf16 %v4400, %v4399
        %v4414 = vpack.c.bf16 %v4402, %v4401
        %v4415 = vpack.c.bf16 %v4404, %v4403
        %v4416 = vpack.c.bf16 %v4406, %v4405
        %v4417 = vpack.c.bf16 %v4408, %v4407
        %v4418 = vpack.c.bf16 %v4410, %v4409
        %v4427 = vunpack.c.l.b16 %v4411
        %v4428 = vunpack.c.h.b16 %v4411
        %v4429 = vunpack.c.l.b16 %v4412
        %v4430 = vunpack.c.h.b16 %v4412
        %v4431 = vunpack.c.l.b16 %v4413
        %v4432 = vunpack.c.h.b16 %v4413
        %v4433 = vunpack.c.l.b16 %v4414
        %v4434 = vunpack.c.h.b16 %v4414
        %v4435 = vunpack.c.l.b16 %v4415
        %v4436 = vunpack.c.h.b16 %v4415
        %v4437 = vunpack.c.l.b16 %v4416
        %v4438 = vunpack.c.h.b16 %v4416
        %v4439 = vunpack.c.l.b16 %v4417
        %v4440 = vunpack.c.h.b16 %v4417
        %v4441 = vunpack.c.l.b16 %v4418
        %v4442 = vunpack.c.h.b16 %v4418
        %v4443 = vpack.c.b16 %v4427, %v4427
        %v4444 = vpack.c.b16 %v4428, %v4428
        %v4445 = vpack.c.b16 %v4429, %v4429
        %v4446 = vpack.c.b16 %v4430, %v4430
        %v4447 = vpack.c.b16 %v4431, %v4431
        %v4448 = vpack.c.b16 %v4432, %v4432
        %v4449 = vpack.c.b16 %v4433, %v4433
        %v4450 = vpack.c.b16 %v4434, %v4434
        %v4451 = vpack.c.b16 %v4435, %v4435
        %v4452 = vpack.c.b16 %v4436, %v4436
        %v4453 = vpack.c.b16 %v4437, %v4437
        %v4454 = vpack.c.b16 %v4438, %v4438
        %v4455 = vpack.c.b16 %v4439, %v4439
        %v4456 = vpack.c.b16 %v4440, %v4440
        %v4457 = vpack.c.b16 %v4441, %v4441
        %v4458 = vpack.c.b16 %v4442, %v4442
        %4475 = vst [vmem:[%s442] sm:$0xf] %v4443
        %4476 = vst [vmem:[%s442 + $0x4] sm:$0xf] %v4444
        %4477 = vst [vmem:[%s442 + $0x8] sm:$0xf] %v4445
        %4478 = vst [vmem:[%s442 + $0xc] sm:$0xf] %v4446
        %4479 = vst [vmem:[%s442 + $0x10] sm:$0xf] %v4447
        %4480 = vst [vmem:[%s442 + $0x14] sm:$0xf] %v4448
        %4481 = vst [vmem:[%s442 + $0x18] sm:$0xf] %v4449
        %4482 = vst [vmem:[%s442 + $0x1c] sm:$0xf] %v4450
        %4483 = vst [vmem:[%s442 + $0x20] sm:$0xf] %v4451
        %4484 = vst [vmem:[%s442 + $0x24] sm:$0xf] %v4452
        %4485 = vst [vmem:[%s442 + $0x28] sm:$0xf] %v4453
        %4486 = vst [vmem:[%s442 + $0x2c] sm:$0xf] %v4454
        %4487 = vst [vmem:[%s442 + $0x30] sm:$0xf] %v4455
        %4488 = vst [vmem:[%s442 + $0x34] sm:$0xf] %v4456
        %4489 = vst [vmem:[%s442 + $0x38] sm:$0xf] %v4457
        %4490 = vst [vmem:[%s442 + $0x3c] sm:$0xf] %v4458
        %s4491 = sand.u32 %s271, 1
        %s4492 = scalar_lea.sflag [#allocation4], %s4491
        %s4493 = sand.u32 %s271, 1
        %s4494 = smul.addr %s4493, 64
        %s4495 = scalar_lea.vmem [#allocation3], %s4494
        // Predicated region
        $region73: #{bottleneck_forward_nhwc.1} parent=55 // pred_check
          %p4496 = pneg %p281
        $region74: #{bottleneck_forward_nhwc.1} parent=55 // pred_check_branch
          %4498 = sbr.rel (%p4496) target = $region76
        $region75: #{bottleneck_forward_nhwc.1} parent=55 // pred_region
          %s4499 = smul.u32 8, %s28
          %s4501 = ssub.s32 1024, 1024
          %4502 = vsyncadd %s4492, %s4501
          %s4503 = smul.addr %s4499, 2
          %s4504 = smul.addr %s27, 32
          %s4505 = sadd.s32 %s4503, %s4504
          %s4506 = smul.addr %s4505, 64
          %s4507 = scalar_lea.hbm %s9, %s4506
          %s4508 = sshll.u32 %s4495, 4
          %s4509 = int_to_ptr.vmem [resolvable:$true] %s4508
          %4514 = dma.vmem_to_hbm [thread:$0]  %s4509, 1024, %s4507, %s4492, 64, 64, 4
        $region76: #{bottleneck_forward_nhwc.1} parent=55 // pred_fallthru
          _
      $region56: #{bottleneck_forward_nhwc.1} parent=5 // pred_fallthru
        _
      %p4515 = scmp.le.s32.totalorder 2, %s18
      // Predicated region
      $region77: #{bottleneck_forward_nhwc.1} parent=5 // pred_check
        %p4516 = pneg %p4515
      $region78: #{bottleneck_forward_nhwc.1} parent=5 // pred_check_branch
        %4518 = sbr.rel (%p4516) target = $region80
      $region79: #{bottleneck_forward_nhwc.1} parent=5 // pred_region
        %s4519 = ssub.s32 %s18, 2
        // Predicated region
        $region81: #{bottleneck_forward_nhwc.1} parent=79 // pred_check
          %p4520 = pneg %p287
        $region82: #{bottleneck_forward_nhwc.1} parent=79 // pred_check_branch
          %4522 = sbr.rel (%p4520) target = $region84
        $region83: #{bottleneck_forward_nhwc.1} parent=79 // pred_region
          %s4523 = sand.u32 %s272, 1
          %s4524 = scalar_lea.sflag [#allocation4], %s4523
          %s4525 = sand.u32 %s272, 1
          %s4526 = smul.addr %s4525, 64
          %s4527 = scalar_lea.vmem [#allocation3], %s4526
          %4528 = dma.done %s4524, 1024
        $region84: #{bottleneck_forward_nhwc.1} parent=79 // pred_fallthru
          _
      $region80: #{bottleneck_forward_nhwc.1} parent=5 // pred_fallthru
        _
    $region6: #{bottleneck_forward_nhwc.1} parent=1 // loop_footer
      %s22 = sadd.s32 1, %s18
    $region7: #{bottleneck_forward_nhwc.1} parent=1 // loop_footer_branch
      %17 = sbr.rel target = $region3
    $region8: #{bottleneck_forward_nhwc.1} parent=1 // loop_exit
      _
    %4529 = vsyncpa [#allocation4], 1
    %s4530 = scalar_lea.sflag [#allocation4], 1
    %4531 = vsyncpa %s4530, 1

</llo_original>
